<compile_context>
chip_gen: v5e
topology: v5e:2x2
jax: 0.10.0
libtpu: 0.0.40
codegen_flags: <defaults>
</compile_context>

<pallas_src>
import jax
import jax.numpy as jnp
from jax.experimental import pallas as pl
from jax.experimental.pallas import tpu as pltpu


def _round_up(x, m):
    return ((x + m - 1) // m) * m


# ---------------------------------------------------------------------------
# Fused kernel: all LSTM layers + FC head in one invocation (no grid).
# ---------------------------------------------------------------------------
def _make_fused_kernel(T, Bp, Hp, L):
    """Kernel closed over static sizes.

    Ref shapes:
      x_ref    : (T*Bp, Hp)       time-major, padded input, bf16
      wih0_ref : (Hp, 4*Hp)       layer-0 W_ih^T, gate-ordered [i,f,o,g], bf16
      whh0_ref : (Hp, 4*Hp)       layer-0 W_hh^T, bf16
      b0_ref   : (1, 4*Hp)        layer-0 fused bias, f32
      wcat_ref : (max(L-1,1), 2*Hp, 4*Hp)  layers>0 [W_ih^T ; W_hh^T], bf16
      bcat_ref : (max(L-1,1), 1, 4*Hp)     layers>0 fused bias, f32
      fcw_ref  : (Hp, 128)        FC weight (col 0 real), f32
      fcb_ref  : (1, 128)         FC bias   (col 0 real), f32
      o_ref    : (Bp, 128)        lane-dense output slab (col 0 = prediction)
      gx_scr   : (T*Bp, 4*Hp)     hoisted layer-0 input projection, f32
    """

    def kernel(x_ref, wih0_ref, whh0_ref, b0_ref, wcat_ref, bcat_ref,
               fcw_ref, fcb_ref, o_ref, gx_scr):
        # ---- Hoisted layer-0 input projection (no time dependence) --------
        gx_scr[...] = (
            jnp.dot(x_ref[...], wih0_ref[...],
                    preferred_element_type=jnp.float32)
            + b0_ref[...])

        def sigmoid_eup(x):
            # exp and approx reciprocal both issue in the EUP slot; avoids a
            # full-precision VPU divide on the per-step critical path.
            return pl.reciprocal(1.0 + jnp.exp(-x), approx=True)

        def gate_update(gates, c):
            # Gate column order (set at prep time): [i, f, o, g].
            sig = sigmoid_eup(gates[:, :3 * Hp])
            i_g = sig[:, 0 * Hp:1 * Hp]
            f_g = sig[:, 1 * Hp:2 * Hp]
            o_g = sig[:, 2 * Hp:3 * Hp]
            g_g = jnp.tanh(gates[:, 3 * Hp:])
            c_new = f_g * c + i_g * g_g
            h_new = o_g * jnp.tanh(c_new)
            return h_new, c_new

        def step(t, carry):
            hs, cs = carry                      # tuples of L (Bp, Hp) f32
            new_hs, new_cs = [], []

            # Layer 0: input projection already in gx_scr; one small bf16
            # MXU matmul for the recurrent term.
            off = pl.multiple_of(t * Bp, Bp)
            gates0 = gx_scr[pl.ds(off, Bp), :] + jnp.dot(
                hs[0].astype(jnp.bfloat16), whh0_ref[...],
                preferred_element_type=jnp.float32)
            h0, c0 = gate_update(gates0, cs[0])
            new_hs.append(h0)
            new_cs.append(c0)

            # Layers 1..L-1 fused into the same step (consume h_t^{(l-1)}
            # directly; single (Bp, 2Hp)@(2Hp, 4Hp) bf16 matmul per layer).
            for l in range(1, L):
                inp = jnp.concatenate(
                    [new_hs[l - 1].astype(jnp.bfloat16),
                     hs[l].astype(jnp.bfloat16)], axis=1)
                gates = (jnp.dot(inp, wcat_ref[l - 1],
                                 preferred_element_type=jnp.float32)
                         + bcat_ref[l - 1])
                h_l, c_l = gate_update(gates, cs[l])
                new_hs.append(h_l)
                new_cs.append(c_l)
            return tuple(new_hs), tuple(new_cs)

        zeros = tuple(jnp.zeros((Bp, Hp), jnp.float32) for _ in range(L))
        hs, _ = jax.lax.fori_loop(0, T, step, (zeros, zeros), unroll=True)

        # FC head on the final hidden state of the last layer (tiny; f32).
        o_ref[...] = (jnp.dot(hs[L - 1], fcw_ref[...],
                              preferred_element_type=jnp.float32)
                      + fcb_ref[...])

    return kernel


# ---------------------------------------------------------------------------
# One-time parameter preparation (transpose, gate reorder [i,f,o,g], padding).
# ---------------------------------------------------------------------------
def _pad_gate_cols(w_t, H, Hp):
    """(Din, 4H) with PyTorch gates [i,f,g,o] -> (Din, 4Hp), order [i,f,o,g],
    each gate lane-aligned and zero-padded (zero padding is load-bearing)."""
    i, f, g, o = jnp.split(w_t, 4, axis=1)
    parts = [i, f, o, g]
    return jnp.concatenate(
        [jnp.pad(p, ((0, 0), (0, Hp - H))) for p in parts], axis=1)


def _pad_rows(w, rows):
    return jnp.pad(w, ((0, rows - w.shape[0]), (0, 0)))


def prepare_params(params, hidden_dim):
    """Pad/transpose PyTorch-layout params into kernel layout (run once)."""
    H = hidden_dim
    Hp = _round_up(H, 128)
    L = len(params["lstm"])

    def prep_layer(w_ih, w_hh, b_ih, b_hh):
        wih_t = _pad_rows(_pad_gate_cols(
            jnp.transpose(w_ih).astype(jnp.float32), H, Hp), Hp)
        whh_t = _pad_rows(_pad_gate_cols(
            jnp.transpose(w_hh).astype(jnp.float32), H, Hp), Hp)
        bias = _pad_gate_cols(
            (b_ih + b_hh)[None, :].astype(jnp.float32), H, Hp)
        return wih_t, whh_t, bias

    w_ih0, w_hh0, b_ih0, b_hh0 = params["lstm"][0]
    assert w_ih0.shape[1] <= Hp, "input feature dim must fit padded hidden"
    wih0, whh0, b0 = prep_layer(w_ih0, w_hh0, b_ih0, b_hh0)

    wcat_l, bcat_l = [], []
    for (w_ih, w_hh, b_ih, b_hh) in params["lstm"][1:]:
        wih_t, whh_t, bias = prep_layer(w_ih, w_hh, b_ih, b_hh)
        wcat_l.append(jnp.concatenate([wih_t, whh_t], axis=0))  # (2Hp, 4Hp)
        bcat_l.append(bias)
    if wcat_l:
        wcat = jnp.stack(wcat_l).astype(jnp.bfloat16)
        bcat = jnp.stack(bcat_l).astype(jnp.float32)
    else:  # L == 1: dummy (never referenced by the kernel)
        wcat = jnp.zeros((1, 2 * Hp, 4 * Hp), jnp.bfloat16)
        bcat = jnp.zeros((1, 1, 4 * Hp), jnp.float32)

    fcw = jnp.zeros((Hp, 128), jnp.float32).at[:H, 0].set(
        params["fc_w"][0].astype(jnp.float32))
    fcb = jnp.zeros((1, 128), jnp.float32).at[0, 0].set(
        params["fc_b"][0].astype(jnp.float32))

    return {
        "wih0": wih0.astype(jnp.bfloat16),   # (Hp, 4Hp)
        "whh0": whh0.astype(jnp.bfloat16),   # (Hp, 4Hp)
        "b0": b0,                            # (1, 4Hp) f32
        "wcat": wcat,                        # (max(L-1,1), 2Hp, 4Hp) bf16
        "bcat": bcat,                        # (max(L-1,1), 1, 4Hp) f32
        "fcw": fcw,                          # (Hp, 128) f32
        "fcb": fcb,                          # (1, 128) f32
        "H": H,
        "Hp": Hp,
        "L": L,
    }


# ---------------------------------------------------------------------------
# Full model forward (single fused Pallas kernel)
# ---------------------------------------------------------------------------
def lstm_classifier_forward(x_nct, prep):
    B, C, T = x_nct.shape
    Hp, L = prep["Hp"], prep["L"]
    Bp = _round_up(max(B, 1), 8)

    # (N, C, T) -> time-major (T, B, C), pad batch to 8 sublanes and features
    # to the padded hidden width, flatten time into the sublane axis, and cast
    # to bf16 for the MXU (all accumulation stays f32).
    x = jnp.transpose(x_nct, (2, 0, 1)).astype(jnp.float32)
    x = jnp.pad(x, ((0, 0), (0, Bp - B), (0, Hp - C)))
    x_flat = x.reshape(T * Bp, Hp).astype(jnp.bfloat16)

    kernel = _make_fused_kernel(T, Bp, Hp, L)
    out_pad = pl.pallas_call(
        kernel,
        out_shape=jax.ShapeDtypeStruct((Bp, 128), jnp.float32),
        scratch_shapes=[
            pltpu.VMEM((T * Bp, 4 * Hp), jnp.float32),   # hoisted layer-0 proj
        ],
        compiler_params=pltpu.CompilerParams(
            vmem_limit_bytes=32 * 1024 * 1024),
    )(x_flat, prep["wih0"], prep["whh0"], prep["b0"],
      prep["wcat"], prep["bcat"], prep["fcw"], prep["fcb"])

    return jnp.squeeze(out_pad[:B, 0])


# ---------------------------------------------------------------------------
# Pure-JAX reference (mirrors nn.LSTM + nn.Linear eval forward)
# ---------------------------------------------------------------------------
def lstm_classifier_ref(x_nct, params):
    x = jnp.transpose(x_nct, (0, 2, 1)).astype(jnp.float32)   # (B, T, C)
    B = x.shape[0]
    h_fin = None
    for (w_ih, w_hh, b_ih, b_hh) in params["lstm"]:
        H = w_hh.shape[1]

        def step(carry, x_t):
            h, c = carry
            gates = x_t @ w_ih.T + h @ w_hh.T + b_ih + b_hh
            i, f, g, o = jnp.split(gates, 4, axis=-1)
            c = jax.nn.sigmoid(f) * c + jax.nn.sigmoid(i) * jnp.tanh(g)
            h = jax.nn.sigmoid(o) * jnp.tanh(c)
            return (h, c), h

        h0 = jnp.zeros((B, H), jnp.float32)
        (h_fin, _), ys = jax.lax.scan(step, (h0, h0), jnp.swapaxes(x, 0, 1))
        x = jnp.swapaxes(ys, 0, 1)
    out = h_fin @ params["fc_w"].T + params["fc_b"]
    return jnp.squeeze(out)


# ---------------------------------------------------------------------------
# Deterministic parameter init (uniform(-1/sqrt(H), 1/sqrt(H)), like PyTorch)
# ---------------------------------------------------------------------------
def init_params(key, input_channels, hidden_dim, num_layers):
    H = hidden_dim
    k = 1.0 / jnp.sqrt(jnp.float32(H))
    lstm = []
    for layer in range(num_layers):
        d_in = input_channels if layer == 0 else H
        key, k1, k2, k3, k4 = jax.random.split(key, 5)
        lstm.append((
            jax.random.uniform(k1, (4 * H, d_in), jnp.float32, -k, k),  # W_ih
            jax.random.uniform(k2, (4 * H, H), jnp.float32, -k, k),     # W_hh
            jax.random.uniform(k3, (4 * H,), jnp.float32, -k, k),       # b_ih
            jax.random.uniform(k4, (4 * H,), jnp.float32, -k, k),       # b_hh
        ))
    key, k5, k6 = jax.random.split(key, 3)
    fc_w = jax.random.uniform(k5, (1, H), jnp.float32, -k, k)
    fc_b = jax.random.uniform(k6, (1,), jnp.float32, -k, k)
    return {"lstm": lstm, "fc_w": fc_w, "fc_b": fc_b}


if __name__ == "__main__":
    # Small shapes consistent with the module's forward: x is (N, C, T).
    batch, input_channels, window_size = 2, 4, 16
    hidden_dim, num_layers = 32, 2

    key = jax.random.PRNGKey(0)
    key, xkey = jax.random.split(key)
    x = jax.random.normal(xkey, (batch, input_channels, window_size),
                          jnp.float32)
    params = init_params(key, input_channels, hidden_dim, num_layers)

    # Weight prep (transpose/reorder/pad/cast) happens ONCE, outside forward.
    prep = prepare_params(params, hidden_dim)

    out = lstm_classifier_forward(x, prep)
    out = jax.block_until_ready(out)

    ref = jax.block_until_ready(lstm_classifier_ref(x, params))
    assert out.shape == (batch,), out.shape
    # bf16 MXU inputs + approx-reciprocal sigmoid: allow ~1e-2 deviation.
    assert jnp.allclose(out, ref, atol=2e-2, rtol=2e-2), (out, ref)

    print("KERNEL_OK")
</pallas_src>

<mosaic_0001>
module attributes {stable_mosaic.version = 11 : i64} {
  func.func @kernel(%arg0: memref<128x128xbf16, #tpu.memory_space<vmem>>, %arg1: memref<128x512xbf16, #tpu.memory_space<vmem>>, %arg2: memref<128x512xbf16, #tpu.memory_space<vmem>>, %arg3: memref<1x512xf32, #tpu.memory_space<vmem>>, %arg4: memref<1x256x512xbf16, #tpu.memory_space<vmem>>, %arg5: memref<1x1x512xf32, #tpu.memory_space<vmem>>, %arg6: memref<128x128xf32, #tpu.memory_space<vmem>>, %arg7: memref<1x128xf32, #tpu.memory_space<vmem>>, %arg8: memref<8x128xf32, #tpu.memory_space<vmem>>, %arg9: memref<128x512xf32, #tpu.memory_space<vmem>>) attributes {dimension_semantics = [], scalar_prefetch = 0 : i64, scratch_operands = 1 : i64, tpu.core_type = #tpu.core_type<tc>} {
    %c0 = arith.constant 0 : index
    %c0_0 = arith.constant 0 : index
    %0 = vector.load %arg0[%c0, %c0_0] : memref<128x128xbf16, #tpu.memory_space<vmem>>, vector<128x128xbf16>
    %c0_1 = arith.constant 0 : index
    %c0_2 = arith.constant 0 : index
    %1 = vector.load %arg1[%c0_1, %c0_2] : memref<128x512xbf16, #tpu.memory_space<vmem>>, vector<128x512xbf16>
    %cst = arith.constant dense<0.000000e+00> : vector<128x512xf32>
    %2 = tpu.matmul %0, %1, %cst {dimension_numbers = #tpu.dot_dimension_numbers<[1], [0], [0], [1], [0, 0, 1, 1], [], []>} : vector<128x128xbf16>, vector<128x512xbf16>, vector<128x512xf32> -> vector<128x512xf32>
    %c0_3 = arith.constant 0 : index
    %c0_4 = arith.constant 0 : index
    %3 = vector.load %arg3[%c0_3, %c0_4] : memref<1x512xf32, #tpu.memory_space<vmem>>, vector<1x512xf32>
    %4 = vector.broadcast %3 : vector<1x512xf32> to vector<128x512xf32>
    %5 = arith.addf %2, %4 : vector<128x512xf32>
    %c0_5 = arith.constant 0 : index
    %c0_6 = arith.constant 0 : index
    %6 = vector.load %arg9[%c0_5, %c0_6] : memref<128x512xf32, #tpu.memory_space<vmem>>, vector<128x512xf32>
    tpu.vector_store %arg9[%c0_5, %c0_6], %5 {strides = array<i32>} : memref<128x512xf32, #tpu.memory_space<vmem>>, vector<128x512xf32>,
    %cst_7 = arith.constant 0.000000e+00 : f32
    %7 = vector.broadcast %cst_7 : f32 to vector<8x128xf32>
    %cst_8 = arith.constant 0.000000e+00 : f32
    %8 = vector.broadcast %cst_8 : f32 to vector<8x128xf32>
    %c0_i32 = arith.constant 0 : i32
    %c8_i32 = arith.constant 8 : i32
    %9 = arith.muli %c0_i32, %c8_i32 : i32
    %10 = tpu.assume_multiple %9, 8 : i32
    %11 = arith.index_cast %10 : i32 to index
    %c0_9 = arith.constant 0 : index
    %12 = vector.load %arg9[%11, %c0_9] : memref<128x512xf32, #tpu.memory_space<vmem>>, vector<8x512xf32>
    %13 = arith.truncf %7 : vector<8x128xf32> to vector<8x128xbf16>
    %c0_10 = arith.constant 0 : index
    %c0_11 = arith.constant 0 : index
    %14 = vector.load %arg2[%c0_10, %c0_11] : memref<128x512xbf16, #tpu.memory_space<vmem>>, vector<128x512xbf16>
    %cst_12 = arith.constant dense<0.000000e+00> : vector<8x512xf32>
    %15 = tpu.matmul %13, %14, %cst_12 {dimension_numbers = #tpu.dot_dimension_numbers<[1], [0], [0], [1], [0, 0, 1, 1], [], []>} : vector<8x128xbf16>, vector<128x512xbf16>, vector<8x512xf32> -> vector<8x512xf32>
    %16 = arith.addf %12, %15 : vector<8x512xf32>
    %17 = vector.extract_strided_slice %16 {offsets = [0, 0], sizes = [8, 384], strides = [1, 1]} : vector<8x512xf32> to vector<8x384xf32>
    %cst_13 = arith.constant 0.000000e+00 : f32
    %18 = vector.broadcast %cst_13 : f32 to vector<8x384xf32>
    %19 = arith.subf %18, %17 : vector<8x384xf32>
    %20 = math.exp %19 : vector<8x384xf32>
    %cst_14 = arith.constant 1.000000e+00 : f32
    %21 = vector.broadcast %cst_14 : f32 to vector<8x384xf32>
    %22 = arith.addf %21, %20 : vector<8x384xf32>
    %23 = tpu.reciprocal %22 {approx = true} : vector<8x384xf32> -> vector<8x384xf32>
    %24 = vector.extract_strided_slice %23 {offsets = [0, 0], sizes = [8, 128], strides = [1, 1]} : vector<8x384xf32> to vector<8x128xf32>
    %25 = vector.extract_strided_slice %23 {offsets = [0, 128], sizes = [8, 128], strides = [1, 1]} : vector<8x384xf32> to vector<8x128xf32>
    %26 = vector.extract_strided_slice %23 {offsets = [0, 256], sizes = [8, 128], strides = [1, 1]} : vector<8x384xf32> to vector<8x128xf32>
    %27 = vector.extract_strided_slice %16 {offsets = [0, 384], sizes = [8, 128], strides = [1, 1]} : vector<8x512xf32> to vector<8x128xf32>
    %28 = math.tanh %27 : vector<8x128xf32>
    %29 = arith.mulf %25, %7 : vector<8x128xf32>
    %30 = arith.mulf %24, %28 : vector<8x128xf32>
    %31 = arith.addf %29, %30 : vector<8x128xf32>
    %32 = math.tanh %31 : vector<8x128xf32>
    %33 = arith.mulf %26, %32 : vector<8x128xf32>
    %34 = arith.truncf %33 : vector<8x128xf32> to vector<8x128xbf16>
    %35 = arith.truncf %8 : vector<8x128xf32> to vector<8x128xbf16>
    %36 = tpu.concatenate %34, %35 in 1 : vector<8x128xbf16>, vector<8x128xbf16> -> vector<8x256xbf16>
    %c0_15 = arith.constant 0 : index
    %c0_16 = arith.constant 0 : index
    %c0_17 = arith.constant 0 : index
    %37 = vector.load %arg4[%c0_15, %c0_16, %c0_17] : memref<1x256x512xbf16, #tpu.memory_space<vmem>>, vector<1x256x512xbf16>
    %38 = vector.shape_cast %37 : vector<1x256x512xbf16> to vector<256x512xbf16>
    %cst_18 = arith.constant dense<0.000000e+00> : vector<8x512xf32>
    %39 = tpu.matmul %36, %38, %cst_18 {dimension_numbers = #tpu.dot_dimension_numbers<[1], [0], [0], [1], [0, 0, 1, 1], [], []>} : vector<8x256xbf16>, vector<256x512xbf16>, vector<8x512xf32> -> vector<8x512xf32>
    %c0_19 = arith.constant 0 : index
    %c0_20 = arith.constant 0 : index
    %c0_21 = arith.constant 0 : index
    %40 = vector.load %arg5[%c0_19, %c0_20, %c0_21] : memref<1x1x512xf32, #tpu.memory_space<vmem>>, vector<1x1x512xf32>
    %41 = vector.shape_cast %40 : vector<1x1x512xf32> to vector<1x512xf32>
    %42 = vector.broadcast %41 : vector<1x512xf32> to vector<8x512xf32>
    %43 = arith.addf %39, %42 : vector<8x512xf32>
    %44 = vector.extract_strided_slice %43 {offsets = [0, 0], sizes = [8, 384], strides = [1, 1]} : vector<8x512xf32> to vector<8x384xf32>
    %cst_22 = arith.constant 0.000000e+00 : f32
    %45 = vector.broadcast %cst_22 : f32 to vector<8x384xf32>
    %46 = arith.subf %45, %44 : vector<8x384xf32>
    %47 = math.exp %46 : vector<8x384xf32>
    %cst_23 = arith.constant 1.000000e+00 : f32
    %48 = vector.broadcast %cst_23 : f32 to vector<8x384xf32>
    %49 = arith.addf %48, %47 : vector<8x384xf32>
    %50 = tpu.reciprocal %49 {approx = true} : vector<8x384xf32> -> vector<8x384xf32>
    %51 = vector.extract_strided_slice %50 {offsets = [0, 0], sizes = [8, 128], strides = [1, 1]} : vector<8x384xf32> to vector<8x128xf32>
    %52 = vector.extract_strided_slice %50 {offsets = [0, 128], sizes = [8, 128], strides = [1, 1]} : vector<8x384xf32> to vector<8x128xf32>
    %53 = vector.extract_strided_slice %50 {offsets = [0, 256], sizes = [8, 128], strides = [1, 1]} : vector<8x384xf32> to vector<8x128xf32>
    %54 = vector.extract_strided_slice %43 {offsets = [0, 384], sizes = [8, 128], strides = [1, 1]} : vector<8x512xf32> to vector<8x128xf32>
    %55 = math.tanh %54 : vector<8x128xf32>
    %56 = arith.mulf %52, %8 : vector<8x128xf32>
    %57 = arith.mulf %51, %55 : vector<8x128xf32>
    %58 = arith.addf %56, %57 : vector<8x128xf32>
    %59 = math.tanh %58 : vector<8x128xf32>
    %60 = arith.mulf %53, %59 : vector<8x128xf32>
    %c1_i32 = arith.constant 1 : i32
    %c8_i32_24 = arith.constant 8 : i32
    %61 = arith.muli %c1_i32, %c8_i32_24 : i32
    %62 = tpu.assume_multiple %61, 8 : i32
    %63 = arith.index_cast %62 : i32 to index
    %c0_25 = arith.constant 0 : index
    %64 = vector.load %arg9[%63, %c0_25] : memref<128x512xf32, #tpu.memory_space<vmem>>, vector<8x512xf32>
    %65 = arith.truncf %33 : vector<8x128xf32> to vector<8x128xbf16>
    %c0_26 = arith.constant 0 : index
    %c0_27 = arith.constant 0 : index
    %66 = vector.load %arg2[%c0_26, %c0_27] : memref<128x512xbf16, #tpu.memory_space<vmem>>, vector<128x512xbf16>
    %cst_28 = arith.constant dense<0.000000e+00> : vector<8x512xf32>
    %67 = tpu.matmul %65, %66, %cst_28 {dimension_numbers = #tpu.dot_dimension_numbers<[1], [0], [0], [1], [0, 0, 1, 1], [], []>} : vector<8x128xbf16>, vector<128x512xbf16>, vector<8x512xf32> -> vector<8x512xf32>
    %68 = arith.addf %64, %67 : vector<8x512xf32>
    %69 = vector.extract_strided_slice %68 {offsets = [0, 0], sizes = [8, 384], strides = [1, 1]} : vector<8x512xf32> to vector<8x384xf32>
    %cst_29 = arith.constant 0.000000e+00 : f32
    %70 = vector.broadcast %cst_29 : f32 to vector<8x384xf32>
    %71 = arith.subf %70, %69 : vector<8x384xf32>
    %72 = math.exp %71 : vector<8x384xf32>
    %cst_30 = arith.constant 1.000000e+00 : f32
    %73 = vector.broadcast %cst_30 : f32 to vector<8x384xf32>
    %74 = arith.addf %73, %72 : vector<8x384xf32>
    %75 = tpu.reciprocal %74 {approx = true} : vector<8x384xf32> -> vector<8x384xf32>
    %76 = vector.extract_strided_slice %75 {offsets = [0, 0], sizes = [8, 128], strides = [1, 1]} : vector<8x384xf32> to vector<8x128xf32>
    %77 = vector.extract_strided_slice %75 {offsets = [0, 128], sizes = [8, 128], strides = [1, 1]} : vector<8x384xf32> to vector<8x128xf32>
    %78 = vector.extract_strided_slice %75 {offsets = [0, 256], sizes = [8, 128], strides = [1, 1]} : vector<8x384xf32> to vector<8x128xf32>
    %79 = vector.extract_strided_slice %68 {offsets = [0, 384], sizes = [8, 128], strides = [1, 1]} : vector<8x512xf32> to vector<8x128xf32>
    %80 = math.tanh %79 : vector<8x128xf32>
    %81 = arith.mulf %77, %31 : vector<8x128xf32>
    %82 = arith.mulf %76, %80 : vector<8x128xf32>
    %83 = arith.addf %81, %82 : vector<8x128xf32>
    %84 = math.tanh %83 : vector<8x128xf32>
    %85 = arith.mulf %78, %84 : vector<8x128xf32>
    %86 = arith.truncf %85 : vector<8x128xf32> to vector<8x128xbf16>
    %87 = arith.truncf %60 : vector<8x128xf32> to vector<8x128xbf16>
    %88 = tpu.concatenate %86, %87 in 1 : vector<8x128xbf16>, vector<8x128xbf16> -> vector<8x256xbf16>
    %c0_31 = arith.constant 0 : index
    %c0_32 = arith.constant 0 : index
    %c0_33 = arith.constant 0 : index
    %89 = vector.load %arg4[%c0_31, %c0_32, %c0_33] : memref<1x256x512xbf16, #tpu.memory_space<vmem>>, vector<1x256x512xbf16>
    %90 = vector.shape_cast %89 : vector<1x256x512xbf16> to vector<256x512xbf16>
    %cst_34 = arith.constant dense<0.000000e+00> : vector<8x512xf32>
    %91 = tpu.matmul %88, %90, %cst_34 {dimension_numbers = #tpu.dot_dimension_numbers<[1], [0], [0], [1], [0, 0, 1, 1], [], []>} : vector<8x256xbf16>, vector<256x512xbf16>, vector<8x512xf32> -> vector<8x512xf32>
    %c0_35 = arith.constant 0 : index
    %c0_36 = arith.constant 0 : index
    %c0_37 = arith.constant 0 : index
    %92 = vector.load %arg5[%c0_35, %c0_36, %c0_37] : memref<1x1x512xf32, #tpu.memory_space<vmem>>, vector<1x1x512xf32>
    %93 = vector.shape_cast %92 : vector<1x1x512xf32> to vector<1x512xf32>
    %94 = vector.broadcast %93 : vector<1x512xf32> to vector<8x512xf32>
    %95 = arith.addf %91, %94 : vector<8x512xf32>
    %96 = vector.extract_strided_slice %95 {offsets = [0, 0], sizes = [8, 384], strides = [1, 1]} : vector<8x512xf32> to vector<8x384xf32>
    %cst_38 = arith.constant 0.000000e+00 : f32
    %97 = vector.broadcast %cst_38 : f32 to vector<8x384xf32>
    %98 = arith.subf %97, %96 : vector<8x384xf32>
    %99 = math.exp %98 : vector<8x384xf32>
    %cst_39 = arith.constant 1.000000e+00 : f32
    %100 = vector.broadcast %cst_39 : f32 to vector<8x384xf32>
    %101 = arith.addf %100, %99 : vector<8x384xf32>
    %102 = tpu.reciprocal %101 {approx = true} : vector<8x384xf32> -> vector<8x384xf32>
    %103 = vector.extract_strided_slice %102 {offsets = [0, 0], sizes = [8, 128], strides = [1, 1]} : vector<8x384xf32> to vector<8x128xf32>
    %104 = vector.extract_strided_slice %102 {offsets = [0, 128], sizes = [8, 128], strides = [1, 1]} : vector<8x384xf32> to vector<8x128xf32>
    %105 = vector.extract_strided_slice %102 {offsets = [0, 256], sizes = [8, 128], strides = [1, 1]} : vector<8x384xf32> to vector<8x128xf32>
    %106 = vector.extract_strided_slice %95 {offsets = [0, 384], sizes = [8, 128], strides = [1, 1]} : vector<8x512xf32> to vector<8x128xf32>
    %107 = math.tanh %106 : vector<8x128xf32>
    %108 = arith.mulf %104, %58 : vector<8x128xf32>
    %109 = arith.mulf %103, %107 : vector<8x128xf32>
    %110 = arith.addf %108, %109 : vector<8x128xf32>
    %111 = math.tanh %110 : vector<8x128xf32>
    %112 = arith.mulf %105, %111 : vector<8x128xf32>
    %c2_i32 = arith.constant 2 : i32
    %c8_i32_40 = arith.constant 8 : i32
    %113 = arith.muli %c2_i32, %c8_i32_40 : i32
    %114 = tpu.assume_multiple %113, 8 : i32
    %115 = arith.index_cast %114 : i32 to index
    %c0_41 = arith.constant 0 : index
    %116 = vector.load %arg9[%115, %c0_41] : memref<128x512xf32, #tpu.memory_space<vmem>>, vector<8x512xf32>
    %117 = arith.truncf %85 : vector<8x128xf32> to vector<8x128xbf16>
    %c0_42 = arith.constant 0 : index
    %c0_43 = arith.constant 0 : index
    %118 = vector.load %arg2[%c0_42, %c0_43] : memref<128x512xbf16, #tpu.memory_space<vmem>>, vector<128x512xbf16>
    %cst_44 = arith.constant dense<0.000000e+00> : vector<8x512xf32>
    %119 = tpu.matmul %117, %118, %cst_44 {dimension_numbers = #tpu.dot_dimension_numbers<[1], [0], [0], [1], [0, 0, 1, 1], [], []>} : vector<8x128xbf16>, vector<128x512xbf16>, vector<8x512xf32> -> vector<8x512xf32>
    %120 = arith.addf %116, %119 : vector<8x512xf32>
    %121 = vector.extract_strided_slice %120 {offsets = [0, 0], sizes = [8, 384], strides = [1, 1]} : vector<8x512xf32> to vector<8x384xf32>
    %cst_45 = arith.constant 0.000000e+00 : f32
    %122 = vector.broadcast %cst_45 : f32 to vector<8x384xf32>
    %123 = arith.subf %122, %121 : vector<8x384xf32>
    %124 = math.exp %123 : vector<8x384xf32>
    %cst_46 = arith.constant 1.000000e+00 : f32
    %125 = vector.broadcast %cst_46 : f32 to vector<8x384xf32>
    %126 = arith.addf %125, %124 : vector<8x384xf32>
    %127 = tpu.reciprocal %126 {approx = true} : vector<8x384xf32> -> vector<8x384xf32>
    %128 = vector.extract_strided_slice %127 {offsets = [0, 0], sizes = [8, 128], strides = [1, 1]} : vector<8x384xf32> to vector<8x128xf32>
    %129 = vector.extract_strided_slice %127 {offsets = [0, 128], sizes = [8, 128], strides = [1, 1]} : vector<8x384xf32> to vector<8x128xf32>
    %130 = vector.extract_strided_slice %127 {offsets = [0, 256], sizes = [8, 128], strides = [1, 1]} : vector<8x384xf32> to vector<8x128xf32>
    %131 = vector.extract_strided_slice %120 {offsets = [0, 384], sizes = [8, 128], strides = [1, 1]} : vector<8x512xf32> to vector<8x128xf32>
    %132 = math.tanh %131 : vector<8x128xf32>
    %133 = arith.mulf %129, %83 : vector<8x128xf32>
    %134 = arith.mulf %128, %132 : vector<8x128xf32>
    %135 = arith.addf %133, %134 : vector<8x128xf32>
    %136 = math.tanh %135 : vector<8x128xf32>
    %137 = arith.mulf %130, %136 : vector<8x128xf32>
    %138 = arith.truncf %137 : vector<8x128xf32> to vector<8x128xbf16>
    %139 = arith.truncf %112 : vector<8x128xf32> to vector<8x128xbf16>
    %140 = tpu.concatenate %138, %139 in 1 : vector<8x128xbf16>, vector<8x128xbf16> -> vector<8x256xbf16>
    %c0_47 = arith.constant 0 : index
    %c0_48 = arith.constant 0 : index
    %c0_49 = arith.constant 0 : index
    %141 = vector.load %arg4[%c0_47, %c0_48, %c0_49] : memref<1x256x512xbf16, #tpu.memory_space<vmem>>, vector<1x256x512xbf16>
    %142 = vector.shape_cast %141 : vector<1x256x512xbf16> to vector<256x512xbf16>
    %cst_50 = arith.constant dense<0.000000e+00> : vector<8x512xf32>
    %143 = tpu.matmul %140, %142, %cst_50 {dimension_numbers = #tpu.dot_dimension_numbers<[1], [0], [0], [1], [0, 0, 1, 1], [], []>} : vector<8x256xbf16>, vector<256x512xbf16>, vector<8x512xf32> -> vector<8x512xf32>
    %c0_51 = arith.constant 0 : index
    %c0_52 = arith.constant 0 : index
    %c0_53 = arith.constant 0 : index
    %144 = vector.load %arg5[%c0_51, %c0_52, %c0_53] : memref<1x1x512xf32, #tpu.memory_space<vmem>>, vector<1x1x512xf32>
    %145 = vector.shape_cast %144 : vector<1x1x512xf32> to vector<1x512xf32>
    %146 = vector.broadcast %145 : vector<1x512xf32> to vector<8x512xf32>
    %147 = arith.addf %143, %146 : vector<8x512xf32>
    %148 = vector.extract_strided_slice %147 {offsets = [0, 0], sizes = [8, 384], strides = [1, 1]} : vector<8x512xf32> to vector<8x384xf32>
    %cst_54 = arith.constant 0.000000e+00 : f32
    %149 = vector.broadcast %cst_54 : f32 to vector<8x384xf32>
    %150 = arith.subf %149, %148 : vector<8x384xf32>
    %151 = math.exp %150 : vector<8x384xf32>
    %cst_55 = arith.constant 1.000000e+00 : f32
    %152 = vector.broadcast %cst_55 : f32 to vector<8x384xf32>
    %153 = arith.addf %152, %151 : vector<8x384xf32>
    %154 = tpu.reciprocal %153 {approx = true} : vector<8x384xf32> -> vector<8x384xf32>
    %155 = vector.extract_strided_slice %154 {offsets = [0, 0], sizes = [8, 128], strides = [1, 1]} : vector<8x384xf32> to vector<8x128xf32>
    %156 = vector.extract_strided_slice %154 {offsets = [0, 128], sizes = [8, 128], strides = [1, 1]} : vector<8x384xf32> to vector<8x128xf32>
    %157 = vector.extract_strided_slice %154 {offsets = [0, 256], sizes = [8, 128], strides = [1, 1]} : vector<8x384xf32> to vector<8x128xf32>
    %158 = vector.extract_strided_slice %147 {offsets = [0, 384], sizes = [8, 128], strides = [1, 1]} : vector<8x512xf32> to vector<8x128xf32>
    %159 = math.tanh %158 : vector<8x128xf32>
    %160 = arith.mulf %156, %110 : vector<8x128xf32>
    %161 = arith.mulf %155, %159 : vector<8x128xf32>
    %162 = arith.addf %160, %161 : vector<8x128xf32>
    %163 = math.tanh %162 : vector<8x128xf32>
    %164 = arith.mulf %157, %163 : vector<8x128xf32>
    %c3_i32 = arith.constant 3 : i32
    %c8_i32_56 = arith.constant 8 : i32
    %165 = arith.muli %c3_i32, %c8_i32_56 : i32
    %166 = tpu.assume_multiple %165, 8 : i32
    %167 = arith.index_cast %166 : i32 to index
    %c0_57 = arith.constant 0 : index
    %168 = vector.load %arg9[%167, %c0_57] : memref<128x512xf32, #tpu.memory_space<vmem>>, vector<8x512xf32>
    %169 = arith.truncf %137 : vector<8x128xf32> to vector<8x128xbf16>
    %c0_58 = arith.constant 0 : index
    %c0_59 = arith.constant 0 : index
    %170 = vector.load %arg2[%c0_58, %c0_59] : memref<128x512xbf16, #tpu.memory_space<vmem>>, vector<128x512xbf16>
    %cst_60 = arith.constant dense<0.000000e+00> : vector<8x512xf32>
    %171 = tpu.matmul %169, %170, %cst_60 {dimension_numbers = #tpu.dot_dimension_numbers<[1], [0], [0], [1], [0, 0, 1, 1], [], []>} : vector<8x128xbf16>, vector<128x512xbf16>, vector<8x512xf32> -> vector<8x512xf32>
    %172 = arith.addf %168, %171 : vector<8x512xf32>
    %173 = vector.extract_strided_slice %172 {offsets = [0, 0], sizes = [8, 384], strides = [1, 1]} : vector<8x512xf32> to vector<8x384xf32>
    %cst_61 = arith.constant 0.000000e+00 : f32
    %174 = vector.broadcast %cst_61 : f32 to vector<8x384xf32>
    %175 = arith.subf %174, %173 : vector<8x384xf32>
    %176 = math.exp %175 : vector<8x384xf32>
    %cst_62 = arith.constant 1.000000e+00 : f32
    %177 = vector.broadcast %cst_62 : f32 to vector<8x384xf32>
    %178 = arith.addf %177, %176 : vector<8x384xf32>
    %179 = tpu.reciprocal %178 {approx = true} : vector<8x384xf32> -> vector<8x384xf32>
    %180 = vector.extract_strided_slice %179 {offsets = [0, 0], sizes = [8, 128], strides = [1, 1]} : vector<8x384xf32> to vector<8x128xf32>
    %181 = vector.extract_strided_slice %179 {offsets = [0, 128], sizes = [8, 128], strides = [1, 1]} : vector<8x384xf32> to vector<8x128xf32>
    %182 = vector.extract_strided_slice %179 {offsets = [0, 256], sizes = [8, 128], strides = [1, 1]} : vector<8x384xf32> to vector<8x128xf32>
    %183 = vector.extract_strided_slice %172 {offsets = [0, 384], sizes = [8, 128], strides = [1, 1]} : vector<8x512xf32> to vector<8x128xf32>
    %184 = math.tanh %183 : vector<8x128xf32>
    %185 = arith.mulf %181, %135 : vector<8x128xf32>
    %186 = arith.mulf %180, %184 : vector<8x128xf32>
    %187 = arith.addf %185, %186 : vector<8x128xf32>
    %188 = math.tanh %187 : vector<8x128xf32>
    %189 = arith.mulf %182, %188 : vector<8x128xf32>
    %190 = arith.truncf %189 : vector<8x128xf32> to vector<8x128xbf16>
    %191 = arith.truncf %164 : vector<8x128xf32> to vector<8x128xbf16>
    %192 = tpu.concatenate %190, %191 in 1 : vector<8x128xbf16>, vector<8x128xbf16> -> vector<8x256xbf16>
    %c0_63 = arith.constant 0 : index
    %c0_64 = arith.constant 0 : index
    %c0_65 = arith.constant 0 : index
    %193 = vector.load %arg4[%c0_63, %c0_64, %c0_65] : memref<1x256x512xbf16, #tpu.memory_space<vmem>>, vector<1x256x512xbf16>
    %194 = vector.shape_cast %193 : vector<1x256x512xbf16> to vector<256x512xbf16>
    %cst_66 = arith.constant dense<0.000000e+00> : vector<8x512xf32>
    %195 = tpu.matmul %192, %194, %cst_66 {dimension_numbers = #tpu.dot_dimension_numbers<[1], [0], [0], [1], [0, 0, 1, 1], [], []>} : vector<8x256xbf16>, vector<256x512xbf16>, vector<8x512xf32> -> vector<8x512xf32>
    %c0_67 = arith.constant 0 : index
    %c0_68 = arith.constant 0 : index
    %c0_69 = arith.constant 0 : index
    %196 = vector.load %arg5[%c0_67, %c0_68, %c0_69] : memref<1x1x512xf32, #tpu.memory_space<vmem>>, vector<1x1x512xf32>
    %197 = vector.shape_cast %196 : vector<1x1x512xf32> to vector<1x512xf32>
    %198 = vector.broadcast %197 : vector<1x512xf32> to vector<8x512xf32>
    %199 = arith.addf %195, %198 : vector<8x512xf32>
    %200 = vector.extract_strided_slice %199 {offsets = [0, 0], sizes = [8, 384], strides = [1, 1]} : vector<8x512xf32> to vector<8x384xf32>
    %cst_70 = arith.constant 0.000000e+00 : f32
    %201 = vector.broadcast %cst_70 : f32 to vector<8x384xf32>
    %202 = arith.subf %201, %200 : vector<8x384xf32>
    %203 = math.exp %202 : vector<8x384xf32>
    %cst_71 = arith.constant 1.000000e+00 : f32
    %204 = vector.broadcast %cst_71 : f32 to vector<8x384xf32>
    %205 = arith.addf %204, %203 : vector<8x384xf32>
    %206 = tpu.reciprocal %205 {approx = true} : vector<8x384xf32> -> vector<8x384xf32>
    %207 = vector.extract_strided_slice %206 {offsets = [0, 0], sizes = [8, 128], strides = [1, 1]} : vector<8x384xf32> to vector<8x128xf32>
    %208 = vector.extract_strided_slice %206 {offsets = [0, 128], sizes = [8, 128], strides = [1, 1]} : vector<8x384xf32> to vector<8x128xf32>
    %209 = vector.extract_strided_slice %206 {offsets = [0, 256], sizes = [8, 128], strides = [1, 1]} : vector<8x384xf32> to vector<8x128xf32>
    %210 = vector.extract_strided_slice %199 {offsets = [0, 384], sizes = [8, 128], strides = [1, 1]} : vector<8x512xf32> to vector<8x128xf32>
    %211 = math.tanh %210 : vector<8x128xf32>
    %212 = arith.mulf %208, %162 : vector<8x128xf32>
    %213 = arith.mulf %207, %211 : vector<8x128xf32>
    %214 = arith.addf %212, %213 : vector<8x128xf32>
    %215 = math.tanh %214 : vector<8x128xf32>
    %216 = arith.mulf %209, %215 : vector<8x128xf32>
    %c4_i32 = arith.constant 4 : i32
    %c8_i32_72 = arith.constant 8 : i32
    %217 = arith.muli %c4_i32, %c8_i32_72 : i32
    %218 = tpu.assume_multiple %217, 8 : i32
    %219 = arith.index_cast %218 : i32 to index
    %c0_73 = arith.constant 0 : index
    %220 = vector.load %arg9[%219, %c0_73] : memref<128x512xf32, #tpu.memory_space<vmem>>, vector<8x512xf32>
    %221 = arith.truncf %189 : vector<8x128xf32> to vector<8x128xbf16>
    %c0_74 = arith.constant 0 : index
    %c0_75 = arith.constant 0 : index
    %222 = vector.load %arg2[%c0_74, %c0_75] : memref<128x512xbf16, #tpu.memory_space<vmem>>, vector<128x512xbf16>
    %cst_76 = arith.constant dense<0.000000e+00> : vector<8x512xf32>
    %223 = tpu.matmul %221, %222, %cst_76 {dimension_numbers = #tpu.dot_dimension_numbers<[1], [0], [0], [1], [0, 0, 1, 1], [], []>} : vector<8x128xbf16>, vector<128x512xbf16>, vector<8x512xf32> -> vector<8x512xf32>
    %224 = arith.addf %220, %223 : vector<8x512xf32>
    %225 = vector.extract_strided_slice %224 {offsets = [0, 0], sizes = [8, 384], strides = [1, 1]} : vector<8x512xf32> to vector<8x384xf32>
    %cst_77 = arith.constant 0.000000e+00 : f32
    %226 = vector.broadcast %cst_77 : f32 to vector<8x384xf32>
    %227 = arith.subf %226, %225 : vector<8x384xf32>
    %228 = math.exp %227 : vector<8x384xf32>
    %cst_78 = arith.constant 1.000000e+00 : f32
    %229 = vector.broadcast %cst_78 : f32 to vector<8x384xf32>
    %230 = arith.addf %229, %228 : vector<8x384xf32>
    %231 = tpu.reciprocal %230 {approx = true} : vector<8x384xf32> -> vector<8x384xf32>
    %232 = vector.extract_strided_slice %231 {offsets = [0, 0], sizes = [8, 128], strides = [1, 1]} : vector<8x384xf32> to vector<8x128xf32>
    %233 = vector.extract_strided_slice %231 {offsets = [0, 128], sizes = [8, 128], strides = [1, 1]} : vector<8x384xf32> to vector<8x128xf32>
    %234 = vector.extract_strided_slice %231 {offsets = [0, 256], sizes = [8, 128], strides = [1, 1]} : vector<8x384xf32> to vector<8x128xf32>
    %235 = vector.extract_strided_slice %224 {offsets = [0, 384], sizes = [8, 128], strides = [1, 1]} : vector<8x512xf32> to vector<8x128xf32>
    %236 = math.tanh %235 : vector<8x128xf32>
    %237 = arith.mulf %233, %187 : vector<8x128xf32>
    %238 = arith.mulf %232, %236 : vector<8x128xf32>
    %239 = arith.addf %237, %238 : vector<8x128xf32>
    %240 = math.tanh %239 : vector<8x128xf32>
    %241 = arith.mulf %234, %240 : vector<8x128xf32>
    %242 = arith.truncf %241 : vector<8x128xf32> to vector<8x128xbf16>
    %243 = arith.truncf %216 : vector<8x128xf32> to vector<8x128xbf16>
    %244 = tpu.concatenate %242, %243 in 1 : vector<8x128xbf16>, vector<8x128xbf16> -> vector<8x256xbf16>
    %c0_79 = arith.constant 0 : index
    %c0_80 = arith.constant 0 : index
    %c0_81 = arith.constant 0 : index
    %245 = vector.load %arg4[%c0_79, %c0_80, %c0_81] : memref<1x256x512xbf16, #tpu.memory_space<vmem>>, vector<1x256x512xbf16>
    %246 = vector.shape_cast %245 : vector<1x256x512xbf16> to vector<256x512xbf16>
    %cst_82 = arith.constant dense<0.000000e+00> : vector<8x512xf32>
    %247 = tpu.matmul %244, %246, %cst_82 {dimension_numbers = #tpu.dot_dimension_numbers<[1], [0], [0], [1], [0, 0, 1, 1], [], []>} : vector<8x256xbf16>, vector<256x512xbf16>, vector<8x512xf32> -> vector<8x512xf32>
    %c0_83 = arith.constant 0 : index
    %c0_84 = arith.constant 0 : index
    %c0_85 = arith.constant 0 : index
    %248 = vector.load %arg5[%c0_83, %c0_84, %c0_85] : memref<1x1x512xf32, #tpu.memory_space<vmem>>, vector<1x1x512xf32>
    %249 = vector.shape_cast %248 : vector<1x1x512xf32> to vector<1x512xf32>
    %250 = vector.broadcast %249 : vector<1x512xf32> to vector<8x512xf32>
    %251 = arith.addf %247, %250 : vector<8x512xf32>
    %252 = vector.extract_strided_slice %251 {offsets = [0, 0], sizes = [8, 384], strides = [1, 1]} : vector<8x512xf32> to vector<8x384xf32>
    %cst_86 = arith.constant 0.000000e+00 : f32
    %253 = vector.broadcast %cst_86 : f32 to vector<8x384xf32>
    %254 = arith.subf %253, %252 : vector<8x384xf32>
    %255 = math.exp %254 : vector<8x384xf32>
    %cst_87 = arith.constant 1.000000e+00 : f32
    %256 = vector.broadcast %cst_87 : f32 to vector<8x384xf32>
    %257 = arith.addf %256, %255 : vector<8x384xf32>
    %258 = tpu.reciprocal %257 {approx = true} : vector<8x384xf32> -> vector<8x384xf32>
    %259 = vector.extract_strided_slice %258 {offsets = [0, 0], sizes = [8, 128], strides = [1, 1]} : vector<8x384xf32> to vector<8x128xf32>
    %260 = vector.extract_strided_slice %258 {offsets = [0, 128], sizes = [8, 128], strides = [1, 1]} : vector<8x384xf32> to vector<8x128xf32>
    %261 = vector.extract_strided_slice %258 {offsets = [0, 256], sizes = [8, 128], strides = [1, 1]} : vector<8x384xf32> to vector<8x128xf32>
    %262 = vector.extract_strided_slice %251 {offsets = [0, 384], sizes = [8, 128], strides = [1, 1]} : vector<8x512xf32> to vector<8x128xf32>
    %263 = math.tanh %262 : vector<8x128xf32>
    %264 = arith.mulf %260, %214 : vector<8x128xf32>
    %265 = arith.mulf %259, %263 : vector<8x128xf32>
    %266 = arith.addf %264, %265 : vector<8x128xf32>
    %267 = math.tanh %266 : vector<8x128xf32>
    %268 = arith.mulf %261, %267 : vector<8x128xf32>
    %c5_i32 = arith.constant 5 : i32
    %c8_i32_88 = arith.constant 8 : i32
    %269 = arith.muli %c5_i32, %c8_i32_88 : i32
    %270 = tpu.assume_multiple %269, 8 : i32
    %271 = arith.index_cast %270 : i32 to index
    %c0_89 = arith.constant 0 : index
    %272 = vector.load %arg9[%271, %c0_89] : memref<128x512xf32, #tpu.memory_space<vmem>>, vector<8x512xf32>
    %273 = arith.truncf %241 : vector<8x128xf32> to vector<8x128xbf16>
    %c0_90 = arith.constant 0 : index
    %c0_91 = arith.constant 0 : index
    %274 = vector.load %arg2[%c0_90, %c0_91] : memref<128x512xbf16, #tpu.memory_space<vmem>>, vector<128x512xbf16>
    %cst_92 = arith.constant dense<0.000000e+00> : vector<8x512xf32>
    %275 = tpu.matmul %273, %274, %cst_92 {dimension_numbers = #tpu.dot_dimension_numbers<[1], [0], [0], [1], [0, 0, 1, 1], [], []>} : vector<8x128xbf16>, vector<128x512xbf16>, vector<8x512xf32> -> vector<8x512xf32>
    %276 = arith.addf %272, %275 : vector<8x512xf32>
    %277 = vector.extract_strided_slice %276 {offsets = [0, 0], sizes = [8, 384], strides = [1, 1]} : vector<8x512xf32> to vector<8x384xf32>
    %cst_93 = arith.constant 0.000000e+00 : f32
    %278 = vector.broadcast %cst_93 : f32 to vector<8x384xf32>
    %279 = arith.subf %278, %277 : vector<8x384xf32>
    %280 = math.exp %279 : vector<8x384xf32>
    %cst_94 = arith.constant 1.000000e+00 : f32
    %281 = vector.broadcast %cst_94 : f32 to vector<8x384xf32>
    %282 = arith.addf %281, %280 : vector<8x384xf32>
    %283 = tpu.reciprocal %282 {approx = true} : vector<8x384xf32> -> vector<8x384xf32>
    %284 = vector.extract_strided_slice %283 {offsets = [0, 0], sizes = [8, 128], strides = [1, 1]} : vector<8x384xf32> to vector<8x128xf32>
    %285 = vector.extract_strided_slice %283 {offsets = [0, 128], sizes = [8, 128], strides = [1, 1]} : vector<8x384xf32> to vector<8x128xf32>
    %286 = vector.extract_strided_slice %283 {offsets = [0, 256], sizes = [8, 128], strides = [1, 1]} : vector<8x384xf32> to vector<8x128xf32>
    %287 = vector.extract_strided_slice %276 {offsets = [0, 384], sizes = [8, 128], strides = [1, 1]} : vector<8x512xf32> to vector<8x128xf32>
    %288 = math.tanh %287 : vector<8x128xf32>
    %289 = arith.mulf %285, %239 : vector<8x128xf32>
    %290 = arith.mulf %284, %288 : vector<8x128xf32>
    %291 = arith.addf %289, %290 : vector<8x128xf32>
    %292 = math.tanh %291 : vector<8x128xf32>
    %293 = arith.mulf %286, %292 : vector<8x128xf32>
    %294 = arith.truncf %293 : vector<8x128xf32> to vector<8x128xbf16>
    %295 = arith.truncf %268 : vector<8x128xf32> to vector<8x128xbf16>
    %296 = tpu.concatenate %294, %295 in 1 : vector<8x128xbf16>, vector<8x128xbf16> -> vector<8x256xbf16>
    %c0_95 = arith.constant 0 : index
    %c0_96 = arith.constant 0 : index
    %c0_97 = arith.constant 0 : index
    %297 = vector.load %arg4[%c0_95, %c0_96, %c0_97] : memref<1x256x512xbf16, #tpu.memory_space<vmem>>, vector<1x256x512xbf16>
    %298 = vector.shape_cast %297 : vector<1x256x512xbf16> to vector<256x512xbf16>
    %cst_98 = arith.constant dense<0.000000e+00> : vector<8x512xf32>
    %299 = tpu.matmul %296, %298, %cst_98 {dimension_numbers = #tpu.dot_dimension_numbers<[1], [0], [0], [1], [0, 0, 1, 1], [], []>} : vector<8x256xbf16>, vector<256x512xbf16>, vector<8x512xf32> -> vector<8x512xf32>
    %c0_99 = arith.constant 0 : index
    %c0_100 = arith.constant 0 : index
    %c0_101 = arith.constant 0 : index
    %300 = vector.load %arg5[%c0_99, %c0_100, %c0_101] : memref<1x1x512xf32, #tpu.memory_space<vmem>>, vector<1x1x512xf32>
    %301 = vector.shape_cast %300 : vector<1x1x512xf32> to vector<1x512xf32>
    %302 = vector.broadcast %301 : vector<1x512xf32> to vector<8x512xf32>
    %303 = arith.addf %299, %302 : vector<8x512xf32>
    %304 = vector.extract_strided_slice %303 {offsets = [0, 0], sizes = [8, 384], strides = [1, 1]} : vector<8x512xf32> to vector<8x384xf32>
    %cst_102 = arith.constant 0.000000e+00 : f32
    %305 = vector.broadcast %cst_102 : f32 to vector<8x384xf32>
    %306 = arith.subf %305, %304 : vector<8x384xf32>
    %307 = math.exp %306 : vector<8x384xf32>
    %cst_103 = arith.constant 1.000000e+00 : f32
    %308 = vector.broadcast %cst_103 : f32 to vector<8x384xf32>
    %309 = arith.addf %308, %307 : vector<8x384xf32>
    %310 = tpu.reciprocal %309 {approx = true} : vector<8x384xf32> -> vector<8x384xf32>
    %311 = vector.extract_strided_slice %310 {offsets = [0, 0], sizes = [8, 128], strides = [1, 1]} : vector<8x384xf32> to vector<8x128xf32>
    %312 = vector.extract_strided_slice %310 {offsets = [0, 128], sizes = [8, 128], strides = [1, 1]} : vector<8x384xf32> to vector<8x128xf32>
    %313 = vector.extract_strided_slice %310 {offsets = [0, 256], sizes = [8, 128], strides = [1, 1]} : vector<8x384xf32> to vector<8x128xf32>
    %314 = vector.extract_strided_slice %303 {offsets = [0, 384], sizes = [8, 128], strides = [1, 1]} : vector<8x512xf32> to vector<8x128xf32>
    %315 = math.tanh %314 : vector<8x128xf32>
    %316 = arith.mulf %312, %266 : vector<8x128xf32>
    %317 = arith.mulf %311, %315 : vector<8x128xf32>
    %318 = arith.addf %316, %317 : vector<8x128xf32>
    %319 = math.tanh %318 : vector<8x128xf32>
    %320 = arith.mulf %313, %319 : vector<8x128xf32>
    %c6_i32 = arith.constant 6 : i32
    %c8_i32_104 = arith.constant 8 : i32
    %321 = arith.muli %c6_i32, %c8_i32_104 : i32
    %322 = tpu.assume_multiple %321, 8 : i32
    %323 = arith.index_cast %322 : i32 to index
    %c0_105 = arith.constant 0 : index
    %324 = vector.load %arg9[%323, %c0_105] : memref<128x512xf32, #tpu.memory_space<vmem>>, vector<8x512xf32>
    %325 = arith.truncf %293 : vector<8x128xf32> to vector<8x128xbf16>
    %c0_106 = arith.constant 0 : index
    %c0_107 = arith.constant 0 : index
    %326 = vector.load %arg2[%c0_106, %c0_107] : memref<128x512xbf16, #tpu.memory_space<vmem>>, vector<128x512xbf16>
    %cst_108 = arith.constant dense<0.000000e+00> : vector<8x512xf32>
    %327 = tpu.matmul %325, %326, %cst_108 {dimension_numbers = #tpu.dot_dimension_numbers<[1], [0], [0], [1], [0, 0, 1, 1], [], []>} : vector<8x128xbf16>, vector<128x512xbf16>, vector<8x512xf32> -> vector<8x512xf32>
    %328 = arith.addf %324, %327 : vector<8x512xf32>
    %329 = vector.extract_strided_slice %328 {offsets = [0, 0], sizes = [8, 384], strides = [1, 1]} : vector<8x512xf32> to vector<8x384xf32>
    %cst_109 = arith.constant 0.000000e+00 : f32
    %330 = vector.broadcast %cst_109 : f32 to vector<8x384xf32>
    %331 = arith.subf %330, %329 : vector<8x384xf32>
    %332 = math.exp %331 : vector<8x384xf32>
    %cst_110 = arith.constant 1.000000e+00 : f32
    %333 = vector.broadcast %cst_110 : f32 to vector<8x384xf32>
    %334 = arith.addf %333, %332 : vector<8x384xf32>
    %335 = tpu.reciprocal %334 {approx = true} : vector<8x384xf32> -> vector<8x384xf32>
    %336 = vector.extract_strided_slice %335 {offsets = [0, 0], sizes = [8, 128], strides = [1, 1]} : vector<8x384xf32> to vector<8x128xf32>
    %337 = vector.extract_strided_slice %335 {offsets = [0, 128], sizes = [8, 128], strides = [1, 1]} : vector<8x384xf32> to vector<8x128xf32>
    %338 = vector.extract_strided_slice %335 {offsets = [0, 256], sizes = [8, 128], strides = [1, 1]} : vector<8x384xf32> to vector<8x128xf32>
    %339 = vector.extract_strided_slice %328 {offsets = [0, 384], sizes = [8, 128], strides = [1, 1]} : vector<8x512xf32> to vector<8x128xf32>
    %340 = math.tanh %339 : vector<8x128xf32>
    %341 = arith.mulf %337, %291 : vector<8x128xf32>
    %342 = arith.mulf %336, %340 : vector<8x128xf32>
    %343 = arith.addf %341, %342 : vector<8x128xf32>
    %344 = math.tanh %343 : vector<8x128xf32>
    %345 = arith.mulf %338, %344 : vector<8x128xf32>
    %346 = arith.truncf %345 : vector<8x128xf32> to vector<8x128xbf16>
    %347 = arith.truncf %320 : vector<8x128xf32> to vector<8x128xbf16>
    %348 = tpu.concatenate %346, %347 in 1 : vector<8x128xbf16>, vector<8x128xbf16> -> vector<8x256xbf16>
    %c0_111 = arith.constant 0 : index
    %c0_112 = arith.constant 0 : index
    %c0_113 = arith.constant 0 : index
    %349 = vector.load %arg4[%c0_111, %c0_112, %c0_113] : memref<1x256x512xbf16, #tpu.memory_space<vmem>>, vector<1x256x512xbf16>
    %350 = vector.shape_cast %349 : vector<1x256x512xbf16> to vector<256x512xbf16>
    %cst_114 = arith.constant dense<0.000000e+00> : vector<8x512xf32>
    %351 = tpu.matmul %348, %350, %cst_114 {dimension_numbers = #tpu.dot_dimension_numbers<[1], [0], [0], [1], [0, 0, 1, 1], [], []>} : vector<8x256xbf16>, vector<256x512xbf16>, vector<8x512xf32> -> vector<8x512xf32>
    %c0_115 = arith.constant 0 : index
    %c0_116 = arith.constant 0 : index
    %c0_117 = arith.constant 0 : index
    %352 = vector.load %arg5[%c0_115, %c0_116, %c0_117] : memref<1x1x512xf32, #tpu.memory_space<vmem>>, vector<1x1x512xf32>
    %353 = vector.shape_cast %352 : vector<1x1x512xf32> to vector<1x512xf32>
    %354 = vector.broadcast %353 : vector<1x512xf32> to vector<8x512xf32>
    %355 = arith.addf %351, %354 : vector<8x512xf32>
    %356 = vector.extract_strided_slice %355 {offsets = [0, 0], sizes = [8, 384], strides = [1, 1]} : vector<8x512xf32> to vector<8x384xf32>
    %cst_118 = arith.constant 0.000000e+00 : f32
    %357 = vector.broadcast %cst_118 : f32 to vector<8x384xf32>
    %358 = arith.subf %357, %356 : vector<8x384xf32>
    %359 = math.exp %358 : vector<8x384xf32>
    %cst_119 = arith.constant 1.000000e+00 : f32
    %360 = vector.broadcast %cst_119 : f32 to vector<8x384xf32>
    %361 = arith.addf %360, %359 : vector<8x384xf32>
    %362 = tpu.reciprocal %361 {approx = true} : vector<8x384xf32> -> vector<8x384xf32>
    %363 = vector.extract_strided_slice %362 {offsets = [0, 0], sizes = [8, 128], strides = [1, 1]} : vector<8x384xf32> to vector<8x128xf32>
    %364 = vector.extract_strided_slice %362 {offsets = [0, 128], sizes = [8, 128], strides = [1, 1]} : vector<8x384xf32> to vector<8x128xf32>
    %365 = vector.extract_strided_slice %362 {offsets = [0, 256], sizes = [8, 128], strides = [1, 1]} : vector<8x384xf32> to vector<8x128xf32>
    %366 = vector.extract_strided_slice %355 {offsets = [0, 384], sizes = [8, 128], strides = [1, 1]} : vector<8x512xf32> to vector<8x128xf32>
    %367 = math.tanh %366 : vector<8x128xf32>
    %368 = arith.mulf %364, %318 : vector<8x128xf32>
    %369 = arith.mulf %363, %367 : vector<8x128xf32>
    %370 = arith.addf %368, %369 : vector<8x128xf32>
    %371 = math.tanh %370 : vector<8x128xf32>
    %372 = arith.mulf %365, %371 : vector<8x128xf32>
    %c7_i32 = arith.constant 7 : i32
    %c8_i32_120 = arith.constant 8 : i32
    %373 = arith.muli %c7_i32, %c8_i32_120 : i32
    %374 = tpu.assume_multiple %373, 8 : i32
    %375 = arith.index_cast %374 : i32 to index
    %c0_121 = arith.constant 0 : index
    %376 = vector.load %arg9[%375, %c0_121] : memref<128x512xf32, #tpu.memory_space<vmem>>, vector<8x512xf32>
    %377 = arith.truncf %345 : vector<8x128xf32> to vector<8x128xbf16>
    %c0_122 = arith.constant 0 : index
    %c0_123 = arith.constant 0 : index
    %378 = vector.load %arg2[%c0_122, %c0_123] : memref<128x512xbf16, #tpu.memory_space<vmem>>, vector<128x512xbf16>
    %cst_124 = arith.constant dense<0.000000e+00> : vector<8x512xf32>
    %379 = tpu.matmul %377, %378, %cst_124 {dimension_numbers = #tpu.dot_dimension_numbers<[1], [0], [0], [1], [0, 0, 1, 1], [], []>} : vector<8x128xbf16>, vector<128x512xbf16>, vector<8x512xf32> -> vector<8x512xf32>
    %380 = arith.addf %376, %379 : vector<8x512xf32>
    %381 = vector.extract_strided_slice %380 {offsets = [0, 0], sizes = [8, 384], strides = [1, 1]} : vector<8x512xf32> to vector<8x384xf32>
    %cst_125 = arith.constant 0.000000e+00 : f32
    %382 = vector.broadcast %cst_125 : f32 to vector<8x384xf32>
    %383 = arith.subf %382, %381 : vector<8x384xf32>
    %384 = math.exp %383 : vector<8x384xf32>
    %cst_126 = arith.constant 1.000000e+00 : f32
    %385 = vector.broadcast %cst_126 : f32 to vector<8x384xf32>
    %386 = arith.addf %385, %384 : vector<8x384xf32>
    %387 = tpu.reciprocal %386 {approx = true} : vector<8x384xf32> -> vector<8x384xf32>
    %388 = vector.extract_strided_slice %387 {offsets = [0, 0], sizes = [8, 128], strides = [1, 1]} : vector<8x384xf32> to vector<8x128xf32>
    %389 = vector.extract_strided_slice %387 {offsets = [0, 128], sizes = [8, 128], strides = [1, 1]} : vector<8x384xf32> to vector<8x128xf32>
    %390 = vector.extract_strided_slice %387 {offsets = [0, 256], sizes = [8, 128], strides = [1, 1]} : vector<8x384xf32> to vector<8x128xf32>
    %391 = vector.extract_strided_slice %380 {offsets = [0, 384], sizes = [8, 128], strides = [1, 1]} : vector<8x512xf32> to vector<8x128xf32>
    %392 = math.tanh %391 : vector<8x128xf32>
    %393 = arith.mulf %389, %343 : vector<8x128xf32>
    %394 = arith.mulf %388, %392 : vector<8x128xf32>
    %395 = arith.addf %393, %394 : vector<8x128xf32>
    %396 = math.tanh %395 : vector<8x128xf32>
    %397 = arith.mulf %390, %396 : vector<8x128xf32>
    %398 = arith.truncf %397 : vector<8x128xf32> to vector<8x128xbf16>
    %399 = arith.truncf %372 : vector<8x128xf32> to vector<8x128xbf16>
    %400 = tpu.concatenate %398, %399 in 1 : vector<8x128xbf16>, vector<8x128xbf16> -> vector<8x256xbf16>
    %c0_127 = arith.constant 0 : index
    %c0_128 = arith.constant 0 : index
    %c0_129 = arith.constant 0 : index
    %401 = vector.load %arg4[%c0_127, %c0_128, %c0_129] : memref<1x256x512xbf16, #tpu.memory_space<vmem>>, vector<1x256x512xbf16>
    %402 = vector.shape_cast %401 : vector<1x256x512xbf16> to vector<256x512xbf16>
    %cst_130 = arith.constant dense<0.000000e+00> : vector<8x512xf32>
    %403 = tpu.matmul %400, %402, %cst_130 {dimension_numbers = #tpu.dot_dimension_numbers<[1], [0], [0], [1], [0, 0, 1, 1], [], []>} : vector<8x256xbf16>, vector<256x512xbf16>, vector<8x512xf32> -> vector<8x512xf32>
    %c0_131 = arith.constant 0 : index
    %c0_132 = arith.constant 0 : index
    %c0_133 = arith.constant 0 : index
    %404 = vector.load %arg5[%c0_131, %c0_132, %c0_133] : memref<1x1x512xf32, #tpu.memory_space<vmem>>, vector<1x1x512xf32>
    %405 = vector.shape_cast %404 : vector<1x1x512xf32> to vector<1x512xf32>
    %406 = vector.broadcast %405 : vector<1x512xf32> to vector<8x512xf32>
    %407 = arith.addf %403, %406 : vector<8x512xf32>
    %408 = vector.extract_strided_slice %407 {offsets = [0, 0], sizes = [8, 384], strides = [1, 1]} : vector<8x512xf32> to vector<8x384xf32>
    %cst_134 = arith.constant 0.000000e+00 : f32
    %409 = vector.broadcast %cst_134 : f32 to vector<8x384xf32>
    %410 = arith.subf %409, %408 : vector<8x384xf32>
    %411 = math.exp %410 : vector<8x384xf32>
    %cst_135 = arith.constant 1.000000e+00 : f32
    %412 = vector.broadcast %cst_135 : f32 to vector<8x384xf32>
    %413 = arith.addf %412, %411 : vector<8x384xf32>
    %414 = tpu.reciprocal %413 {approx = true} : vector<8x384xf32> -> vector<8x384xf32>
    %415 = vector.extract_strided_slice %414 {offsets = [0, 0], sizes = [8, 128], strides = [1, 1]} : vector<8x384xf32> to vector<8x128xf32>
    %416 = vector.extract_strided_slice %414 {offsets = [0, 128], sizes = [8, 128], strides = [1, 1]} : vector<8x384xf32> to vector<8x128xf32>
    %417 = vector.extract_strided_slice %414 {offsets = [0, 256], sizes = [8, 128], strides = [1, 1]} : vector<8x384xf32> to vector<8x128xf32>
    %418 = vector.extract_strided_slice %407 {offsets = [0, 384], sizes = [8, 128], strides = [1, 1]} : vector<8x512xf32> to vector<8x128xf32>
    %419 = math.tanh %418 : vector<8x128xf32>
    %420 = arith.mulf %416, %370 : vector<8x128xf32>
    %421 = arith.mulf %415, %419 : vector<8x128xf32>
    %422 = arith.addf %420, %421 : vector<8x128xf32>
    %423 = math.tanh %422 : vector<8x128xf32>
    %424 = arith.mulf %417, %423 : vector<8x128xf32>
    %c8_i32_136 = arith.constant 8 : i32
    %c8_i32_137 = arith.constant 8 : i32
    %425 = arith.muli %c8_i32_136, %c8_i32_137 : i32
    %426 = tpu.assume_multiple %425, 8 : i32
    %427 = arith.index_cast %426 : i32 to index
    %c0_138 = arith.constant 0 : index
    %428 = vector.load %arg9[%427, %c0_138] : memref<128x512xf32, #tpu.memory_space<vmem>>, vector<8x512xf32>
    %429 = arith.truncf %397 : vector<8x128xf32> to vector<8x128xbf16>
    %c0_139 = arith.constant 0 : index
    %c0_140 = arith.constant 0 : index
    %430 = vector.load %arg2[%c0_139, %c0_140] : memref<128x512xbf16, #tpu.memory_space<vmem>>, vector<128x512xbf16>
    %cst_141 = arith.constant dense<0.000000e+00> : vector<8x512xf32>
    %431 = tpu.matmul %429, %430, %cst_141 {dimension_numbers = #tpu.dot_dimension_numbers<[1], [0], [0], [1], [0, 0, 1, 1], [], []>} : vector<8x128xbf16>, vector<128x512xbf16>, vector<8x512xf32> -> vector<8x512xf32>
    %432 = arith.addf %428, %431 : vector<8x512xf32>
    %433 = vector.extract_strided_slice %432 {offsets = [0, 0], sizes = [8, 384], strides = [1, 1]} : vector<8x512xf32> to vector<8x384xf32>
    %cst_142 = arith.constant 0.000000e+00 : f32
    %434 = vector.broadcast %cst_142 : f32 to vector<8x384xf32>
    %435 = arith.subf %434, %433 : vector<8x384xf32>
    %436 = math.exp %435 : vector<8x384xf32>
    %cst_143 = arith.constant 1.000000e+00 : f32
    %437 = vector.broadcast %cst_143 : f32 to vector<8x384xf32>
    %438 = arith.addf %437, %436 : vector<8x384xf32>
    %439 = tpu.reciprocal %438 {approx = true} : vector<8x384xf32> -> vector<8x384xf32>
    %440 = vector.extract_strided_slice %439 {offsets = [0, 0], sizes = [8, 128], strides = [1, 1]} : vector<8x384xf32> to vector<8x128xf32>
    %441 = vector.extract_strided_slice %439 {offsets = [0, 128], sizes = [8, 128], strides = [1, 1]} : vector<8x384xf32> to vector<8x128xf32>
    %442 = vector.extract_strided_slice %439 {offsets = [0, 256], sizes = [8, 128], strides = [1, 1]} : vector<8x384xf32> to vector<8x128xf32>
    %443 = vector.extract_strided_slice %432 {offsets = [0, 384], sizes = [8, 128], strides = [1, 1]} : vector<8x512xf32> to vector<8x128xf32>
    %444 = math.tanh %443 : vector<8x128xf32>
    %445 = arith.mulf %441, %395 : vector<8x128xf32>
    %446 = arith.mulf %440, %444 : vector<8x128xf32>
    %447 = arith.addf %445, %446 : vector<8x128xf32>
    %448 = math.tanh %447 : vector<8x128xf32>
    %449 = arith.mulf %442, %448 : vector<8x128xf32>
    %450 = arith.truncf %449 : vector<8x128xf32> to vector<8x128xbf16>
    %451 = arith.truncf %424 : vector<8x128xf32> to vector<8x128xbf16>
    %452 = tpu.concatenate %450, %451 in 1 : vector<8x128xbf16>, vector<8x128xbf16> -> vector<8x256xbf16>
    %c0_144 = arith.constant 0 : index
    %c0_145 = arith.constant 0 : index
    %c0_146 = arith.constant 0 : index
    %453 = vector.load %arg4[%c0_144, %c0_145, %c0_146] : memref<1x256x512xbf16, #tpu.memory_space<vmem>>, vector<1x256x512xbf16>
    %454 = vector.shape_cast %453 : vector<1x256x512xbf16> to vector<256x512xbf16>
    %cst_147 = arith.constant dense<0.000000e+00> : vector<8x512xf32>
    %455 = tpu.matmul %452, %454, %cst_147 {dimension_numbers = #tpu.dot_dimension_numbers<[1], [0], [0], [1], [0, 0, 1, 1], [], []>} : vector<8x256xbf16>, vector<256x512xbf16>, vector<8x512xf32> -> vector<8x512xf32>
    %c0_148 = arith.constant 0 : index
    %c0_149 = arith.constant 0 : index
    %c0_150 = arith.constant 0 : index
    %456 = vector.load %arg5[%c0_148, %c0_149, %c0_150] : memref<1x1x512xf32, #tpu.memory_space<vmem>>, vector<1x1x512xf32>
    %457 = vector.shape_cast %456 : vector<1x1x512xf32> to vector<1x512xf32>
    %458 = vector.broadcast %457 : vector<1x512xf32> to vector<8x512xf32>
    %459 = arith.addf %455, %458 : vector<8x512xf32>
    %460 = vector.extract_strided_slice %459 {offsets = [0, 0], sizes = [8, 384], strides = [1, 1]} : vector<8x512xf32> to vector<8x384xf32>
    %cst_151 = arith.constant 0.000000e+00 : f32
    %461 = vector.broadcast %cst_151 : f32 to vector<8x384xf32>
    %462 = arith.subf %461, %460 : vector<8x384xf32>
    %463 = math.exp %462 : vector<8x384xf32>
    %cst_152 = arith.constant 1.000000e+00 : f32
    %464 = vector.broadcast %cst_152 : f32 to vector<8x384xf32>
    %465 = arith.addf %464, %463 : vector<8x384xf32>
    %466 = tpu.reciprocal %465 {approx = true} : vector<8x384xf32> -> vector<8x384xf32>
    %467 = vector.extract_strided_slice %466 {offsets = [0, 0], sizes = [8, 128], strides = [1, 1]} : vector<8x384xf32> to vector<8x128xf32>
    %468 = vector.extract_strided_slice %466 {offsets = [0, 128], sizes = [8, 128], strides = [1, 1]} : vector<8x384xf32> to vector<8x128xf32>
    %469 = vector.extract_strided_slice %466 {offsets = [0, 256], sizes = [8, 128], strides = [1, 1]} : vector<8x384xf32> to vector<8x128xf32>
    %470 = vector.extract_strided_slice %459 {offsets = [0, 384], sizes = [8, 128], strides = [1, 1]} : vector<8x512xf32> to vector<8x128xf32>
    %471 = math.tanh %470 : vector<8x128xf32>
    %472 = arith.mulf %468, %422 : vector<8x128xf32>
    %473 = arith.mulf %467, %471 : vector<8x128xf32>
    %474 = arith.addf %472, %473 : vector<8x128xf32>
    %475 = math.tanh %474 : vector<8x128xf32>
    %476 = arith.mulf %469, %475 : vector<8x128xf32>
    %c9_i32 = arith.constant 9 : i32
    %c8_i32_153 = arith.constant 8 : i32
    %477 = arith.muli %c9_i32, %c8_i32_153 : i32
    %478 = tpu.assume_multiple %477, 8 : i32
    %479 = arith.index_cast %478 : i32 to index
    %c0_154 = arith.constant 0 : index
    %480 = vector.load %arg9[%479, %c0_154] : memref<128x512xf32, #tpu.memory_space<vmem>>, vector<8x512xf32>
    %481 = arith.truncf %449 : vector<8x128xf32> to vector<8x128xbf16>
    %c0_155 = arith.constant 0 : index
    %c0_156 = arith.constant 0 : index
    %482 = vector.load %arg2[%c0_155, %c0_156] : memref<128x512xbf16, #tpu.memory_space<vmem>>, vector<128x512xbf16>
    %cst_157 = arith.constant dense<0.000000e+00> : vector<8x512xf32>
    %483 = tpu.matmul %481, %482, %cst_157 {dimension_numbers = #tpu.dot_dimension_numbers<[1], [0], [0], [1], [0, 0, 1, 1], [], []>} : vector<8x128xbf16>, vector<128x512xbf16>, vector<8x512xf32> -> vector<8x512xf32>
    %484 = arith.addf %480, %483 : vector<8x512xf32>
    %485 = vector.extract_strided_slice %484 {offsets = [0, 0], sizes = [8, 384], strides = [1, 1]} : vector<8x512xf32> to vector<8x384xf32>
    %cst_158 = arith.constant 0.000000e+00 : f32
    %486 = vector.broadcast %cst_158 : f32 to vector<8x384xf32>
    %487 = arith.subf %486, %485 : vector<8x384xf32>
    %488 = math.exp %487 : vector<8x384xf32>
    %cst_159 = arith.constant 1.000000e+00 : f32
    %489 = vector.broadcast %cst_159 : f32 to vector<8x384xf32>
    %490 = arith.addf %489, %488 : vector<8x384xf32>
    %491 = tpu.reciprocal %490 {approx = true} : vector<8x384xf32> -> vector<8x384xf32>
    %492 = vector.extract_strided_slice %491 {offsets = [0, 0], sizes = [8, 128], strides = [1, 1]} : vector<8x384xf32> to vector<8x128xf32>
    %493 = vector.extract_strided_slice %491 {offsets = [0, 128], sizes = [8, 128], strides = [1, 1]} : vector<8x384xf32> to vector<8x128xf32>
    %494 = vector.extract_strided_slice %491 {offsets = [0, 256], sizes = [8, 128], strides = [1, 1]} : vector<8x384xf32> to vector<8x128xf32>
    %495 = vector.extract_strided_slice %484 {offsets = [0, 384], sizes = [8, 128], strides = [1, 1]} : vector<8x512xf32> to vector<8x128xf32>
    %496 = math.tanh %495 : vector<8x128xf32>
    %497 = arith.mulf %493, %447 : vector<8x128xf32>
    %498 = arith.mulf %492, %496 : vector<8x128xf32>
    %499 = arith.addf %497, %498 : vector<8x128xf32>
    %500 = math.tanh %499 : vector<8x128xf32>
    %501 = arith.mulf %494, %500 : vector<8x128xf32>
    %502 = arith.truncf %501 : vector<8x128xf32> to vector<8x128xbf16>
    %503 = arith.truncf %476 : vector<8x128xf32> to vector<8x128xbf16>
    %504 = tpu.concatenate %502, %503 in 1 : vector<8x128xbf16>, vector<8x128xbf16> -> vector<8x256xbf16>
    %c0_160 = arith.constant 0 : index
    %c0_161 = arith.constant 0 : index
    %c0_162 = arith.constant 0 : index
    %505 = vector.load %arg4[%c0_160, %c0_161, %c0_162] : memref<1x256x512xbf16, #tpu.memory_space<vmem>>, vector<1x256x512xbf16>
    %506 = vector.shape_cast %505 : vector<1x256x512xbf16> to vector<256x512xbf16>
    %cst_163 = arith.constant dense<0.000000e+00> : vector<8x512xf32>
    %507 = tpu.matmul %504, %506, %cst_163 {dimension_numbers = #tpu.dot_dimension_numbers<[1], [0], [0], [1], [0, 0, 1, 1], [], []>} : vector<8x256xbf16>, vector<256x512xbf16>, vector<8x512xf32> -> vector<8x512xf32>
    %c0_164 = arith.constant 0 : index
    %c0_165 = arith.constant 0 : index
    %c0_166 = arith.constant 0 : index
    %508 = vector.load %arg5[%c0_164, %c0_165, %c0_166] : memref<1x1x512xf32, #tpu.memory_space<vmem>>, vector<1x1x512xf32>
    %509 = vector.shape_cast %508 : vector<1x1x512xf32> to vector<1x512xf32>
    %510 = vector.broadcast %509 : vector<1x512xf32> to vector<8x512xf32>
    %511 = arith.addf %507, %510 : vector<8x512xf32>
    %512 = vector.extract_strided_slice %511 {offsets = [0, 0], sizes = [8, 384], strides = [1, 1]} : vector<8x512xf32> to vector<8x384xf32>
    %cst_167 = arith.constant 0.000000e+00 : f32
    %513 = vector.broadcast %cst_167 : f32 to vector<8x384xf32>
    %514 = arith.subf %513, %512 : vector<8x384xf32>
    %515 = math.exp %514 : vector<8x384xf32>
    %cst_168 = arith.constant 1.000000e+00 : f32
    %516 = vector.broadcast %cst_168 : f32 to vector<8x384xf32>
    %517 = arith.addf %516, %515 : vector<8x384xf32>
    %518 = tpu.reciprocal %517 {approx = true} : vector<8x384xf32> -> vector<8x384xf32>
    %519 = vector.extract_strided_slice %518 {offsets = [0, 0], sizes = [8, 128], strides = [1, 1]} : vector<8x384xf32> to vector<8x128xf32>
    %520 = vector.extract_strided_slice %518 {offsets = [0, 128], sizes = [8, 128], strides = [1, 1]} : vector<8x384xf32> to vector<8x128xf32>
    %521 = vector.extract_strided_slice %518 {offsets = [0, 256], sizes = [8, 128], strides = [1, 1]} : vector<8x384xf32> to vector<8x128xf32>
    %522 = vector.extract_strided_slice %511 {offsets = [0, 384], sizes = [8, 128], strides = [1, 1]} : vector<8x512xf32> to vector<8x128xf32>
    %523 = math.tanh %522 : vector<8x128xf32>
    %524 = arith.mulf %520, %474 : vector<8x128xf32>
    %525 = arith.mulf %519, %523 : vector<8x128xf32>
    %526 = arith.addf %524, %525 : vector<8x128xf32>
    %527 = math.tanh %526 : vector<8x128xf32>
    %528 = arith.mulf %521, %527 : vector<8x128xf32>
    %c10_i32 = arith.constant 10 : i32
    %c8_i32_169 = arith.constant 8 : i32
    %529 = arith.muli %c10_i32, %c8_i32_169 : i32
    %530 = tpu.assume_multiple %529, 8 : i32
    %531 = arith.index_cast %530 : i32 to index
    %c0_170 = arith.constant 0 : index
    %532 = vector.load %arg9[%531, %c0_170] : memref<128x512xf32, #tpu.memory_space<vmem>>, vector<8x512xf32>
    %533 = arith.truncf %501 : vector<8x128xf32> to vector<8x128xbf16>
    %c0_171 = arith.constant 0 : index
    %c0_172 = arith.constant 0 : index
    %534 = vector.load %arg2[%c0_171, %c0_172] : memref<128x512xbf16, #tpu.memory_space<vmem>>, vector<128x512xbf16>
    %cst_173 = arith.constant dense<0.000000e+00> : vector<8x512xf32>
    %535 = tpu.matmul %533, %534, %cst_173 {dimension_numbers = #tpu.dot_dimension_numbers<[1], [0], [0], [1], [0, 0, 1, 1], [], []>} : vector<8x128xbf16>, vector<128x512xbf16>, vector<8x512xf32> -> vector<8x512xf32>
    %536 = arith.addf %532, %535 : vector<8x512xf32>
    %537 = vector.extract_strided_slice %536 {offsets = [0, 0], sizes = [8, 384], strides = [1, 1]} : vector<8x512xf32> to vector<8x384xf32>
    %cst_174 = arith.constant 0.000000e+00 : f32
    %538 = vector.broadcast %cst_174 : f32 to vector<8x384xf32>
    %539 = arith.subf %538, %537 : vector<8x384xf32>
    %540 = math.exp %539 : vector<8x384xf32>
    %cst_175 = arith.constant 1.000000e+00 : f32
    %541 = vector.broadcast %cst_175 : f32 to vector<8x384xf32>
    %542 = arith.addf %541, %540 : vector<8x384xf32>
    %543 = tpu.reciprocal %542 {approx = true} : vector<8x384xf32> -> vector<8x384xf32>
    %544 = vector.extract_strided_slice %543 {offsets = [0, 0], sizes = [8, 128], strides = [1, 1]} : vector<8x384xf32> to vector<8x128xf32>
    %545 = vector.extract_strided_slice %543 {offsets = [0, 128], sizes = [8, 128], strides = [1, 1]} : vector<8x384xf32> to vector<8x128xf32>
    %546 = vector.extract_strided_slice %543 {offsets = [0, 256], sizes = [8, 128], strides = [1, 1]} : vector<8x384xf32> to vector<8x128xf32>
    %547 = vector.extract_strided_slice %536 {offsets = [0, 384], sizes = [8, 128], strides = [1, 1]} : vector<8x512xf32> to vector<8x128xf32>
    %548 = math.tanh %547 : vector<8x128xf32>
    %549 = arith.mulf %545, %499 : vector<8x128xf32>
    %550 = arith.mulf %544, %548 : vector<8x128xf32>
    %551 = arith.addf %549, %550 : vector<8x128xf32>
    %552 = math.tanh %551 : vector<8x128xf32>
    %553 = arith.mulf %546, %552 : vector<8x128xf32>
    %554 = arith.truncf %553 : vector<8x128xf32> to vector<8x128xbf16>
    %555 = arith.truncf %528 : vector<8x128xf32> to vector<8x128xbf16>
    %556 = tpu.concatenate %554, %555 in 1 : vector<8x128xbf16>, vector<8x128xbf16> -> vector<8x256xbf16>
    %c0_176 = arith.constant 0 : index
    %c0_177 = arith.constant 0 : index
    %c0_178 = arith.constant 0 : index
    %557 = vector.load %arg4[%c0_176, %c0_177, %c0_178] : memref<1x256x512xbf16, #tpu.memory_space<vmem>>, vector<1x256x512xbf16>
    %558 = vector.shape_cast %557 : vector<1x256x512xbf16> to vector<256x512xbf16>
    %cst_179 = arith.constant dense<0.000000e+00> : vector<8x512xf32>
    %559 = tpu.matmul %556, %558, %cst_179 {dimension_numbers = #tpu.dot_dimension_numbers<[1], [0], [0], [1], [0, 0, 1, 1], [], []>} : vector<8x256xbf16>, vector<256x512xbf16>, vector<8x512xf32> -> vector<8x512xf32>
    %c0_180 = arith.constant 0 : index
    %c0_181 = arith.constant 0 : index
    %c0_182 = arith.constant 0 : index
    %560 = vector.load %arg5[%c0_180, %c0_181, %c0_182] : memref<1x1x512xf32, #tpu.memory_space<vmem>>, vector<1x1x512xf32>
    %561 = vector.shape_cast %560 : vector<1x1x512xf32> to vector<1x512xf32>
    %562 = vector.broadcast %561 : vector<1x512xf32> to vector<8x512xf32>
    %563 = arith.addf %559, %562 : vector<8x512xf32>
    %564 = vector.extract_strided_slice %563 {offsets = [0, 0], sizes = [8, 384], strides = [1, 1]} : vector<8x512xf32> to vector<8x384xf32>
    %cst_183 = arith.constant 0.000000e+00 : f32
    %565 = vector.broadcast %cst_183 : f32 to vector<8x384xf32>
    %566 = arith.subf %565, %564 : vector<8x384xf32>
    %567 = math.exp %566 : vector<8x384xf32>
    %cst_184 = arith.constant 1.000000e+00 : f32
    %568 = vector.broadcast %cst_184 : f32 to vector<8x384xf32>
    %569 = arith.addf %568, %567 : vector<8x384xf32>
    %570 = tpu.reciprocal %569 {approx = true} : vector<8x384xf32> -> vector<8x384xf32>
    %571 = vector.extract_strided_slice %570 {offsets = [0, 0], sizes = [8, 128], strides = [1, 1]} : vector<8x384xf32> to vector<8x128xf32>
    %572 = vector.extract_strided_slice %570 {offsets = [0, 128], sizes = [8, 128], strides = [1, 1]} : vector<8x384xf32> to vector<8x128xf32>
    %573 = vector.extract_strided_slice %570 {offsets = [0, 256], sizes = [8, 128], strides = [1, 1]} : vector<8x384xf32> to vector<8x128xf32>
    %574 = vector.extract_strided_slice %563 {offsets = [0, 384], sizes = [8, 128], strides = [1, 1]} : vector<8x512xf32> to vector<8x128xf32>
    %575 = math.tanh %574 : vector<8x128xf32>
    %576 = arith.mulf %572, %526 : vector<8x128xf32>
    %577 = arith.mulf %571, %575 : vector<8x128xf32>
    %578 = arith.addf %576, %577 : vector<8x128xf32>
    %579 = math.tanh %578 : vector<8x128xf32>
    %580 = arith.mulf %573, %579 : vector<8x128xf32>
    %c11_i32 = arith.constant 11 : i32
    %c8_i32_185 = arith.constant 8 : i32
    %581 = arith.muli %c11_i32, %c8_i32_185 : i32
    %582 = tpu.assume_multiple %581, 8 : i32
    %583 = arith.index_cast %582 : i32 to index
    %c0_186 = arith.constant 0 : index
    %584 = vector.load %arg9[%583, %c0_186] : memref<128x512xf32, #tpu.memory_space<vmem>>, vector<8x512xf32>
    %585 = arith.truncf %553 : vector<8x128xf32> to vector<8x128xbf16>
    %c0_187 = arith.constant 0 : index
    %c0_188 = arith.constant 0 : index
    %586 = vector.load %arg2[%c0_187, %c0_188] : memref<128x512xbf16, #tpu.memory_space<vmem>>, vector<128x512xbf16>
    %cst_189 = arith.constant dense<0.000000e+00> : vector<8x512xf32>
    %587 = tpu.matmul %585, %586, %cst_189 {dimension_numbers = #tpu.dot_dimension_numbers<[1], [0], [0], [1], [0, 0, 1, 1], [], []>} : vector<8x128xbf16>, vector<128x512xbf16>, vector<8x512xf32> -> vector<8x512xf32>
    %588 = arith.addf %584, %587 : vector<8x512xf32>
    %589 = vector.extract_strided_slice %588 {offsets = [0, 0], sizes = [8, 384], strides = [1, 1]} : vector<8x512xf32> to vector<8x384xf32>
    %cst_190 = arith.constant 0.000000e+00 : f32
    %590 = vector.broadcast %cst_190 : f32 to vector<8x384xf32>
    %591 = arith.subf %590, %589 : vector<8x384xf32>
    %592 = math.exp %591 : vector<8x384xf32>
    %cst_191 = arith.constant 1.000000e+00 : f32
    %593 = vector.broadcast %cst_191 : f32 to vector<8x384xf32>
    %594 = arith.addf %593, %592 : vector<8x384xf32>
    %595 = tpu.reciprocal %594 {approx = true} : vector<8x384xf32> -> vector<8x384xf32>
    %596 = vector.extract_strided_slice %595 {offsets = [0, 0], sizes = [8, 128], strides = [1, 1]} : vector<8x384xf32> to vector<8x128xf32>
    %597 = vector.extract_strided_slice %595 {offsets = [0, 128], sizes = [8, 128], strides = [1, 1]} : vector<8x384xf32> to vector<8x128xf32>
    %598 = vector.extract_strided_slice %595 {offsets = [0, 256], sizes = [8, 128], strides = [1, 1]} : vector<8x384xf32> to vector<8x128xf32>
    %599 = vector.extract_strided_slice %588 {offsets = [0, 384], sizes = [8, 128], strides = [1, 1]} : vector<8x512xf32> to vector<8x128xf32>
    %600 = math.tanh %599 : vector<8x128xf32>
    %601 = arith.mulf %597, %551 : vector<8x128xf32>
    %602 = arith.mulf %596, %600 : vector<8x128xf32>
    %603 = arith.addf %601, %602 : vector<8x128xf32>
    %604 = math.tanh %603 : vector<8x128xf32>
    %605 = arith.mulf %598, %604 : vector<8x128xf32>
    %606 = arith.truncf %605 : vector<8x128xf32> to vector<8x128xbf16>
    %607 = arith.truncf %580 : vector<8x128xf32> to vector<8x128xbf16>
    %608 = tpu.concatenate %606, %607 in 1 : vector<8x128xbf16>, vector<8x128xbf16> -> vector<8x256xbf16>
    %c0_192 = arith.constant 0 : index
    %c0_193 = arith.constant 0 : index
    %c0_194 = arith.constant 0 : index
    %609 = vector.load %arg4[%c0_192, %c0_193, %c0_194] : memref<1x256x512xbf16, #tpu.memory_space<vmem>>, vector<1x256x512xbf16>
    %610 = vector.shape_cast %609 : vector<1x256x512xbf16> to vector<256x512xbf16>
    %cst_195 = arith.constant dense<0.000000e+00> : vector<8x512xf32>
    %611 = tpu.matmul %608, %610, %cst_195 {dimension_numbers = #tpu.dot_dimension_numbers<[1], [0], [0], [1], [0, 0, 1, 1], [], []>} : vector<8x256xbf16>, vector<256x512xbf16>, vector<8x512xf32> -> vector<8x512xf32>
    %c0_196 = arith.constant 0 : index
    %c0_197 = arith.constant 0 : index
    %c0_198 = arith.constant 0 : index
    %612 = vector.load %arg5[%c0_196, %c0_197, %c0_198] : memref<1x1x512xf32, #tpu.memory_space<vmem>>, vector<1x1x512xf32>
    %613 = vector.shape_cast %612 : vector<1x1x512xf32> to vector<1x512xf32>
    %614 = vector.broadcast %613 : vector<1x512xf32> to vector<8x512xf32>
    %615 = arith.addf %611, %614 : vector<8x512xf32>
    %616 = vector.extract_strided_slice %615 {offsets = [0, 0], sizes = [8, 384], strides = [1, 1]} : vector<8x512xf32> to vector<8x384xf32>
    %cst_199 = arith.constant 0.000000e+00 : f32
    %617 = vector.broadcast %cst_199 : f32 to vector<8x384xf32>
    %618 = arith.subf %617, %616 : vector<8x384xf32>
    %619 = math.exp %618 : vector<8x384xf32>
    %cst_200 = arith.constant 1.000000e+00 : f32
    %620 = vector.broadcast %cst_200 : f32 to vector<8x384xf32>
    %621 = arith.addf %620, %619 : vector<8x384xf32>
    %622 = tpu.reciprocal %621 {approx = true} : vector<8x384xf32> -> vector<8x384xf32>
    %623 = vector.extract_strided_slice %622 {offsets = [0, 0], sizes = [8, 128], strides = [1, 1]} : vector<8x384xf32> to vector<8x128xf32>
    %624 = vector.extract_strided_slice %622 {offsets = [0, 128], sizes = [8, 128], strides = [1, 1]} : vector<8x384xf32> to vector<8x128xf32>
    %625 = vector.extract_strided_slice %622 {offsets = [0, 256], sizes = [8, 128], strides = [1, 1]} : vector<8x384xf32> to vector<8x128xf32>
    %626 = vector.extract_strided_slice %615 {offsets = [0, 384], sizes = [8, 128], strides = [1, 1]} : vector<8x512xf32> to vector<8x128xf32>
    %627 = math.tanh %626 : vector<8x128xf32>
    %628 = arith.mulf %624, %578 : vector<8x128xf32>
    %629 = arith.mulf %623, %627 : vector<8x128xf32>
    %630 = arith.addf %628, %629 : vector<8x128xf32>
    %631 = math.tanh %630 : vector<8x128xf32>
    %632 = arith.mulf %625, %631 : vector<8x128xf32>
    %c12_i32 = arith.constant 12 : i32
    %c8_i32_201 = arith.constant 8 : i32
    %633 = arith.muli %c12_i32, %c8_i32_201 : i32
    %634 = tpu.assume_multiple %633, 8 : i32
    %635 = arith.index_cast %634 : i32 to index
    %c0_202 = arith.constant 0 : index
    %636 = vector.load %arg9[%635, %c0_202] : memref<128x512xf32, #tpu.memory_space<vmem>>, vector<8x512xf32>
    %637 = arith.truncf %605 : vector<8x128xf32> to vector<8x128xbf16>
    %c0_203 = arith.constant 0 : index
    %c0_204 = arith.constant 0 : index
    %638 = vector.load %arg2[%c0_203, %c0_204] : memref<128x512xbf16, #tpu.memory_space<vmem>>, vector<128x512xbf16>
    %cst_205 = arith.constant dense<0.000000e+00> : vector<8x512xf32>
    %639 = tpu.matmul %637, %638, %cst_205 {dimension_numbers = #tpu.dot_dimension_numbers<[1], [0], [0], [1], [0, 0, 1, 1], [], []>} : vector<8x128xbf16>, vector<128x512xbf16>, vector<8x512xf32> -> vector<8x512xf32>
    %640 = arith.addf %636, %639 : vector<8x512xf32>
    %641 = vector.extract_strided_slice %640 {offsets = [0, 0], sizes = [8, 384], strides = [1, 1]} : vector<8x512xf32> to vector<8x384xf32>
    %cst_206 = arith.constant 0.000000e+00 : f32
    %642 = vector.broadcast %cst_206 : f32 to vector<8x384xf32>
    %643 = arith.subf %642, %641 : vector<8x384xf32>
    %644 = math.exp %643 : vector<8x384xf32>
    %cst_207 = arith.constant 1.000000e+00 : f32
    %645 = vector.broadcast %cst_207 : f32 to vector<8x384xf32>
    %646 = arith.addf %645, %644 : vector<8x384xf32>
    %647 = tpu.reciprocal %646 {approx = true} : vector<8x384xf32> -> vector<8x384xf32>
    %648 = vector.extract_strided_slice %647 {offsets = [0, 0], sizes = [8, 128], strides = [1, 1]} : vector<8x384xf32> to vector<8x128xf32>
    %649 = vector.extract_strided_slice %647 {offsets = [0, 128], sizes = [8, 128], strides = [1, 1]} : vector<8x384xf32> to vector<8x128xf32>
    %650 = vector.extract_strided_slice %647 {offsets = [0, 256], sizes = [8, 128], strides = [1, 1]} : vector<8x384xf32> to vector<8x128xf32>
    %651 = vector.extract_strided_slice %640 {offsets = [0, 384], sizes = [8, 128], strides = [1, 1]} : vector<8x512xf32> to vector<8x128xf32>
    %652 = math.tanh %651 : vector<8x128xf32>
    %653 = arith.mulf %649, %603 : vector<8x128xf32>
    %654 = arith.mulf %648, %652 : vector<8x128xf32>
    %655 = arith.addf %653, %654 : vector<8x128xf32>
    %656 = math.tanh %655 : vector<8x128xf32>
    %657 = arith.mulf %650, %656 : vector<8x128xf32>
    %658 = arith.truncf %657 : vector<8x128xf32> to vector<8x128xbf16>
    %659 = arith.truncf %632 : vector<8x128xf32> to vector<8x128xbf16>
    %660 = tpu.concatenate %658, %659 in 1 : vector<8x128xbf16>, vector<8x128xbf16> -> vector<8x256xbf16>
    %c0_208 = arith.constant 0 : index
    %c0_209 = arith.constant 0 : index
    %c0_210 = arith.constant 0 : index
    %661 = vector.load %arg4[%c0_208, %c0_209, %c0_210] : memref<1x256x512xbf16, #tpu.memory_space<vmem>>, vector<1x256x512xbf16>
    %662 = vector.shape_cast %661 : vector<1x256x512xbf16> to vector<256x512xbf16>
    %cst_211 = arith.constant dense<0.000000e+00> : vector<8x512xf32>
    %663 = tpu.matmul %660, %662, %cst_211 {dimension_numbers = #tpu.dot_dimension_numbers<[1], [0], [0], [1], [0, 0, 1, 1], [], []>} : vector<8x256xbf16>, vector<256x512xbf16>, vector<8x512xf32> -> vector<8x512xf32>
    %c0_212 = arith.constant 0 : index
    %c0_213 = arith.constant 0 : index
    %c0_214 = arith.constant 0 : index
    %664 = vector.load %arg5[%c0_212, %c0_213, %c0_214] : memref<1x1x512xf32, #tpu.memory_space<vmem>>, vector<1x1x512xf32>
    %665 = vector.shape_cast %664 : vector<1x1x512xf32> to vector<1x512xf32>
    %666 = vector.broadcast %665 : vector<1x512xf32> to vector<8x512xf32>
    %667 = arith.addf %663, %666 : vector<8x512xf32>
    %668 = vector.extract_strided_slice %667 {offsets = [0, 0], sizes = [8, 384], strides = [1, 1]} : vector<8x512xf32> to vector<8x384xf32>
    %cst_215 = arith.constant 0.000000e+00 : f32
    %669 = vector.broadcast %cst_215 : f32 to vector<8x384xf32>
    %670 = arith.subf %669, %668 : vector<8x384xf32>
    %671 = math.exp %670 : vector<8x384xf32>
    %cst_216 = arith.constant 1.000000e+00 : f32
    %672 = vector.broadcast %cst_216 : f32 to vector<8x384xf32>
    %673 = arith.addf %672, %671 : vector<8x384xf32>
    %674 = tpu.reciprocal %673 {approx = true} : vector<8x384xf32> -> vector<8x384xf32>
    %675 = vector.extract_strided_slice %674 {offsets = [0, 0], sizes = [8, 128], strides = [1, 1]} : vector<8x384xf32> to vector<8x128xf32>
    %676 = vector.extract_strided_slice %674 {offsets = [0, 128], sizes = [8, 128], strides = [1, 1]} : vector<8x384xf32> to vector<8x128xf32>
    %677 = vector.extract_strided_slice %674 {offsets = [0, 256], sizes = [8, 128], strides = [1, 1]} : vector<8x384xf32> to vector<8x128xf32>
    %678 = vector.extract_strided_slice %667 {offsets = [0, 384], sizes = [8, 128], strides = [1, 1]} : vector<8x512xf32> to vector<8x128xf32>
    %679 = math.tanh %678 : vector<8x128xf32>
    %680 = arith.mulf %676, %630 : vector<8x128xf32>
    %681 = arith.mulf %675, %679 : vector<8x128xf32>
    %682 = arith.addf %680, %681 : vector<8x128xf32>
    %683 = math.tanh %682 : vector<8x128xf32>
    %684 = arith.mulf %677, %683 : vector<8x128xf32>
    %c13_i32 = arith.constant 13 : i32
    %c8_i32_217 = arith.constant 8 : i32
    %685 = arith.muli %c13_i32, %c8_i32_217 : i32
    %686 = tpu.assume_multiple %685, 8 : i32
    %687 = arith.index_cast %686 : i32 to index
    %c0_218 = arith.constant 0 : index
    %688 = vector.load %arg9[%687, %c0_218] : memref<128x512xf32, #tpu.memory_space<vmem>>, vector<8x512xf32>
    %689 = arith.truncf %657 : vector<8x128xf32> to vector<8x128xbf16>
    %c0_219 = arith.constant 0 : index
    %c0_220 = arith.constant 0 : index
    %690 = vector.load %arg2[%c0_219, %c0_220] : memref<128x512xbf16, #tpu.memory_space<vmem>>, vector<128x512xbf16>
    %cst_221 = arith.constant dense<0.000000e+00> : vector<8x512xf32>
    %691 = tpu.matmul %689, %690, %cst_221 {dimension_numbers = #tpu.dot_dimension_numbers<[1], [0], [0], [1], [0, 0, 1, 1], [], []>} : vector<8x128xbf16>, vector<128x512xbf16>, vector<8x512xf32> -> vector<8x512xf32>
    %692 = arith.addf %688, %691 : vector<8x512xf32>
    %693 = vector.extract_strided_slice %692 {offsets = [0, 0], sizes = [8, 384], strides = [1, 1]} : vector<8x512xf32> to vector<8x384xf32>
    %cst_222 = arith.constant 0.000000e+00 : f32
    %694 = vector.broadcast %cst_222 : f32 to vector<8x384xf32>
    %695 = arith.subf %694, %693 : vector<8x384xf32>
    %696 = math.exp %695 : vector<8x384xf32>
    %cst_223 = arith.constant 1.000000e+00 : f32
    %697 = vector.broadcast %cst_223 : f32 to vector<8x384xf32>
    %698 = arith.addf %697, %696 : vector<8x384xf32>
    %699 = tpu.reciprocal %698 {approx = true} : vector<8x384xf32> -> vector<8x384xf32>
    %700 = vector.extract_strided_slice %699 {offsets = [0, 0], sizes = [8, 128], strides = [1, 1]} : vector<8x384xf32> to vector<8x128xf32>
    %701 = vector.extract_strided_slice %699 {offsets = [0, 128], sizes = [8, 128], strides = [1, 1]} : vector<8x384xf32> to vector<8x128xf32>
    %702 = vector.extract_strided_slice %699 {offsets = [0, 256], sizes = [8, 128], strides = [1, 1]} : vector<8x384xf32> to vector<8x128xf32>
    %703 = vector.extract_strided_slice %692 {offsets = [0, 384], sizes = [8, 128], strides = [1, 1]} : vector<8x512xf32> to vector<8x128xf32>
    %704 = math.tanh %703 : vector<8x128xf32>
    %705 = arith.mulf %701, %655 : vector<8x128xf32>
    %706 = arith.mulf %700, %704 : vector<8x128xf32>
    %707 = arith.addf %705, %706 : vector<8x128xf32>
    %708 = math.tanh %707 : vector<8x128xf32>
    %709 = arith.mulf %702, %708 : vector<8x128xf32>
    %710 = arith.truncf %709 : vector<8x128xf32> to vector<8x128xbf16>
    %711 = arith.truncf %684 : vector<8x128xf32> to vector<8x128xbf16>
    %712 = tpu.concatenate %710, %711 in 1 : vector<8x128xbf16>, vector<8x128xbf16> -> vector<8x256xbf16>
    %c0_224 = arith.constant 0 : index
    %c0_225 = arith.constant 0 : index
    %c0_226 = arith.constant 0 : index
    %713 = vector.load %arg4[%c0_224, %c0_225, %c0_226] : memref<1x256x512xbf16, #tpu.memory_space<vmem>>, vector<1x256x512xbf16>
    %714 = vector.shape_cast %713 : vector<1x256x512xbf16> to vector<256x512xbf16>
    %cst_227 = arith.constant dense<0.000000e+00> : vector<8x512xf32>
    %715 = tpu.matmul %712, %714, %cst_227 {dimension_numbers = #tpu.dot_dimension_numbers<[1], [0], [0], [1], [0, 0, 1, 1], [], []>} : vector<8x256xbf16>, vector<256x512xbf16>, vector<8x512xf32> -> vector<8x512xf32>
    %c0_228 = arith.constant 0 : index
    %c0_229 = arith.constant 0 : index
    %c0_230 = arith.constant 0 : index
    %716 = vector.load %arg5[%c0_228, %c0_229, %c0_230] : memref<1x1x512xf32, #tpu.memory_space<vmem>>, vector<1x1x512xf32>
    %717 = vector.shape_cast %716 : vector<1x1x512xf32> to vector<1x512xf32>
    %718 = vector.broadcast %717 : vector<1x512xf32> to vector<8x512xf32>
    %719 = arith.addf %715, %718 : vector<8x512xf32>
    %720 = vector.extract_strided_slice %719 {offsets = [0, 0], sizes = [8, 384], strides = [1, 1]} : vector<8x512xf32> to vector<8x384xf32>
    %cst_231 = arith.constant 0.000000e+00 : f32
    %721 = vector.broadcast %cst_231 : f32 to vector<8x384xf32>
    %722 = arith.subf %721, %720 : vector<8x384xf32>
    %723 = math.exp %722 : vector<8x384xf32>
    %cst_232 = arith.constant 1.000000e+00 : f32
    %724 = vector.broadcast %cst_232 : f32 to vector<8x384xf32>
    %725 = arith.addf %724, %723 : vector<8x384xf32>
    %726 = tpu.reciprocal %725 {approx = true} : vector<8x384xf32> -> vector<8x384xf32>
    %727 = vector.extract_strided_slice %726 {offsets = [0, 0], sizes = [8, 128], strides = [1, 1]} : vector<8x384xf32> to vector<8x128xf32>
    %728 = vector.extract_strided_slice %726 {offsets = [0, 128], sizes = [8, 128], strides = [1, 1]} : vector<8x384xf32> to vector<8x128xf32>
    %729 = vector.extract_strided_slice %726 {offsets = [0, 256], sizes = [8, 128], strides = [1, 1]} : vector<8x384xf32> to vector<8x128xf32>
    %730 = vector.extract_strided_slice %719 {offsets = [0, 384], sizes = [8, 128], strides = [1, 1]} : vector<8x512xf32> to vector<8x128xf32>
    %731 = math.tanh %730 : vector<8x128xf32>
    %732 = arith.mulf %728, %682 : vector<8x128xf32>
    %733 = arith.mulf %727, %731 : vector<8x128xf32>
    %734 = arith.addf %732, %733 : vector<8x128xf32>
    %735 = math.tanh %734 : vector<8x128xf32>
    %736 = arith.mulf %729, %735 : vector<8x128xf32>
    %c14_i32 = arith.constant 14 : i32
    %c8_i32_233 = arith.constant 8 : i32
    %737 = arith.muli %c14_i32, %c8_i32_233 : i32
    %738 = tpu.assume_multiple %737, 8 : i32
    %739 = arith.index_cast %738 : i32 to index
    %c0_234 = arith.constant 0 : index
    %740 = vector.load %arg9[%739, %c0_234] : memref<128x512xf32, #tpu.memory_space<vmem>>, vector<8x512xf32>
    %741 = arith.truncf %709 : vector<8x128xf32> to vector<8x128xbf16>
    %c0_235 = arith.constant 0 : index
    %c0_236 = arith.constant 0 : index
    %742 = vector.load %arg2[%c0_235, %c0_236] : memref<128x512xbf16, #tpu.memory_space<vmem>>, vector<128x512xbf16>
    %cst_237 = arith.constant dense<0.000000e+00> : vector<8x512xf32>
    %743 = tpu.matmul %741, %742, %cst_237 {dimension_numbers = #tpu.dot_dimension_numbers<[1], [0], [0], [1], [0, 0, 1, 1], [], []>} : vector<8x128xbf16>, vector<128x512xbf16>, vector<8x512xf32> -> vector<8x512xf32>
    %744 = arith.addf %740, %743 : vector<8x512xf32>
    %745 = vector.extract_strided_slice %744 {offsets = [0, 0], sizes = [8, 384], strides = [1, 1]} : vector<8x512xf32> to vector<8x384xf32>
    %cst_238 = arith.constant 0.000000e+00 : f32
    %746 = vector.broadcast %cst_238 : f32 to vector<8x384xf32>
    %747 = arith.subf %746, %745 : vector<8x384xf32>
    %748 = math.exp %747 : vector<8x384xf32>
    %cst_239 = arith.constant 1.000000e+00 : f32
    %749 = vector.broadcast %cst_239 : f32 to vector<8x384xf32>
    %750 = arith.addf %749, %748 : vector<8x384xf32>
    %751 = tpu.reciprocal %750 {approx = true} : vector<8x384xf32> -> vector<8x384xf32>
    %752 = vector.extract_strided_slice %751 {offsets = [0, 0], sizes = [8, 128], strides = [1, 1]} : vector<8x384xf32> to vector<8x128xf32>
    %753 = vector.extract_strided_slice %751 {offsets = [0, 128], sizes = [8, 128], strides = [1, 1]} : vector<8x384xf32> to vector<8x128xf32>
    %754 = vector.extract_strided_slice %751 {offsets = [0, 256], sizes = [8, 128], strides = [1, 1]} : vector<8x384xf32> to vector<8x128xf32>
    %755 = vector.extract_strided_slice %744 {offsets = [0, 384], sizes = [8, 128], strides = [1, 1]} : vector<8x512xf32> to vector<8x128xf32>
    %756 = math.tanh %755 : vector<8x128xf32>
    %757 = arith.mulf %753, %707 : vector<8x128xf32>
    %758 = arith.mulf %752, %756 : vector<8x128xf32>
    %759 = arith.addf %757, %758 : vector<8x128xf32>
    %760 = math.tanh %759 : vector<8x128xf32>
    %761 = arith.mulf %754, %760 : vector<8x128xf32>
    %762 = arith.truncf %761 : vector<8x128xf32> to vector<8x128xbf16>
    %763 = arith.truncf %736 : vector<8x128xf32> to vector<8x128xbf16>
    %764 = tpu.concatenate %762, %763 in 1 : vector<8x128xbf16>, vector<8x128xbf16> -> vector<8x256xbf16>
    %c0_240 = arith.constant 0 : index
    %c0_241 = arith.constant 0 : index
    %c0_242 = arith.constant 0 : index
    %765 = vector.load %arg4[%c0_240, %c0_241, %c0_242] : memref<1x256x512xbf16, #tpu.memory_space<vmem>>, vector<1x256x512xbf16>
    %766 = vector.shape_cast %765 : vector<1x256x512xbf16> to vector<256x512xbf16>
    %cst_243 = arith.constant dense<0.000000e+00> : vector<8x512xf32>
    %767 = tpu.matmul %764, %766, %cst_243 {dimension_numbers = #tpu.dot_dimension_numbers<[1], [0], [0], [1], [0, 0, 1, 1], [], []>} : vector<8x256xbf16>, vector<256x512xbf16>, vector<8x512xf32> -> vector<8x512xf32>
    %c0_244 = arith.constant 0 : index
    %c0_245 = arith.constant 0 : index
    %c0_246 = arith.constant 0 : index
    %768 = vector.load %arg5[%c0_244, %c0_245, %c0_246] : memref<1x1x512xf32, #tpu.memory_space<vmem>>, vector<1x1x512xf32>
    %769 = vector.shape_cast %768 : vector<1x1x512xf32> to vector<1x512xf32>
    %770 = vector.broadcast %769 : vector<1x512xf32> to vector<8x512xf32>
    %771 = arith.addf %767, %770 : vector<8x512xf32>
    %772 = vector.extract_strided_slice %771 {offsets = [0, 0], sizes = [8, 384], strides = [1, 1]} : vector<8x512xf32> to vector<8x384xf32>
    %cst_247 = arith.constant 0.000000e+00 : f32
    %773 = vector.broadcast %cst_247 : f32 to vector<8x384xf32>
    %774 = arith.subf %773, %772 : vector<8x384xf32>
    %775 = math.exp %774 : vector<8x384xf32>
    %cst_248 = arith.constant 1.000000e+00 : f32
    %776 = vector.broadcast %cst_248 : f32 to vector<8x384xf32>
    %777 = arith.addf %776, %775 : vector<8x384xf32>
    %778 = tpu.reciprocal %777 {approx = true} : vector<8x384xf32> -> vector<8x384xf32>
    %779 = vector.extract_strided_slice %778 {offsets = [0, 0], sizes = [8, 128], strides = [1, 1]} : vector<8x384xf32> to vector<8x128xf32>
    %780 = vector.extract_strided_slice %778 {offsets = [0, 128], sizes = [8, 128], strides = [1, 1]} : vector<8x384xf32> to vector<8x128xf32>
    %781 = vector.extract_strided_slice %778 {offsets = [0, 256], sizes = [8, 128], strides = [1, 1]} : vector<8x384xf32> to vector<8x128xf32>
    %782 = vector.extract_strided_slice %771 {offsets = [0, 384], sizes = [8, 128], strides = [1, 1]} : vector<8x512xf32> to vector<8x128xf32>
    %783 = math.tanh %782 : vector<8x128xf32>
    %784 = arith.mulf %780, %734 : vector<8x128xf32>
    %785 = arith.mulf %779, %783 : vector<8x128xf32>
    %786 = arith.addf %784, %785 : vector<8x128xf32>
    %787 = math.tanh %786 : vector<8x128xf32>
    %788 = arith.mulf %781, %787 : vector<8x128xf32>
    %c15_i32 = arith.constant 15 : i32
    %c8_i32_249 = arith.constant 8 : i32
    %789 = arith.muli %c15_i32, %c8_i32_249 : i32
    %790 = tpu.assume_multiple %789, 8 : i32
    %791 = arith.index_cast %790 : i32 to index
    %c0_250 = arith.constant 0 : index
    %792 = vector.load %arg9[%791, %c0_250] : memref<128x512xf32, #tpu.memory_space<vmem>>, vector<8x512xf32>
    %793 = arith.truncf %761 : vector<8x128xf32> to vector<8x128xbf16>
    %c0_251 = arith.constant 0 : index
    %c0_252 = arith.constant 0 : index
    %794 = vector.load %arg2[%c0_251, %c0_252] : memref<128x512xbf16, #tpu.memory_space<vmem>>, vector<128x512xbf16>
    %cst_253 = arith.constant dense<0.000000e+00> : vector<8x512xf32>
    %795 = tpu.matmul %793, %794, %cst_253 {dimension_numbers = #tpu.dot_dimension_numbers<[1], [0], [0], [1], [0, 0, 1, 1], [], []>} : vector<8x128xbf16>, vector<128x512xbf16>, vector<8x512xf32> -> vector<8x512xf32>
    %796 = arith.addf %792, %795 : vector<8x512xf32>
    %797 = vector.extract_strided_slice %796 {offsets = [0, 0], sizes = [8, 384], strides = [1, 1]} : vector<8x512xf32> to vector<8x384xf32>
    %cst_254 = arith.constant 0.000000e+00 : f32
    %798 = vector.broadcast %cst_254 : f32 to vector<8x384xf32>
    %799 = arith.subf %798, %797 : vector<8x384xf32>
    %800 = math.exp %799 : vector<8x384xf32>
    %cst_255 = arith.constant 1.000000e+00 : f32
    %801 = vector.broadcast %cst_255 : f32 to vector<8x384xf32>
    %802 = arith.addf %801, %800 : vector<8x384xf32>
    %803 = tpu.reciprocal %802 {approx = true} : vector<8x384xf32> -> vector<8x384xf32>
    %804 = vector.extract_strided_slice %803 {offsets = [0, 0], sizes = [8, 128], strides = [1, 1]} : vector<8x384xf32> to vector<8x128xf32>
    %805 = vector.extract_strided_slice %803 {offsets = [0, 128], sizes = [8, 128], strides = [1, 1]} : vector<8x384xf32> to vector<8x128xf32>
    %806 = vector.extract_strided_slice %803 {offsets = [0, 256], sizes = [8, 128], strides = [1, 1]} : vector<8x384xf32> to vector<8x128xf32>
    %807 = vector.extract_strided_slice %796 {offsets = [0, 384], sizes = [8, 128], strides = [1, 1]} : vector<8x512xf32> to vector<8x128xf32>
    %808 = math.tanh %807 : vector<8x128xf32>
    %809 = arith.mulf %805, %759 : vector<8x128xf32>
    %810 = arith.mulf %804, %808 : vector<8x128xf32>
    %811 = arith.addf %809, %810 : vector<8x128xf32>
    %812 = math.tanh %811 : vector<8x128xf32>
    %813 = arith.mulf %806, %812 : vector<8x128xf32>
    %814 = arith.truncf %813 : vector<8x128xf32> to vector<8x128xbf16>
    %815 = arith.truncf %788 : vector<8x128xf32> to vector<8x128xbf16>
    %816 = tpu.concatenate %814, %815 in 1 : vector<8x128xbf16>, vector<8x128xbf16> -> vector<8x256xbf16>
    %c0_256 = arith.constant 0 : index
    %c0_257 = arith.constant 0 : index
    %c0_258 = arith.constant 0 : index
    %817 = vector.load %arg4[%c0_256, %c0_257, %c0_258] : memref<1x256x512xbf16, #tpu.memory_space<vmem>>, vector<1x256x512xbf16>
    %818 = vector.shape_cast %817 : vector<1x256x512xbf16> to vector<256x512xbf16>
    %cst_259 = arith.constant dense<0.000000e+00> : vector<8x512xf32>
    %819 = tpu.matmul %816, %818, %cst_259 {dimension_numbers = #tpu.dot_dimension_numbers<[1], [0], [0], [1], [0, 0, 1, 1], [], []>} : vector<8x256xbf16>, vector<256x512xbf16>, vector<8x512xf32> -> vector<8x512xf32>
    %c0_260 = arith.constant 0 : index
    %c0_261 = arith.constant 0 : index
    %c0_262 = arith.constant 0 : index
    %820 = vector.load %arg5[%c0_260, %c0_261, %c0_262] : memref<1x1x512xf32, #tpu.memory_space<vmem>>, vector<1x1x512xf32>
    %821 = vector.shape_cast %820 : vector<1x1x512xf32> to vector<1x512xf32>
    %822 = vector.broadcast %821 : vector<1x512xf32> to vector<8x512xf32>
    %823 = arith.addf %819, %822 : vector<8x512xf32>
    %824 = vector.extract_strided_slice %823 {offsets = [0, 0], sizes = [8, 384], strides = [1, 1]} : vector<8x512xf32> to vector<8x384xf32>
    %cst_263 = arith.constant 0.000000e+00 : f32
    %825 = vector.broadcast %cst_263 : f32 to vector<8x384xf32>
    %826 = arith.subf %825, %824 : vector<8x384xf32>
    %827 = math.exp %826 : vector<8x384xf32>
    %cst_264 = arith.constant 1.000000e+00 : f32
    %828 = vector.broadcast %cst_264 : f32 to vector<8x384xf32>
    %829 = arith.addf %828, %827 : vector<8x384xf32>
    %830 = tpu.reciprocal %829 {approx = true} : vector<8x384xf32> -> vector<8x384xf32>
    %831 = vector.extract_strided_slice %830 {offsets = [0, 0], sizes = [8, 128], strides = [1, 1]} : vector<8x384xf32> to vector<8x128xf32>
    %832 = vector.extract_strided_slice %830 {offsets = [0, 128], sizes = [8, 128], strides = [1, 1]} : vector<8x384xf32> to vector<8x128xf32>
    %833 = vector.extract_strided_slice %830 {offsets = [0, 256], sizes = [8, 128], strides = [1, 1]} : vector<8x384xf32> to vector<8x128xf32>
    %834 = vector.extract_strided_slice %823 {offsets = [0, 384], sizes = [8, 128], strides = [1, 1]} : vector<8x512xf32> to vector<8x128xf32>
    %835 = math.tanh %834 : vector<8x128xf32>
    %836 = arith.mulf %832, %786 : vector<8x128xf32>
    %837 = arith.mulf %831, %835 : vector<8x128xf32>
    %838 = arith.addf %836, %837 : vector<8x128xf32>
    %839 = math.tanh %838 : vector<8x128xf32>
    %840 = arith.mulf %833, %839 : vector<8x128xf32>
    %c16_i32 = arith.constant 16 : i32
    %c0_265 = arith.constant 0 : index
    %c0_266 = arith.constant 0 : index
    %841 = vector.load %arg6[%c0_265, %c0_266] : memref<128x128xf32, #tpu.memory_space<vmem>>, vector<128x128xf32>
    %cst_267 = arith.constant dense<0.000000e+00> : vector<8x128xf32>
    %842 = tpu.matmul %840, %841, %cst_267 {dimension_numbers = #tpu.dot_dimension_numbers<[1], [0], [0], [1], [0, 0, 1, 1], [], []>} : vector<8x128xf32>, vector<128x128xf32>, vector<8x128xf32> -> vector<8x128xf32>
    %c0_268 = arith.constant 0 : index
    %c0_269 = arith.constant 0 : index
    %843 = vector.load %arg7[%c0_268, %c0_269] : memref<1x128xf32, #tpu.memory_space<vmem>>, vector<1x128xf32>
    %844 = vector.broadcast %843 : vector<1x128xf32> to vector<8x128xf32>
    %845 = arith.addf %842, %844 : vector<8x128xf32>
    %c0_270 = arith.constant 0 : index
    %c0_271 = arith.constant 0 : index
    %846 = vector.load %arg8[%c0_270, %c0_271] : memref<8x128xf32, #tpu.memory_space<vmem>>, vector<8x128xf32>
    tpu.vector_store %arg8[%c0_270, %c0_271], %845 {strides = array<i32>} : memref<8x128xf32, #tpu.memory_space<vmem>>, vector<8x128xf32>,
    return
  }
}

</mosaic_0001>

<llo_original>
// kernel: tpu_custom_call.1
$region0: #{tpu_custom_call.1}
  #allocation0 [shape = 'u32[]', space=smem, size = 0x4, offset = 0x4, fixed_abs, tag = 'smem constant byte address 0x4 - core index']
  #allocation1 [shape = 'u32[72,128]{1,0:T(1,128)}', space=vmem, size = 0x9000, scoped, tag = 'internal scratch']
  #allocation2 [shape = 'f32[128,512]{1,0:T(8,128)}', space=vmem, size = 0x40000, scoped, tag = 'scratch operand']
  %s0 = inlined_call_operand.hbm [shape: bf16[128,128], index: 0, kind: input, shape index: {}]
  %s1 = inlined_call_operand.hbm [shape: bf16[128,512], index: 1, kind: input, shape index: {}]
  %s2 = inlined_call_operand.hbm [shape: bf16[128,512], index: 2, kind: input, shape index: {}]
  %s3 = inlined_call_operand.hbm [shape: f32[1,512], index: 3, kind: input, shape index: {}]
  %s4 = inlined_call_operand.hbm [shape: bf16[1,256,512], index: 4, kind: input, shape index: {}]
  %s5 = inlined_call_operand.vmem [shape: f32[1,1,512], index: 5, kind: input, shape index: {}]
  %s6 = inlined_call_operand.hbm [shape: f32[128,128], index: 6, kind: input, shape index: {}]
  %s7 = inlined_call_operand.vmem [shape: f32[1,128], index: 7, kind: input, shape index: {}]
  %s8 = inlined_call_operand.hbm [shape: f32[8,128], index: 8, kind: output, shape index: {}]
  %s9 = sld [smem:[#allocation0]]
  $region66: #{tpu_custom_call.1} parent=0
    _
  %s11 = ssub.s32 1, %s9
  %s12 = scalar_select 0, %s11, %s9
  $region1: #{tpu_custom_call.1} parent=0
    #allocation3 [shape = 'u8[32768]{0}', space=vmem, size = 0x8000, scoped, tag = 'input window, operand 0, single buffered']
    #allocation4 [shape = 's32[1]{0}', space=sflag, size = 0x4, scoped, tag = 'scoped memory for tpu_custom_call.1']
    #allocation5 [shape = 's32[1]{0}', space=sflag, size = 0x4, scoped, tag = 'scoped memory for tpu_custom_call.1']
    #allocation6 [shape = 'u8[131072]{0}', space=vmem, size = 0x20000, scoped, tag = 'input window, operand 1, single buffered']
    #allocation7 [shape = 's32[1]{0}', space=sflag, size = 0x4, scoped, tag = 'scoped memory for tpu_custom_call.1']
    #allocation8 [shape = 'u8[131072]{0}', space=vmem, size = 0x20000, scoped, tag = 'input window, operand 2, single buffered']
    #allocation9 [shape = 'u8[2048]{0}', space=vmem, size = 0x800, scoped, tag = 'input window, operand 3, single buffered']
    #allocation10 [shape = 's32[1]{0}', space=sflag, size = 0x4, scoped, tag = 'scoped memory for tpu_custom_call.1']
    #allocation11 [shape = 'u8[262144]{0}', space=vmem, size = 0x40000, scoped, tag = 'input window, operand 4, single buffered']
    #allocation12 [shape = 'u8[65536]{0}', space=vmem, size = 0x10000, scoped, tag = 'input window, operand 6, single buffered']
    #allocation13 [shape = 's32[1]{0}', space=sflag, size = 0x4, scoped, tag = 'scoped memory for tpu_custom_call.1']
    #allocation14 [shape = 'u8[4096]{0}', space=vmem, size = 0x1000, scoped, tag = 'output window, operand 0, single buffered']
    %13 = vsyncpa [#allocation4], 0
    %14 = vsyncpa [#allocation7], 0
    %15 = vsyncpa [#allocation10], 0
    %16 = vsyncpa [#allocation13], 0
    %17 = vsyncpa [#allocation5], 0
    // Predicated region
    $region2: #{tpu_custom_call.1} parent=1 // pred_check
      _
    $region3: #{tpu_custom_call.1} parent=1 // pred_check_branch
      %19 = sbr.rel (0) target = $region5
    $region4: #{tpu_custom_call.1} parent=1 // pred_region
      %21 = vsyncadd [#allocation4], 0
      %s22 = sshll.u32 %s0, 4
      %s23 = int_to_ptr.hbm [resolvable:$true] %s22
      %s24 = sshll.u32 [#allocation3], 4
      %s25 = int_to_ptr.vmem [resolvable:$true] %s24
      %30 = dma.hbm_to_vmem [thread:$0]  %s23, 1024, %s25, [#allocation4], 64, 64, 4
    $region5: #{tpu_custom_call.1} parent=1 // pred_fallthru
      _
    // Predicated region
    $region6: #{tpu_custom_call.1} parent=1 // pred_check
      _
    $region7: #{tpu_custom_call.1} parent=1 // pred_check_branch
      %32 = sbr.rel (0) target = $region9
    $region8: #{tpu_custom_call.1} parent=1 // pred_region
      %34 = vsyncadd [#allocation7], 0
      %s35 = sshll.u32 %s1, 4
      %s36 = int_to_ptr.hbm [resolvable:$true] %s35
      %s37 = sshll.u32 [#allocation6], 4
      %s38 = int_to_ptr.vmem [resolvable:$true] %s37
      %43 = dma.hbm_to_vmem [thread:$0]  %s36, 4096, %s38, [#allocation7], 256, 256, 16
    $region9: #{tpu_custom_call.1} parent=1 // pred_fallthru
      _
    // Predicated region
    $region10: #{tpu_custom_call.1} parent=1 // pred_check
      _
    $region11: #{tpu_custom_call.1} parent=1 // pred_check_branch
      %45 = sbr.rel (0) target = $region13
    $region12: #{tpu_custom_call.1} parent=1 // pred_region
      %47 = vsyncadd [#allocation7], 0
      %s48 = sshll.u32 %s2, 4
      %s49 = int_to_ptr.hbm [resolvable:$true] %s48
      %s50 = sshll.u32 [#allocation8], 4
      %s51 = int_to_ptr.vmem [resolvable:$true] %s50
      %56 = dma.hbm_to_vmem [thread:$0]  %s49, 4096, %s51, [#allocation7], 256, 256, 16
    $region13: #{tpu_custom_call.1} parent=1 // pred_fallthru
      _
    // Predicated region
    $region14: #{tpu_custom_call.1} parent=1 // pred_check
      _
    $region15: #{tpu_custom_call.1} parent=1 // pred_check_branch
      %58 = sbr.rel (0) target = $region17
    $region16: #{tpu_custom_call.1} parent=1 // pred_region
      %60 = vsyncadd [#allocation10], 0
      %s62 = sshll.u32 %s3, 4
      %s63 = int_to_ptr.hbm [resolvable:$true] %s62
      %s64 = sshll.u32 [#allocation9], 4
      %s65 = int_to_ptr.vmem [resolvable:$true] %s64
      %67 = dma.hbm_to_vmem [thread:$0]  %s63, 64, %s65, [#allocation10]
    $region17: #{tpu_custom_call.1} parent=1 // pred_fallthru
      _
    // Predicated region
    $region18: #{tpu_custom_call.1} parent=1 // pred_check
      _
    $region19: #{tpu_custom_call.1} parent=1 // pred_check_branch
      %69 = sbr.rel (0) target = $region21
    $region20: #{tpu_custom_call.1} parent=1 // pred_region
      %71 = vsyncadd [#allocation10], 0
      %s72 = sshll.u32 %s4, 4
      %s73 = int_to_ptr.hbm [resolvable:$true] %s72
      %s74 = sshll.u32 [#allocation11], 4
      %s75 = int_to_ptr.vmem [resolvable:$true] %s74
      %80 = dma.hbm_to_vmem [thread:$0]  %s73, 8192, %s75, [#allocation10], 256, 256, 16
    $region21: #{tpu_custom_call.1} parent=1 // pred_fallthru
      _
    // Predicated region
    $region22: #{tpu_custom_call.1} parent=1 // pred_check
      _
    $region23: #{tpu_custom_call.1} parent=1 // pred_check_branch
      %82 = sbr.rel (0) target = $region25
    $region24: #{tpu_custom_call.1} parent=1 // pred_region
      _
    $region25: #{tpu_custom_call.1} parent=1 // pred_fallthru
      _
    // Predicated region
    $region26: #{tpu_custom_call.1} parent=1 // pred_check
      _
    $region27: #{tpu_custom_call.1} parent=1 // pred_check_branch
      %84 = sbr.rel (0) target = $region29
    $region28: #{tpu_custom_call.1} parent=1 // pred_region
      %86 = vsyncadd [#allocation13], 0
      %s87 = sshll.u32 %s6, 4
      %s88 = int_to_ptr.hbm [resolvable:$true] %s87
      %s89 = sshll.u32 [#allocation12], 4
      %s90 = int_to_ptr.vmem [resolvable:$true] %s89
      %95 = dma.hbm_to_vmem [thread:$0]  %s88, 2048, %s90, [#allocation13], 128, 128, 8
    $region29: #{tpu_custom_call.1} parent=1 // pred_fallthru
      _
    // Predicated region
    $region30: #{tpu_custom_call.1} parent=1 // pred_check
      _
    $region31: #{tpu_custom_call.1} parent=1 // pred_check_branch
      %97 = sbr.rel (0) target = $region33
    $region32: #{tpu_custom_call.1} parent=1 // pred_region
      _
    $region33: #{tpu_custom_call.1} parent=1 // pred_fallthru
      _
    // Predicated region
    $region34: #{tpu_custom_call.1} parent=1 // pred_check
      _
    $region35: #{tpu_custom_call.1} parent=1 // pred_check_branch
      %99 = sbr.rel (0) target = $region37
    $region36: #{tpu_custom_call.1} parent=1 // pred_region
      %101 = dma.done [#allocation4], 1024
    $region37: #{tpu_custom_call.1} parent=1 // pred_fallthru
      _
    // Predicated region
    $region38: #{tpu_custom_call.1} parent=1 // pred_check
      _
    $region39: #{tpu_custom_call.1} parent=1 // pred_check_branch
      %103 = sbr.rel (0) target = $region41
    $region40: #{tpu_custom_call.1} parent=1 // pred_region
      %105 = dma.done [#allocation7], 4096
    $region41: #{tpu_custom_call.1} parent=1 // pred_fallthru
      _
    // Predicated region
    $region42: #{tpu_custom_call.1} parent=1 // pred_check
      _
    $region43: #{tpu_custom_call.1} parent=1 // pred_check_branch
      %107 = sbr.rel (0) target = $region45
    $region44: #{tpu_custom_call.1} parent=1 // pred_region
      %109 = dma.done [#allocation7], 4096
    $region45: #{tpu_custom_call.1} parent=1 // pred_fallthru
      _
    // Predicated region
    $region46: #{tpu_custom_call.1} parent=1 // pred_check
      _
    $region47: #{tpu_custom_call.1} parent=1 // pred_check_branch
      %111 = sbr.rel (0) target = $region49
    $region48: #{tpu_custom_call.1} parent=1 // pred_region
      %113 = dma.done [#allocation10], 64
    $region49: #{tpu_custom_call.1} parent=1 // pred_fallthru
      _
    // Predicated region
    $region50: #{tpu_custom_call.1} parent=1 // pred_check
      _
    $region51: #{tpu_custom_call.1} parent=1 // pred_check_branch
      %115 = sbr.rel (0) target = $region53
    $region52: #{tpu_custom_call.1} parent=1 // pred_region
      %117 = dma.done [#allocation10], 8192
    $region53: #{tpu_custom_call.1} parent=1 // pred_fallthru
      _
    // Predicated region
    $region54: #{tpu_custom_call.1} parent=1 // pred_check
      _
    $region55: #{tpu_custom_call.1} parent=1 // pred_check_branch
      %119 = sbr.rel (0) target = $region57
    $region56: #{tpu_custom_call.1} parent=1 // pred_region
      %121 = dma.done [#allocation13], 2048
    $region57: #{tpu_custom_call.1} parent=1 // pred_fallthru
      _
    %v123 = vld [vmem:[#allocation3] sm:$0xf]
    %v124 = vld [vmem:[#allocation3 + $0x4] sm:$0xf]
    %v125 = vld [vmem:[#allocation3 + $0x8] sm:$0xf]
    %v126 = vld [vmem:[#allocation3 + $0xc] sm:$0xf]
    %v127 = vld [vmem:[#allocation3 + $0x10] sm:$0xf]
    %v128 = vld [vmem:[#allocation3 + $0x14] sm:$0xf]
    %v129 = vld [vmem:[#allocation3 + $0x18] sm:$0xf]
    %v130 = vld [vmem:[#allocation3 + $0x1c] sm:$0xf]
    %v131 = vld [vmem:[#allocation3 + $0x20] sm:$0xf]
    %v132 = vld [vmem:[#allocation3 + $0x24] sm:$0xf]
    %v133 = vld [vmem:[#allocation3 + $0x28] sm:$0xf]
    %v134 = vld [vmem:[#allocation3 + $0x2c] sm:$0xf]
    %v135 = vld [vmem:[#allocation3 + $0x30] sm:$0xf]
    %v136 = vld [vmem:[#allocation3 + $0x34] sm:$0xf]
    %v137 = vld [vmem:[#allocation3 + $0x38] sm:$0xf]
    %v138 = vld [vmem:[#allocation3 + $0x3c] sm:$0xf]
    %v139 = vld [vmem:[#allocation6] sm:$0xff]
    %v140 = vld [vmem:[#allocation6 + $0x8] sm:$0xff]
    %v141 = vld [vmem:[#allocation6 + $0x10] sm:$0xff]
    %v142 = vld [vmem:[#allocation6 + $0x18] sm:$0xff]
    %v143 = vld [vmem:[#allocation6 + $0x20] sm:$0xff]
    %v144 = vld [vmem:[#allocation6 + $0x28] sm:$0xff]
    %v145 = vld [vmem:[#allocation6 + $0x30] sm:$0xff]
    %v146 = vld [vmem:[#allocation6 + $0x38] sm:$0xff]
    %v147 = vld [vmem:[#allocation6 + $0x40] sm:$0xff]
    %v148 = vld [vmem:[#allocation6 + $0x48] sm:$0xff]
    %v149 = vld [vmem:[#allocation6 + $0x50] sm:$0xff]
    %v150 = vld [vmem:[#allocation6 + $0x58] sm:$0xff]
    %v151 = vld [vmem:[#allocation6 + $0x60] sm:$0xff]
    %v152 = vld [vmem:[#allocation6 + $0x68] sm:$0xff]
    %v153 = vld [vmem:[#allocation6 + $0x70] sm:$0xff]
    %v154 = vld [vmem:[#allocation6 + $0x78] sm:$0xff]
    %v155 = vld [vmem:[#allocation6 + $0x80] sm:$0xff]
    %v156 = vld [vmem:[#allocation6 + $0x88] sm:$0xff]
    %v157 = vld [vmem:[#allocation6 + $0x90] sm:$0xff]
    %v158 = vld [vmem:[#allocation6 + $0x98] sm:$0xff]
    %v159 = vld [vmem:[#allocation6 + $0xa0] sm:$0xff]
    %v160 = vld [vmem:[#allocation6 + $0xa8] sm:$0xff]
    %v161 = vld [vmem:[#allocation6 + $0xb0] sm:$0xff]
    %v162 = vld [vmem:[#allocation6 + $0xb8] sm:$0xff]
    %v163 = vld [vmem:[#allocation6 + $0xc0] sm:$0xff]
    %v164 = vld [vmem:[#allocation6 + $0xc8] sm:$0xff]
    %v165 = vld [vmem:[#allocation6 + $0xd0] sm:$0xff]
    %v166 = vld [vmem:[#allocation6 + $0xd8] sm:$0xff]
    %v167 = vld [vmem:[#allocation6 + $0xe0] sm:$0xff]
    %v168 = vld [vmem:[#allocation6 + $0xe8] sm:$0xff]
    %v169 = vld [vmem:[#allocation6 + $0xf0] sm:$0xff]
    %v170 = vld [vmem:[#allocation6 + $0xf8] sm:$0xff]
    %v171 = vld [vmem:[#allocation9] sm:$0xf]
    %v173 = vperm.slane %v171, 0
    %v174 = vperm.slane %v171, 1
    %v175 = vperm.slane %v171, 2
    %v176 = vperm.slane %v171, 3
    %v197 = vunpack.c.l.b16 %v123
    %v198 = vunpack.c.l.b16 %v124
    %v199 = vunpack.c.l.b16 %v125
    %v200 = vunpack.c.l.b16 %v126
    %v201 = vunpack.c.l.b16 %v127
    %v202 = vunpack.c.l.b16 %v128
    %v203 = vunpack.c.l.b16 %v129
    %v204 = vunpack.c.l.b16 %v130
    %v205 = vunpack.c.l.b16 %v131
    %v206 = vunpack.c.l.b16 %v132
    %v207 = vunpack.c.l.b16 %v133
    %v208 = vunpack.c.l.b16 %v134
    %v209 = vunpack.c.l.b16 %v135
    %v210 = vunpack.c.l.b16 %v136
    %v211 = vunpack.c.l.b16 %v137
    %v212 = vunpack.c.l.b16 %v138
    %v213 = vpack.c.b16 %v198, %v197
    %v214 = vpack.c.b16 %v200, %v199
    %v215 = vpack.c.b16 %v202, %v201
    %v216 = vpack.c.b16 %v204, %v203
    %v217 = vpack.c.b16 %v206, %v205
    %v218 = vpack.c.b16 %v208, %v207
    %v219 = vpack.c.b16 %v210, %v209
    %v220 = vpack.c.b16 %v212, %v211
    %v261 = vunpack.c.l.b16 %v139
    %v262 = vunpack.c.h.b16 %v139
    %v263 = vunpack.c.l.b16 %v140
    %v264 = vunpack.c.h.b16 %v140
    %v265 = vunpack.c.l.b16 %v141
    %v266 = vunpack.c.h.b16 %v141
    %v267 = vunpack.c.l.b16 %v142
    %v268 = vunpack.c.h.b16 %v142
    %v269 = vunpack.c.l.b16 %v143
    %v270 = vunpack.c.h.b16 %v143
    %v271 = vunpack.c.l.b16 %v144
    %v272 = vunpack.c.h.b16 %v144
    %v273 = vunpack.c.l.b16 %v145
    %v274 = vunpack.c.h.b16 %v145
    %v275 = vunpack.c.l.b16 %v146
    %v276 = vunpack.c.h.b16 %v146
    %v277 = vunpack.c.l.b16 %v147
    %v278 = vunpack.c.h.b16 %v147
    %v279 = vunpack.c.l.b16 %v148
    %v280 = vunpack.c.h.b16 %v148
    %v281 = vunpack.c.l.b16 %v149
    %v282 = vunpack.c.h.b16 %v149
    %v283 = vunpack.c.l.b16 %v150
    %v284 = vunpack.c.h.b16 %v150
    %v285 = vunpack.c.l.b16 %v151
    %v286 = vunpack.c.h.b16 %v151
    %v287 = vunpack.c.l.b16 %v152
    %v288 = vunpack.c.h.b16 %v152
    %v289 = vunpack.c.l.b16 %v153
    %v290 = vunpack.c.h.b16 %v153
    %v291 = vunpack.c.l.b16 %v154
    %v292 = vunpack.c.h.b16 %v154
    %v293 = vunpack.c.l.b16 %v155
    %v294 = vunpack.c.h.b16 %v155
    %v295 = vunpack.c.l.b16 %v156
    %v296 = vunpack.c.h.b16 %v156
    %v297 = vunpack.c.l.b16 %v157
    %v298 = vunpack.c.h.b16 %v157
    %v299 = vunpack.c.l.b16 %v158
    %v300 = vunpack.c.h.b16 %v158
    %v301 = vunpack.c.l.b16 %v159
    %v302 = vunpack.c.h.b16 %v159
    %v303 = vunpack.c.l.b16 %v160
    %v304 = vunpack.c.h.b16 %v160
    %v305 = vunpack.c.l.b16 %v161
    %v306 = vunpack.c.h.b16 %v161
    %v307 = vunpack.c.l.b16 %v162
    %v308 = vunpack.c.h.b16 %v162
    %v309 = vunpack.c.l.b16 %v163
    %v310 = vunpack.c.h.b16 %v163
    %v311 = vunpack.c.l.b16 %v164
    %v312 = vunpack.c.h.b16 %v164
    %v313 = vunpack.c.l.b16 %v165
    %v314 = vunpack.c.h.b16 %v165
    %v315 = vunpack.c.l.b16 %v166
    %v316 = vunpack.c.h.b16 %v166
    %v317 = vunpack.c.l.b16 %v167
    %v318 = vunpack.c.h.b16 %v167
    %v319 = vunpack.c.l.b16 %v168
    %v320 = vunpack.c.h.b16 %v168
    %v321 = vunpack.c.l.b16 %v169
    %v322 = vunpack.c.h.b16 %v169
    %v323 = vunpack.c.l.b16 %v170
    %v324 = vunpack.c.h.b16 %v170
    %v325 = vpack.c.b16 %v265, %v261
    %v326 = vpack.c.b16 %v266, %v262
    %v327 = vpack.c.b16 %v267, %v263
    %v328 = vpack.c.b16 %v268, %v264
    %v329 = vpack.c.b16 %v273, %v269
    %v330 = vpack.c.b16 %v274, %v270
    %v331 = vpack.c.b16 %v275, %v271
    %v332 = vpack.c.b16 %v276, %v272
    %v333 = vpack.c.b16 %v281, %v277
    %v334 = vpack.c.b16 %v282, %v278
    %v335 = vpack.c.b16 %v283, %v279
    %v336 = vpack.c.b16 %v284, %v280
    %v337 = vpack.c.b16 %v289, %v285
    %v338 = vpack.c.b16 %v290, %v286
    %v339 = vpack.c.b16 %v291, %v287
    %v340 = vpack.c.b16 %v292, %v288
    %v341 = vpack.c.b16 %v297, %v293
    %v342 = vpack.c.b16 %v298, %v294
    %v343 = vpack.c.b16 %v299, %v295
    %v344 = vpack.c.b16 %v300, %v296
    %v345 = vpack.c.b16 %v305, %v301
    %v346 = vpack.c.b16 %v306, %v302
    %v347 = vpack.c.b16 %v307, %v303
    %v348 = vpack.c.b16 %v308, %v304
    %v349 = vpack.c.b16 %v313, %v309
    %v350 = vpack.c.b16 %v314, %v310
    %v351 = vpack.c.b16 %v315, %v311
    %v352 = vpack.c.b16 %v316, %v312
    %v353 = vpack.c.b16 %v321, %v317
    %v354 = vpack.c.b16 %v322, %v318
    %v355 = vpack.c.b16 %v323, %v319
    %v356 = vpack.c.b16 %v324, %v320
    %389 = vmatpush.bf16.msra.mxu0 %v353
    %390 = vmatpush.bf16.msra.mxu0 %v349
    %391 = vmatpush.bf16.msra.mxu0 %v345
    %392 = vmatpush.bf16.msra.mxu0 %v341
    %393 = vmatpush.bf16.msra.mxu0 %v337
    %394 = vmatpush.bf16.msra.mxu0 %v333
    %395 = vmatpush.bf16.msra.mxu0 %v329
    %396 = vmatpush.bf16.msra.mxu0 %v325
    %397 = vmatmul.bf16.gmra.mxu0 %v213
    %v398 = vpop.f32.mrf.mxu0
    %v399 = vadd.f32 %v173, %v398
    %v400 = vpop.f32.mrf.mxu0
    %v401 = vadd.f32 %v173, %v400
    %402 = vmatmul.bf16.gmra.mxu0 %v214
    %v403 = vpop.f32.mrf.mxu0
    %v404 = vadd.f32 %v173, %v403
    %v405 = vpop.f32.mrf.mxu0
    %v406 = vadd.f32 %v173, %v405
    %407 = vmatmul.bf16.gmra.mxu0 %v215
    %v408 = vpop.f32.mrf.mxu0
    %v409 = vadd.f32 %v173, %v408
    %v410 = vpop.f32.mrf.mxu0
    %v411 = vadd.f32 %v173, %v410
    %412 = vmatmul.bf16.gmra.mxu0 %v216
    %v413 = vpop.f32.mrf.mxu0
    %v414 = vadd.f32 %v173, %v413
    %v415 = vpop.f32.mrf.mxu0
    %v416 = vadd.f32 %v173, %v415
    %417 = vmatmul.bf16.gmra.mxu0 %v217
    %v418 = vpop.f32.mrf.mxu0
    %v419 = vadd.f32 %v173, %v418
    %v420 = vpop.f32.mrf.mxu0
    %v421 = vadd.f32 %v173, %v420
    %422 = vmatmul.bf16.gmra.mxu0 %v218
    %v423 = vpop.f32.mrf.mxu0
    %v424 = vadd.f32 %v173, %v423
    %v425 = vpop.f32.mrf.mxu0
    %v426 = vadd.f32 %v173, %v425
    %427 = vmatmul.bf16.gmra.mxu0 %v219
    %v428 = vpop.f32.mrf.mxu0
    %v429 = vadd.f32 %v173, %v428
    %v430 = vpop.f32.mrf.mxu0
    %v431 = vadd.f32 %v173, %v430
    %432 = vmatmul.bf16.gmra.mxu0 %v220
    %v433 = vpop.f32.mrf.mxu0
    %v434 = vadd.f32 %v173, %v433
    %v435 = vpop.f32.mrf.mxu0
    %v436 = vadd.f32 %v173, %v435
    %437 = vdwg.mxu0
    %438 = vmatpush.bf16.msra.mxu0 %v354
    %439 = vmatpush.bf16.msra.mxu0 %v350
    %440 = vmatpush.bf16.msra.mxu0 %v346
    %441 = vmatpush.bf16.msra.mxu0 %v342
    %442 = vmatpush.bf16.msra.mxu0 %v338
    %443 = vmatpush.bf16.msra.mxu0 %v334
    %444 = vmatpush.bf16.msra.mxu0 %v330
    %445 = vmatpush.bf16.msra.mxu0 %v326
    %446 = vmatmul.bf16.gmra.mxu0 %v213
    %v447 = vpop.f32.mrf.mxu0
    %v448 = vadd.f32 %v174, %v447
    %v449 = vpop.f32.mrf.mxu0
    %v450 = vadd.f32 %v174, %v449
    %451 = vmatmul.bf16.gmra.mxu0 %v214
    %v452 = vpop.f32.mrf.mxu0
    %v453 = vadd.f32 %v174, %v452
    %v454 = vpop.f32.mrf.mxu0
    %v455 = vadd.f32 %v174, %v454
    %456 = vmatmul.bf16.gmra.mxu0 %v215
    %v457 = vpop.f32.mrf.mxu0
    %v458 = vadd.f32 %v174, %v457
    %v459 = vpop.f32.mrf.mxu0
    %v460 = vadd.f32 %v174, %v459
    %461 = vmatmul.bf16.gmra.mxu0 %v216
    %v462 = vpop.f32.mrf.mxu0
    %v463 = vadd.f32 %v174, %v462
    %v464 = vpop.f32.mrf.mxu0
    %v465 = vadd.f32 %v174, %v464
    %466 = vmatmul.bf16.gmra.mxu0 %v217
    %v467 = vpop.f32.mrf.mxu0
    %v468 = vadd.f32 %v174, %v467
    %v469 = vpop.f32.mrf.mxu0
    %v470 = vadd.f32 %v174, %v469
    %471 = vmatmul.bf16.gmra.mxu0 %v218
    %v472 = vpop.f32.mrf.mxu0
    %v473 = vadd.f32 %v174, %v472
    %v474 = vpop.f32.mrf.mxu0
    %v475 = vadd.f32 %v174, %v474
    %476 = vmatmul.bf16.gmra.mxu0 %v219
    %v477 = vpop.f32.mrf.mxu0
    %v478 = vadd.f32 %v174, %v477
    %v479 = vpop.f32.mrf.mxu0
    %v480 = vadd.f32 %v174, %v479
    %481 = vmatmul.bf16.gmra.mxu0 %v220
    %v482 = vpop.f32.mrf.mxu0
    %v483 = vadd.f32 %v174, %v482
    %v484 = vpop.f32.mrf.mxu0
    %v485 = vadd.f32 %v174, %v484
    %486 = vdwg.mxu0
    %487 = vmatpush.bf16.msra.mxu0 %v355
    %488 = vmatpush.bf16.msra.mxu0 %v351
    %489 = vmatpush.bf16.msra.mxu0 %v347
    %490 = vmatpush.bf16.msra.mxu0 %v343
    %491 = vmatpush.bf16.msra.mxu0 %v339
    %492 = vmatpush.bf16.msra.mxu0 %v335
    %493 = vmatpush.bf16.msra.mxu0 %v331
    %494 = vmatpush.bf16.msra.mxu0 %v327
    %495 = vmatmul.bf16.gmra.mxu0 %v213
    %v496 = vpop.f32.mrf.mxu0
    %v497 = vadd.f32 %v175, %v496
    %v498 = vpop.f32.mrf.mxu0
    %v499 = vadd.f32 %v175, %v498
    %500 = vmatmul.bf16.gmra.mxu0 %v214
    %v501 = vpop.f32.mrf.mxu0
    %v502 = vadd.f32 %v175, %v501
    %v503 = vpop.f32.mrf.mxu0
    %v504 = vadd.f32 %v175, %v503
    %505 = vmatmul.bf16.gmra.mxu0 %v215
    %v506 = vpop.f32.mrf.mxu0
    %v507 = vadd.f32 %v175, %v506
    %v508 = vpop.f32.mrf.mxu0
    %v509 = vadd.f32 %v175, %v508
    %510 = vmatmul.bf16.gmra.mxu0 %v216
    %v511 = vpop.f32.mrf.mxu0
    %v512 = vadd.f32 %v175, %v511
    %v513 = vpop.f32.mrf.mxu0
    %v514 = vadd.f32 %v175, %v513
    %515 = vmatmul.bf16.gmra.mxu0 %v217
    %v516 = vpop.f32.mrf.mxu0
    %v517 = vadd.f32 %v175, %v516
    %v518 = vpop.f32.mrf.mxu0
    %v519 = vadd.f32 %v175, %v518
    %520 = vmatmul.bf16.gmra.mxu0 %v218
    %v521 = vpop.f32.mrf.mxu0
    %v522 = vadd.f32 %v175, %v521
    %v523 = vpop.f32.mrf.mxu0
    %v524 = vadd.f32 %v175, %v523
    %525 = vmatmul.bf16.gmra.mxu0 %v219
    %v526 = vpop.f32.mrf.mxu0
    %v527 = vadd.f32 %v175, %v526
    %v528 = vpop.f32.mrf.mxu0
    %v529 = vadd.f32 %v175, %v528
    %530 = vmatmul.bf16.gmra.mxu0 %v220
    %v531 = vpop.f32.mrf.mxu0
    %v532 = vadd.f32 %v175, %v531
    %v533 = vpop.f32.mrf.mxu0
    %v534 = vadd.f32 %v175, %v533
    %535 = vdwg.mxu0
    %536 = vmatpush.bf16.msra.mxu0 %v356
    %537 = vmatpush.bf16.msra.mxu0 %v352
    %538 = vmatpush.bf16.msra.mxu0 %v348
    %539 = vmatpush.bf16.msra.mxu0 %v344
    %540 = vmatpush.bf16.msra.mxu0 %v340
    %541 = vmatpush.bf16.msra.mxu0 %v336
    %542 = vmatpush.bf16.msra.mxu0 %v332
    %543 = vmatpush.bf16.msra.mxu0 %v328
    %544 = vmatmul.bf16.gmra.mxu0 %v213
    %v545 = vpop.f32.mrf.mxu0
    %v546 = vadd.f32 %v176, %v545
    %v547 = vpop.f32.mrf.mxu0
    %v548 = vadd.f32 %v176, %v547
    %549 = vmatmul.bf16.gmra.mxu0 %v214
    %v550 = vpop.f32.mrf.mxu0
    %v551 = vadd.f32 %v176, %v550
    %v552 = vpop.f32.mrf.mxu0
    %v553 = vadd.f32 %v176, %v552
    %554 = vmatmul.bf16.gmra.mxu0 %v215
    %v555 = vpop.f32.mrf.mxu0
    %v556 = vadd.f32 %v176, %v555
    %v557 = vpop.f32.mrf.mxu0
    %v558 = vadd.f32 %v176, %v557
    %559 = vmatmul.bf16.gmra.mxu0 %v216
    %v560 = vpop.f32.mrf.mxu0
    %v561 = vadd.f32 %v176, %v560
    %v562 = vpop.f32.mrf.mxu0
    %v563 = vadd.f32 %v176, %v562
    %564 = vmatmul.bf16.gmra.mxu0 %v217
    %v565 = vpop.f32.mrf.mxu0
    %v566 = vadd.f32 %v176, %v565
    %v567 = vpop.f32.mrf.mxu0
    %v568 = vadd.f32 %v176, %v567
    %569 = vmatmul.bf16.gmra.mxu0 %v218
    %v570 = vpop.f32.mrf.mxu0
    %v571 = vadd.f32 %v176, %v570
    %v572 = vpop.f32.mrf.mxu0
    %v573 = vadd.f32 %v176, %v572
    %574 = vmatmul.bf16.gmra.mxu0 %v219
    %v575 = vpop.f32.mrf.mxu0
    %v576 = vadd.f32 %v176, %v575
    %v577 = vpop.f32.mrf.mxu0
    %v578 = vadd.f32 %v176, %v577
    %579 = vmatmul.bf16.gmra.mxu0 %v220
    %v580 = vpop.f32.mrf.mxu0
    %v581 = vadd.f32 %v176, %v580
    %v582 = vpop.f32.mrf.mxu0
    %v583 = vadd.f32 %v176, %v582
    %584 = vdwg.mxu0
    %585 = vst [vmem:[#allocation2] sm:$0xff] %v399
    %586 = vst [vmem:[#allocation2 + $0x8] sm:$0xff] %v448
    %587 = vst [vmem:[#allocation2 + $0x10] sm:$0xff] %v497
    %588 = vst [vmem:[#allocation2 + $0x18] sm:$0xff] %v546
    %589 = vst [vmem:[#allocation2 + $0x20] sm:$0xff] %v401
    %590 = vst [vmem:[#allocation2 + $0x28] sm:$0xff] %v450
    %591 = vst [vmem:[#allocation2 + $0x30] sm:$0xff] %v499
    %592 = vst [vmem:[#allocation2 + $0x38] sm:$0xff] %v548
    %593 = vst [vmem:[#allocation2 + $0x40] sm:$0xff] %v404
    %594 = vst [vmem:[#allocation2 + $0x48] sm:$0xff] %v453
    %595 = vst [vmem:[#allocation2 + $0x50] sm:$0xff] %v502
    %596 = vst [vmem:[#allocation2 + $0x58] sm:$0xff] %v551
    %597 = vst [vmem:[#allocation2 + $0x60] sm:$0xff] %v406
    %598 = vst [vmem:[#allocation2 + $0x68] sm:$0xff] %v455
    %599 = vst [vmem:[#allocation2 + $0x70] sm:$0xff] %v504
    %600 = vst [vmem:[#allocation2 + $0x78] sm:$0xff] %v553
    %601 = vst [vmem:[#allocation2 + $0x80] sm:$0xff] %v409
    %602 = vst [vmem:[#allocation2 + $0x88] sm:$0xff] %v458
    %603 = vst [vmem:[#allocation2 + $0x90] sm:$0xff] %v507
    %604 = vst [vmem:[#allocation2 + $0x98] sm:$0xff] %v556
    %605 = vst [vmem:[#allocation2 + $0xa0] sm:$0xff] %v411
    %606 = vst [vmem:[#allocation2 + $0xa8] sm:$0xff] %v460
    %607 = vst [vmem:[#allocation2 + $0xb0] sm:$0xff] %v509
    %608 = vst [vmem:[#allocation2 + $0xb8] sm:$0xff] %v558
    %609 = vst [vmem:[#allocation2 + $0xc0] sm:$0xff] %v414
    %610 = vst [vmem:[#allocation2 + $0xc8] sm:$0xff] %v463
    %611 = vst [vmem:[#allocation2 + $0xd0] sm:$0xff] %v512
    %612 = vst [vmem:[#allocation2 + $0xd8] sm:$0xff] %v561
    %613 = vst [vmem:[#allocation2 + $0xe0] sm:$0xff] %v416
    %614 = vst [vmem:[#allocation2 + $0xe8] sm:$0xff] %v465
    %615 = vst [vmem:[#allocation2 + $0xf0] sm:$0xff] %v514
    %616 = vst [vmem:[#allocation2 + $0xf8] sm:$0xff] %v563
    %617 = vst [vmem:[#allocation2 + $0x100] sm:$0xff] %v419
    %618 = vst [vmem:[#allocation2 + $0x108] sm:$0xff] %v468
    %619 = vst [vmem:[#allocation2 + $0x110] sm:$0xff] %v517
    %620 = vst [vmem:[#allocation2 + $0x118] sm:$0xff] %v566
    %621 = vst [vmem:[#allocation2 + $0x120] sm:$0xff] %v421
    %622 = vst [vmem:[#allocation2 + $0x128] sm:$0xff] %v470
    %623 = vst [vmem:[#allocation2 + $0x130] sm:$0xff] %v519
    %624 = vst [vmem:[#allocation2 + $0x138] sm:$0xff] %v568
    %625 = vst [vmem:[#allocation2 + $0x140] sm:$0xff] %v424
    %626 = vst [vmem:[#allocation2 + $0x148] sm:$0xff] %v473
    %627 = vst [vmem:[#allocation2 + $0x150] sm:$0xff] %v522
    %628 = vst [vmem:[#allocation2 + $0x158] sm:$0xff] %v571
    %629 = vst [vmem:[#allocation2 + $0x160] sm:$0xff] %v426
    %630 = vst [vmem:[#allocation2 + $0x168] sm:$0xff] %v475
    %631 = vst [vmem:[#allocation2 + $0x170] sm:$0xff] %v524
    %632 = vst [vmem:[#allocation2 + $0x178] sm:$0xff] %v573
    %633 = vst [vmem:[#allocation2 + $0x180] sm:$0xff] %v429
    %634 = vst [vmem:[#allocation2 + $0x188] sm:$0xff] %v478
    %635 = vst [vmem:[#allocation2 + $0x190] sm:$0xff] %v527
    %636 = vst [vmem:[#allocation2 + $0x198] sm:$0xff] %v576
    %637 = vst [vmem:[#allocation2 + $0x1a0] sm:$0xff] %v431
    %638 = vst [vmem:[#allocation2 + $0x1a8] sm:$0xff] %v480
    %639 = vst [vmem:[#allocation2 + $0x1b0] sm:$0xff] %v529
    %640 = vst [vmem:[#allocation2 + $0x1b8] sm:$0xff] %v578
    %641 = vst [vmem:[#allocation2 + $0x1c0] sm:$0xff] %v434
    %642 = vst [vmem:[#allocation2 + $0x1c8] sm:$0xff] %v483
    %643 = vst [vmem:[#allocation2 + $0x1d0] sm:$0xff] %v532
    %644 = vst [vmem:[#allocation2 + $0x1d8] sm:$0xff] %v581
    %645 = vst [vmem:[#allocation2 + $0x1e0] sm:$0xff] %v436
    %646 = vst [vmem:[#allocation2 + $0x1e8] sm:$0xff] %v485
    %647 = vst [vmem:[#allocation2 + $0x1f0] sm:$0xff] %v534
    %648 = vst [vmem:[#allocation2 + $0x1f8] sm:$0xff] %v583
    %s649 = smul.u32 0, 4
    %s650 = smul.addr %s649, 8
    %s651 = scalar_lea.vmem [#allocation2], %s650
    %v652 = vld [vmem:[%s651] sm:$0xff]
    %v653 = vld [vmem:[%s651 + $0x8] sm:$0xff]
    %v654 = vld [vmem:[%s651 + $0x10] sm:$0xff]
    %v655 = vld [vmem:[%s651 + $0x18] sm:$0xff]
    %v656 = vld [vmem:[#allocation8] sm:$0xff]
    %v657 = vld [vmem:[#allocation8 + $0x8] sm:$0xff]
    %v658 = vld [vmem:[#allocation8 + $0x10] sm:$0xff]
    %v659 = vld [vmem:[#allocation8 + $0x18] sm:$0xff]
    %v660 = vld [vmem:[#allocation8 + $0x20] sm:$0xff]
    %v661 = vld [vmem:[#allocation8 + $0x28] sm:$0xff]
    %v662 = vld [vmem:[#allocation8 + $0x30] sm:$0xff]
    %v663 = vld [vmem:[#allocation8 + $0x38] sm:$0xff]
    %v664 = vld [vmem:[#allocation8 + $0x40] sm:$0xff]
    %v665 = vld [vmem:[#allocation8 + $0x48] sm:$0xff]
    %v666 = vld [vmem:[#allocation8 + $0x50] sm:$0xff]
    %v667 = vld [vmem:[#allocation8 + $0x58] sm:$0xff]
    %v668 = vld [vmem:[#allocation8 + $0x60] sm:$0xff]
    %v669 = vld [vmem:[#allocation8 + $0x68] sm:$0xff]
    %v670 = vld [vmem:[#allocation8 + $0x70] sm:$0xff]
    %v671 = vld [vmem:[#allocation8 + $0x78] sm:$0xff]
    %v672 = vld [vmem:[#allocation8 + $0x80] sm:$0xff]
    %v673 = vld [vmem:[#allocation8 + $0x88] sm:$0xff]
    %v674 = vld [vmem:[#allocation8 + $0x90] sm:$0xff]
    %v675 = vld [vmem:[#allocation8 + $0x98] sm:$0xff]
    %v676 = vld [vmem:[#allocation8 + $0xa0] sm:$0xff]
    %v677 = vld [vmem:[#allocation8 + $0xa8] sm:$0xff]
    %v678 = vld [vmem:[#allocation8 + $0xb0] sm:$0xff]
    %v679 = vld [vmem:[#allocation8 + $0xb8] sm:$0xff]
    %v680 = vld [vmem:[#allocation8 + $0xc0] sm:$0xff]
    %v681 = vld [vmem:[#allocation8 + $0xc8] sm:$0xff]
    %v682 = vld [vmem:[#allocation8 + $0xd0] sm:$0xff]
    %v683 = vld [vmem:[#allocation8 + $0xd8] sm:$0xff]
    %v684 = vld [vmem:[#allocation8 + $0xe0] sm:$0xff]
    %v685 = vld [vmem:[#allocation8 + $0xe8] sm:$0xff]
    %v686 = vld [vmem:[#allocation8 + $0xf0] sm:$0xff]
    %v687 = vld [vmem:[#allocation8 + $0xf8] sm:$0xff]
    %v720 = vunpack.c.l.b16 %v656
    %v721 = vunpack.c.h.b16 %v656
    %v722 = vunpack.c.l.b16 %v657
    %v723 = vunpack.c.h.b16 %v657
    %v724 = vunpack.c.l.b16 %v658
    %v725 = vunpack.c.h.b16 %v658
    %v726 = vunpack.c.l.b16 %v659
    %v727 = vunpack.c.h.b16 %v659
    %v728 = vunpack.c.l.b16 %v660
    %v729 = vunpack.c.h.b16 %v660
    %v730 = vunpack.c.l.b16 %v661
    %v731 = vunpack.c.h.b16 %v661
    %v732 = vunpack.c.l.b16 %v662
    %v733 = vunpack.c.h.b16 %v662
    %v734 = vunpack.c.l.b16 %v663
    %v735 = vunpack.c.h.b16 %v663
    %v736 = vunpack.c.l.b16 %v664
    %v737 = vunpack.c.h.b16 %v664
    %v738 = vunpack.c.l.b16 %v665
    %v739 = vunpack.c.h.b16 %v665
    %v740 = vunpack.c.l.b16 %v666
    %v741 = vunpack.c.h.b16 %v666
    %v742 = vunpack.c.l.b16 %v667
    %v743 = vunpack.c.h.b16 %v667
    %v744 = vunpack.c.l.b16 %v668
    %v745 = vunpack.c.h.b16 %v668
    %v746 = vunpack.c.l.b16 %v669
    %v747 = vunpack.c.h.b16 %v669
    %v748 = vunpack.c.l.b16 %v670
    %v749 = vunpack.c.h.b16 %v670
    %v750 = vunpack.c.l.b16 %v671
    %v751 = vunpack.c.h.b16 %v671
    %v752 = vunpack.c.l.b16 %v672
    %v753 = vunpack.c.h.b16 %v672
    %v754 = vunpack.c.l.b16 %v673
    %v755 = vunpack.c.h.b16 %v673
    %v756 = vunpack.c.l.b16 %v674
    %v757 = vunpack.c.h.b16 %v674
    %v758 = vunpack.c.l.b16 %v675
    %v759 = vunpack.c.h.b16 %v675
    %v760 = vunpack.c.l.b16 %v676
    %v761 = vunpack.c.h.b16 %v676
    %v762 = vunpack.c.l.b16 %v677
    %v763 = vunpack.c.h.b16 %v677
    %v764 = vunpack.c.l.b16 %v678
    %v765 = vunpack.c.h.b16 %v678
    %v766 = vunpack.c.l.b16 %v679
    %v767 = vunpack.c.h.b16 %v679
    %v768 = vunpack.c.l.b16 %v680
    %v769 = vunpack.c.h.b16 %v680
    %v770 = vunpack.c.l.b16 %v681
    %v771 = vunpack.c.h.b16 %v681
    %v772 = vunpack.c.l.b16 %v682
    %v773 = vunpack.c.h.b16 %v682
    %v774 = vunpack.c.l.b16 %v683
    %v775 = vunpack.c.h.b16 %v683
    %v776 = vunpack.c.l.b16 %v684
    %v777 = vunpack.c.h.b16 %v684
    %v778 = vunpack.c.l.b16 %v685
    %v779 = vunpack.c.h.b16 %v685
    %v780 = vunpack.c.l.b16 %v686
    %v781 = vunpack.c.h.b16 %v686
    %v782 = vunpack.c.l.b16 %v687
    %v783 = vunpack.c.h.b16 %v687
    %v784 = vpack.c.b16 %v724, %v720
    %v785 = vpack.c.b16 %v725, %v721
    %v786 = vpack.c.b16 %v726, %v722
    %v787 = vpack.c.b16 %v727, %v723
    %v788 = vpack.c.b16 %v732, %v728
    %v789 = vpack.c.b16 %v733, %v729
    %v790 = vpack.c.b16 %v734, %v730
    %v791 = vpack.c.b16 %v735, %v731
    %v792 = vpack.c.b16 %v740, %v736
    %v793 = vpack.c.b16 %v741, %v737
    %v794 = vpack.c.b16 %v742, %v738
    %v795 = vpack.c.b16 %v743, %v739
    %v796 = vpack.c.b16 %v748, %v744
    %v797 = vpack.c.b16 %v749, %v745
    %v798 = vpack.c.b16 %v750, %v746
    %v799 = vpack.c.b16 %v751, %v747
    %v800 = vpack.c.b16 %v756, %v752
    %v801 = vpack.c.b16 %v757, %v753
    %v802 = vpack.c.b16 %v758, %v754
    %v803 = vpack.c.b16 %v759, %v755
    %v804 = vpack.c.b16 %v764, %v760
    %v805 = vpack.c.b16 %v765, %v761
    %v806 = vpack.c.b16 %v766, %v762
    %v807 = vpack.c.b16 %v767, %v763
    %v808 = vpack.c.b16 %v772, %v768
    %v809 = vpack.c.b16 %v773, %v769
    %v810 = vpack.c.b16 %v774, %v770
    %v811 = vpack.c.b16 %v775, %v771
    %v812 = vpack.c.b16 %v780, %v776
    %v813 = vpack.c.b16 %v781, %v777
    %v814 = vpack.c.b16 %v782, %v778
    %v815 = vpack.c.b16 %v783, %v779
    %848 = vmatpush.bf16.msra.mxu0 %v812
    %849 = vmatpush.bf16.msra.mxu0 %v808
    %850 = vmatpush.bf16.msra.mxu0 %v804
    %851 = vmatpush.bf16.msra.mxu0 %v800
    %852 = vmatpush.bf16.msra.mxu0 %v796
    %853 = vmatpush.bf16.msra.mxu0 %v792
    %854 = vmatpush.bf16.msra.mxu0 %v788
    %855 = vmatpush.bf16.msra.mxu0 %v784
    %856 = vmatmul.bf16.gmra.mxu0 0
    %v857 = vpop.f32.mrf.mxu0
    %v858 = vadd.f32 0.0, %v857
    %v859 = vpop.f32.mrf.mxu0
    %860 = vdwg.mxu0
    %861 = vmatpush.bf16.msra.mxu0 %v813
    %862 = vmatpush.bf16.msra.mxu0 %v809
    %863 = vmatpush.bf16.msra.mxu0 %v805
    %864 = vmatpush.bf16.msra.mxu0 %v801
    %865 = vmatpush.bf16.msra.mxu0 %v797
    %866 = vmatpush.bf16.msra.mxu0 %v793
    %867 = vmatpush.bf16.msra.mxu0 %v789
    %868 = vmatpush.bf16.msra.mxu0 %v785
    %869 = vmatmul.bf16.gmra.mxu0 0
    %v870 = vpop.f32.mrf.mxu0
    %v871 = vadd.f32 0.0, %v870
    %v872 = vpop.f32.mrf.mxu0
    %873 = vdwg.mxu0
    %874 = vmatpush.bf16.msra.mxu0 %v814
    %875 = vmatpush.bf16.msra.mxu0 %v810
    %876 = vmatpush.bf16.msra.mxu0 %v806
    %877 = vmatpush.bf16.msra.mxu0 %v802
    %878 = vmatpush.bf16.msra.mxu0 %v798
    %879 = vmatpush.bf16.msra.mxu0 %v794
    %880 = vmatpush.bf16.msra.mxu0 %v790
    %881 = vmatpush.bf16.msra.mxu0 %v786
    %882 = vmatmul.bf16.gmra.mxu0 0
    %v883 = vpop.f32.mrf.mxu0
    %v884 = vadd.f32 0.0, %v883
    %v885 = vpop.f32.mrf.mxu0
    %886 = vdwg.mxu0
    %887 = vmatpush.bf16.msra.mxu0 %v815
    %888 = vmatpush.bf16.msra.mxu0 %v811
    %889 = vmatpush.bf16.msra.mxu0 %v807
    %890 = vmatpush.bf16.msra.mxu0 %v803
    %891 = vmatpush.bf16.msra.mxu0 %v799
    %892 = vmatpush.bf16.msra.mxu0 %v795
    %893 = vmatpush.bf16.msra.mxu0 %v791
    %894 = vmatpush.bf16.msra.mxu0 %v787
    %895 = vmatmul.bf16.gmra.mxu0 0
    %v896 = vpop.f32.mrf.mxu0
    %v897 = vadd.f32 0.0, %v896
    %v898 = vpop.f32.mrf.mxu0
    %899 = vdwg.mxu0
    %v900 = vadd.f32 %v652, %v858
    %v901 = vadd.f32 %v653, %v871
    %v902 = vadd.f32 %v654, %v884
    %v903 = vadd.f32 %v655, %v897
    %v904 = vsub.f32 0.0, %v900
    %v905 = vsub.f32 0.0, %v901
    %v906 = vsub.f32 0.0, %v902
    %v907 = vmul.f32 %v904, 1.442695
    %v908 = vpow.pop %v907
    %v909 = vmul.f32 %v905, 1.442695
    %v910 = vpow.pop %v909
    %v911 = vmul.f32 %v906, 1.442695
    %v912 = vpow.pop %v911
    %v913 = vadd.f32 %v908, 1.0
    %v914 = vadd.f32 %v910, 1.0
    %v915 = vadd.f32 %v912, 1.0
    %v916 = vrcp.pop %v913
    %v917 = vrcp.pop %v914
    %v918 = vrcp.pop %v915
    %v919 = vtanh.pop %v903
    %v920 = vmul.f32 %v917, 0.0
    %v921 = vmul.f32 %v916, %v919
    %v922 = vadd.f32 %v920, %v921
    %v923 = vtanh.pop %v922
    %v924 = vmul.f32 %v918, %v923
    %v925 = vpack.c.bf16 %v924, %v924
    %v926 = vld [vmem:[#allocation11] sm:$0xff]
    %v927 = vld [vmem:[#allocation11 + $0x8] sm:$0xff]
    %v928 = vld [vmem:[#allocation11 + $0x10] sm:$0xff]
    %v929 = vld [vmem:[#allocation11 + $0x18] sm:$0xff]
    %v930 = vld [vmem:[#allocation11 + $0x20] sm:$0xff]
    %v931 = vld [vmem:[#allocation11 + $0x28] sm:$0xff]
    %v932 = vld [vmem:[#allocation11 + $0x30] sm:$0xff]
    %v933 = vld [vmem:[#allocation11 + $0x38] sm:$0xff]
    %v934 = vld [vmem:[#allocation11 + $0x40] sm:$0xff]
    %v935 = vld [vmem:[#allocation11 + $0x48] sm:$0xff]
    %v936 = vld [vmem:[#allocation11 + $0x50] sm:$0xff]
    %v937 = vld [vmem:[#allocation11 + $0x58] sm:$0xff]
    %v938 = vld [vmem:[#allocation11 + $0x60] sm:$0xff]
    %v939 = vld [vmem:[#allocation11 + $0x68] sm:$0xff]
    %v940 = vld [vmem:[#allocation11 + $0x70] sm:$0xff]
    %v941 = vld [vmem:[#allocation11 + $0x78] sm:$0xff]
    %v942 = vld [vmem:[#allocation11 + $0x80] sm:$0xff]
    %v943 = vld [vmem:[#allocation11 + $0x88] sm:$0xff]
    %v944 = vld [vmem:[#allocation11 + $0x90] sm:$0xff]
    %v945 = vld [vmem:[#allocation11 + $0x98] sm:$0xff]
    %v946 = vld [vmem:[#allocation11 + $0xa0] sm:$0xff]
    %v947 = vld [vmem:[#allocation11 + $0xa8] sm:$0xff]
    %v948 = vld [vmem:[#allocation11 + $0xb0] sm:$0xff]
    %v949 = vld [vmem:[#allocation11 + $0xb8] sm:$0xff]
    %v950 = vld [vmem:[#allocation11 + $0xc0] sm:$0xff]
    %v951 = vld [vmem:[#allocation11 + $0xc8] sm:$0xff]
    %v952 = vld [vmem:[#allocation11 + $0xd0] sm:$0xff]
    %v953 = vld [vmem:[#allocation11 + $0xd8] sm:$0xff]
    %v954 = vld [vmem:[#allocation11 + $0xe0] sm:$0xff]
    %v955 = vld [vmem:[#allocation11 + $0xe8] sm:$0xff]
    %v956 = vld [vmem:[#allocation11 + $0xf0] sm:$0xff]
    %v957 = vld [vmem:[#allocation11 + $0xf8] sm:$0xff]
    %v958 = vld [vmem:[#allocation11 + $0x100] sm:$0xff]
    %v959 = vld [vmem:[#allocation11 + $0x108] sm:$0xff]
    %v960 = vld [vmem:[#allocation11 + $0x110] sm:$0xff]
    %v961 = vld [vmem:[#allocation11 + $0x118] sm:$0xff]
    %v962 = vld [vmem:[#allocation11 + $0x120] sm:$0xff]
    %v963 = vld [vmem:[#allocation11 + $0x128] sm:$0xff]
    %v964 = vld [vmem:[#allocation11 + $0x130] sm:$0xff]
    %v965 = vld [vmem:[#allocation11 + $0x138] sm:$0xff]
    %v966 = vld [vmem:[#allocation11 + $0x140] sm:$0xff]
    %v967 = vld [vmem:[#allocation11 + $0x148] sm:$0xff]
    %v968 = vld [vmem:[#allocation11 + $0x150] sm:$0xff]
    %v969 = vld [vmem:[#allocation11 + $0x158] sm:$0xff]
    %v970 = vld [vmem:[#allocation11 + $0x160] sm:$0xff]
    %v971 = vld [vmem:[#allocation11 + $0x168] sm:$0xff]
    %v972 = vld [vmem:[#allocation11 + $0x170] sm:$0xff]
    %v973 = vld [vmem:[#allocation11 + $0x178] sm:$0xff]
    %v974 = vld [vmem:[#allocation11 + $0x180] sm:$0xff]
    %v975 = vld [vmem:[#allocation11 + $0x188] sm:$0xff]
    %v976 = vld [vmem:[#allocation11 + $0x190] sm:$0xff]
    %v977 = vld [vmem:[#allocation11 + $0x198] sm:$0xff]
    %v978 = vld [vmem:[#allocation11 + $0x1a0] sm:$0xff]
    %v979 = vld [vmem:[#allocation11 + $0x1a8] sm:$0xff]
    %v980 = vld [vmem:[#allocation11 + $0x1b0] sm:$0xff]
    %v981 = vld [vmem:[#allocation11 + $0x1b8] sm:$0xff]
    %v982 = vld [vmem:[#allocation11 + $0x1c0] sm:$0xff]
    %v983 = vld [vmem:[#allocation11 + $0x1c8] sm:$0xff]
    %v984 = vld [vmem:[#allocation11 + $0x1d0] sm:$0xff]
    %v985 = vld [vmem:[#allocation11 + $0x1d8] sm:$0xff]
    %v986 = vld [vmem:[#allocation11 + $0x1e0] sm:$0xff]
    %v987 = vld [vmem:[#allocation11 + $0x1e8] sm:$0xff]
    %v988 = vld [vmem:[#allocation11 + $0x1f0] sm:$0xff]
    %v989 = vld [vmem:[#allocation11 + $0x1f8] sm:$0xff]
    %v990 = vld [vmem:[%s5] sm:$0xf]
    %v992 = vperm.slane %v990, 0
    %v993 = vperm.slane %v990, 1
    %v994 = vperm.slane %v990, 2
    %v995 = vperm.slane %v990, 3
    %v1064 = vunpack.c.l.b16 %v926
    %v1065 = vunpack.c.h.b16 %v926
    %v1066 = vunpack.c.l.b16 %v927
    %v1067 = vunpack.c.h.b16 %v927
    %v1068 = vunpack.c.l.b16 %v928
    %v1069 = vunpack.c.h.b16 %v928
    %v1070 = vunpack.c.l.b16 %v929
    %v1071 = vunpack.c.h.b16 %v929
    %v1072 = vunpack.c.l.b16 %v930
    %v1073 = vunpack.c.h.b16 %v930
    %v1074 = vunpack.c.l.b16 %v931
    %v1075 = vunpack.c.h.b16 %v931
    %v1076 = vunpack.c.l.b16 %v932
    %v1077 = vunpack.c.h.b16 %v932
    %v1078 = vunpack.c.l.b16 %v933
    %v1079 = vunpack.c.h.b16 %v933
    %v1080 = vunpack.c.l.b16 %v934
    %v1081 = vunpack.c.h.b16 %v934
    %v1082 = vunpack.c.l.b16 %v935
    %v1083 = vunpack.c.h.b16 %v935
    %v1084 = vunpack.c.l.b16 %v936
    %v1085 = vunpack.c.h.b16 %v936
    %v1086 = vunpack.c.l.b16 %v937
    %v1087 = vunpack.c.h.b16 %v937
    %v1088 = vunpack.c.l.b16 %v938
    %v1089 = vunpack.c.h.b16 %v938
    %v1090 = vunpack.c.l.b16 %v939
    %v1091 = vunpack.c.h.b16 %v939
    %v1092 = vunpack.c.l.b16 %v940
    %v1093 = vunpack.c.h.b16 %v940
    %v1094 = vunpack.c.l.b16 %v941
    %v1095 = vunpack.c.h.b16 %v941
    %v1096 = vunpack.c.l.b16 %v942
    %v1097 = vunpack.c.h.b16 %v942
    %v1098 = vunpack.c.l.b16 %v943
    %v1099 = vunpack.c.h.b16 %v943
    %v1100 = vunpack.c.l.b16 %v944
    %v1101 = vunpack.c.h.b16 %v944
    %v1102 = vunpack.c.l.b16 %v945
    %v1103 = vunpack.c.h.b16 %v945
    %v1104 = vunpack.c.l.b16 %v946
    %v1105 = vunpack.c.h.b16 %v946
    %v1106 = vunpack.c.l.b16 %v947
    %v1107 = vunpack.c.h.b16 %v947
    %v1108 = vunpack.c.l.b16 %v948
    %v1109 = vunpack.c.h.b16 %v948
    %v1110 = vunpack.c.l.b16 %v949
    %v1111 = vunpack.c.h.b16 %v949
    %v1112 = vunpack.c.l.b16 %v950
    %v1113 = vunpack.c.h.b16 %v950
    %v1114 = vunpack.c.l.b16 %v951
    %v1115 = vunpack.c.h.b16 %v951
    %v1116 = vunpack.c.l.b16 %v952
    %v1117 = vunpack.c.h.b16 %v952
    %v1118 = vunpack.c.l.b16 %v953
    %v1119 = vunpack.c.h.b16 %v953
    %v1120 = vunpack.c.l.b16 %v954
    %v1121 = vunpack.c.h.b16 %v954
    %v1122 = vunpack.c.l.b16 %v955
    %v1123 = vunpack.c.h.b16 %v955
    %v1124 = vunpack.c.l.b16 %v956
    %v1125 = vunpack.c.h.b16 %v956
    %v1126 = vunpack.c.l.b16 %v957
    %v1127 = vunpack.c.h.b16 %v957
    %v1128 = vunpack.c.l.b16 %v958
    %v1129 = vunpack.c.h.b16 %v958
    %v1130 = vunpack.c.l.b16 %v959
    %v1131 = vunpack.c.h.b16 %v959
    %v1132 = vunpack.c.l.b16 %v960
    %v1133 = vunpack.c.h.b16 %v960
    %v1134 = vunpack.c.l.b16 %v961
    %v1135 = vunpack.c.h.b16 %v961
    %v1136 = vunpack.c.l.b16 %v962
    %v1137 = vunpack.c.h.b16 %v962
    %v1138 = vunpack.c.l.b16 %v963
    %v1139 = vunpack.c.h.b16 %v963
    %v1140 = vunpack.c.l.b16 %v964
    %v1141 = vunpack.c.h.b16 %v964
    %v1142 = vunpack.c.l.b16 %v965
    %v1143 = vunpack.c.h.b16 %v965
    %v1144 = vunpack.c.l.b16 %v966
    %v1145 = vunpack.c.h.b16 %v966
    %v1146 = vunpack.c.l.b16 %v967
    %v1147 = vunpack.c.h.b16 %v967
    %v1148 = vunpack.c.l.b16 %v968
    %v1149 = vunpack.c.h.b16 %v968
    %v1150 = vunpack.c.l.b16 %v969
    %v1151 = vunpack.c.h.b16 %v969
    %v1152 = vunpack.c.l.b16 %v970
    %v1153 = vunpack.c.h.b16 %v970
    %v1154 = vunpack.c.l.b16 %v971
    %v1155 = vunpack.c.h.b16 %v971
    %v1156 = vunpack.c.l.b16 %v972
    %v1157 = vunpack.c.h.b16 %v972
    %v1158 = vunpack.c.l.b16 %v973
    %v1159 = vunpack.c.h.b16 %v973
    %v1160 = vunpack.c.l.b16 %v974
    %v1161 = vunpack.c.h.b16 %v974
    %v1162 = vunpack.c.l.b16 %v975
    %v1163 = vunpack.c.h.b16 %v975
    %v1164 = vunpack.c.l.b16 %v976
    %v1165 = vunpack.c.h.b16 %v976
    %v1166 = vunpack.c.l.b16 %v977
    %v1167 = vunpack.c.h.b16 %v977
    %v1168 = vunpack.c.l.b16 %v978
    %v1169 = vunpack.c.h.b16 %v978
    %v1170 = vunpack.c.l.b16 %v979
    %v1171 = vunpack.c.h.b16 %v979
    %v1172 = vunpack.c.l.b16 %v980
    %v1173 = vunpack.c.h.b16 %v980
    %v1174 = vunpack.c.l.b16 %v981
    %v1175 = vunpack.c.h.b16 %v981
    %v1176 = vunpack.c.l.b16 %v982
    %v1177 = vunpack.c.h.b16 %v982
    %v1178 = vunpack.c.l.b16 %v983
    %v1179 = vunpack.c.h.b16 %v983
    %v1180 = vunpack.c.l.b16 %v984
    %v1181 = vunpack.c.h.b16 %v984
    %v1182 = vunpack.c.l.b16 %v985
    %v1183 = vunpack.c.h.b16 %v985
    %v1184 = vunpack.c.l.b16 %v986
    %v1185 = vunpack.c.h.b16 %v986
    %v1186 = vunpack.c.l.b16 %v987
    %v1187 = vunpack.c.h.b16 %v987
    %v1188 = vunpack.c.l.b16 %v988
    %v1189 = vunpack.c.h.b16 %v988
    %v1190 = vunpack.c.l.b16 %v989
    %v1191 = vunpack.c.h.b16 %v989
    %v1192 = vpack.c.b16 %v1068, %v1064
    %v1193 = vpack.c.b16 %v1069, %v1065
    %v1194 = vpack.c.b16 %v1070, %v1066
    %v1195 = vpack.c.b16 %v1071, %v1067
    %v1196 = vpack.c.b16 %v1076, %v1072
    %v1197 = vpack.c.b16 %v1077, %v1073
    %v1198 = vpack.c.b16 %v1078, %v1074
    %v1199 = vpack.c.b16 %v1079, %v1075
    %v1200 = vpack.c.b16 %v1084, %v1080
    %v1201 = vpack.c.b16 %v1085, %v1081
    %v1202 = vpack.c.b16 %v1086, %v1082
    %v1203 = vpack.c.b16 %v1087, %v1083
    %v1204 = vpack.c.b16 %v1092, %v1088
    %v1205 = vpack.c.b16 %v1093, %v1089
    %v1206 = vpack.c.b16 %v1094, %v1090
    %v1207 = vpack.c.b16 %v1095, %v1091
    %v1208 = vpack.c.b16 %v1100, %v1096
    %v1209 = vpack.c.b16 %v1101, %v1097
    %v1210 = vpack.c.b16 %v1102, %v1098
    %v1211 = vpack.c.b16 %v1103, %v1099
    %v1212 = vpack.c.b16 %v1108, %v1104
    %v1213 = vpack.c.b16 %v1109, %v1105
    %v1214 = vpack.c.b16 %v1110, %v1106
    %v1215 = vpack.c.b16 %v1111, %v1107
    %v1216 = vpack.c.b16 %v1116, %v1112
    %v1217 = vpack.c.b16 %v1117, %v1113
    %v1218 = vpack.c.b16 %v1118, %v1114
    %v1219 = vpack.c.b16 %v1119, %v1115
    %v1220 = vpack.c.b16 %v1124, %v1120
    %v1221 = vpack.c.b16 %v1125, %v1121
    %v1222 = vpack.c.b16 %v1126, %v1122
    %v1223 = vpack.c.b16 %v1127, %v1123
    %v1224 = vpack.c.b16 %v1132, %v1128
    %v1225 = vpack.c.b16 %v1133, %v1129
    %v1226 = vpack.c.b16 %v1134, %v1130
    %v1227 = vpack.c.b16 %v1135, %v1131
    %v1228 = vpack.c.b16 %v1140, %v1136
    %v1229 = vpack.c.b16 %v1141, %v1137
    %v1230 = vpack.c.b16 %v1142, %v1138
    %v1231 = vpack.c.b16 %v1143, %v1139
    %v1232 = vpack.c.b16 %v1148, %v1144
    %v1233 = vpack.c.b16 %v1149, %v1145
    %v1234 = vpack.c.b16 %v1150, %v1146
    %v1235 = vpack.c.b16 %v1151, %v1147
    %v1236 = vpack.c.b16 %v1156, %v1152
    %v1237 = vpack.c.b16 %v1157, %v1153
    %v1238 = vpack.c.b16 %v1158, %v1154
    %v1239 = vpack.c.b16 %v1159, %v1155
    %v1240 = vpack.c.b16 %v1164, %v1160
    %v1241 = vpack.c.b16 %v1165, %v1161
    %v1242 = vpack.c.b16 %v1166, %v1162
    %v1243 = vpack.c.b16 %v1167, %v1163
    %v1244 = vpack.c.b16 %v1172, %v1168
    %v1245 = vpack.c.b16 %v1173, %v1169
    %v1246 = vpack.c.b16 %v1174, %v1170
    %v1247 = vpack.c.b16 %v1175, %v1171
    %v1248 = vpack.c.b16 %v1180, %v1176
    %v1249 = vpack.c.b16 %v1181, %v1177
    %v1250 = vpack.c.b16 %v1182, %v1178
    %v1251 = vpack.c.b16 %v1183, %v1179
    %v1252 = vpack.c.b16 %v1188, %v1184
    %v1253 = vpack.c.b16 %v1189, %v1185
    %v1254 = vpack.c.b16 %v1190, %v1186
    %v1255 = vpack.c.b16 %v1191, %v1187
    %1320 = vmatpush.bf16.msra.mxu0 %v1220
    %1321 = vmatpush.bf16.msra.mxu0 %v1216
    %1322 = vmatpush.bf16.msra.mxu0 %v1212
    %1323 = vmatpush.bf16.msra.mxu0 %v1208
    %1324 = vmatpush.bf16.msra.mxu0 %v1204
    %1325 = vmatpush.bf16.msra.mxu0 %v1200
    %1326 = vmatpush.bf16.msra.mxu0 %v1196
    %1327 = vmatpush.bf16.msra.mxu0 %v1192
    %1328 = vmatmul.bf16.gmra.mxu0 %v925
    %v1329 = vpop.f32.mrf.mxu0
    %v1330 = vadd.f32 %v992, %v1329
    %v1331 = vpop.f32.mrf.mxu0
    %1332 = vdwg.mxu0
    %1333 = vmatpush.bf16.msra.mxu0 %v1252
    %1334 = vmatpush.bf16.msra.mxu0 %v1248
    %1335 = vmatpush.bf16.msra.mxu0 %v1244
    %1336 = vmatpush.bf16.msra.mxu0 %v1240
    %1337 = vmatpush.bf16.msra.mxu0 %v1236
    %1338 = vmatpush.bf16.msra.mxu0 %v1232
    %1339 = vmatpush.bf16.msra.mxu0 %v1228
    %1340 = vmatpush.bf16.msra.mxu0 %v1224
    %1341 = vmatmul.bf16.gmra.mxu0 0
    %v1342 = vpop.f32.mrf.mxu0
    %v1343 = vadd.f32 %v1330, %v1342
    %v1344 = vpop.f32.mrf.mxu0
    %1345 = vdwg.mxu0
    %1346 = vmatpush.bf16.msra.mxu0 %v1221
    %1347 = vmatpush.bf16.msra.mxu0 %v1217
    %1348 = vmatpush.bf16.msra.mxu0 %v1213
    %1349 = vmatpush.bf16.msra.mxu0 %v1209
    %1350 = vmatpush.bf16.msra.mxu0 %v1205
    %1351 = vmatpush.bf16.msra.mxu0 %v1201
    %1352 = vmatpush.bf16.msra.mxu0 %v1197
    %1353 = vmatpush.bf16.msra.mxu0 %v1193
    %1354 = vmatmul.bf16.gmra.mxu0 %v925
    %v1355 = vpop.f32.mrf.mxu0
    %v1356 = vadd.f32 %v993, %v1355
    %v1357 = vpop.f32.mrf.mxu0
    %1358 = vdwg.mxu0
    %1359 = vmatpush.bf16.msra.mxu0 %v1253
    %1360 = vmatpush.bf16.msra.mxu0 %v1249
    %1361 = vmatpush.bf16.msra.mxu0 %v1245
    %1362 = vmatpush.bf16.msra.mxu0 %v1241
    %1363 = vmatpush.bf16.msra.mxu0 %v1237
    %1364 = vmatpush.bf16.msra.mxu0 %v1233
    %1365 = vmatpush.bf16.msra.mxu0 %v1229
    %1366 = vmatpush.bf16.msra.mxu0 %v1225
    %1367 = vmatmul.bf16.gmra.mxu0 0
    %v1368 = vpop.f32.mrf.mxu0
    %v1369 = vadd.f32 %v1356, %v1368
    %v1370 = vpop.f32.mrf.mxu0
    %1371 = vdwg.mxu0
    %1372 = vmatpush.bf16.msra.mxu0 %v1222
    %1373 = vmatpush.bf16.msra.mxu0 %v1218
    %1374 = vmatpush.bf16.msra.mxu0 %v1214
    %1375 = vmatpush.bf16.msra.mxu0 %v1210
    %1376 = vmatpush.bf16.msra.mxu0 %v1206
    %1377 = vmatpush.bf16.msra.mxu0 %v1202
    %1378 = vmatpush.bf16.msra.mxu0 %v1198
    %1379 = vmatpush.bf16.msra.mxu0 %v1194
    %1380 = vmatmul.bf16.gmra.mxu0 %v925
    %v1381 = vpop.f32.mrf.mxu0
    %v1382 = vadd.f32 %v994, %v1381
    %v1383 = vpop.f32.mrf.mxu0
    %1384 = vdwg.mxu0
    %1385 = vmatpush.bf16.msra.mxu0 %v1254
    %1386 = vmatpush.bf16.msra.mxu0 %v1250
    %1387 = vmatpush.bf16.msra.mxu0 %v1246
    %1388 = vmatpush.bf16.msra.mxu0 %v1242
    %1389 = vmatpush.bf16.msra.mxu0 %v1238
    %1390 = vmatpush.bf16.msra.mxu0 %v1234
    %1391 = vmatpush.bf16.msra.mxu0 %v1230
    %1392 = vmatpush.bf16.msra.mxu0 %v1226
    %1393 = vmatmul.bf16.gmra.mxu0 0
    %v1394 = vpop.f32.mrf.mxu0
    %v1395 = vadd.f32 %v1382, %v1394
    %v1396 = vpop.f32.mrf.mxu0
    %1397 = vdwg.mxu0
    %1398 = vmatpush.bf16.msra.mxu0 %v1223
    %1399 = vmatpush.bf16.msra.mxu0 %v1219
    %1400 = vmatpush.bf16.msra.mxu0 %v1215
    %1401 = vmatpush.bf16.msra.mxu0 %v1211
    %1402 = vmatpush.bf16.msra.mxu0 %v1207
    %1403 = vmatpush.bf16.msra.mxu0 %v1203
    %1404 = vmatpush.bf16.msra.mxu0 %v1199
    %1405 = vmatpush.bf16.msra.mxu0 %v1195
    %1406 = vmatmul.bf16.gmra.mxu0 %v925
    %v1407 = vpop.f32.mrf.mxu0
    %v1408 = vadd.f32 %v995, %v1407
    %v1409 = vpop.f32.mrf.mxu0
    %1410 = vdwg.mxu0
    %1411 = vmatpush.bf16.msra.mxu0 %v1255
    %1412 = vmatpush.bf16.msra.mxu0 %v1251
    %1413 = vmatpush.bf16.msra.mxu0 %v1247
    %1414 = vmatpush.bf16.msra.mxu0 %v1243
    %1415 = vmatpush.bf16.msra.mxu0 %v1239
    %1416 = vmatpush.bf16.msra.mxu0 %v1235
    %1417 = vmatpush.bf16.msra.mxu0 %v1231
    %1418 = vmatpush.bf16.msra.mxu0 %v1227
    %1419 = vmatmul.bf16.gmra.mxu0 0
    %v1420 = vpop.f32.mrf.mxu0
    %v1421 = vadd.f32 %v1408, %v1420
    %v1422 = vpop.f32.mrf.mxu0
    %1423 = vdwg.mxu0
    %v1424 = vsub.f32 0.0, %v1343
    %v1425 = vsub.f32 0.0, %v1369
    %v1426 = vsub.f32 0.0, %v1395
    %v1427 = vmul.f32 %v1424, 1.442695
    %v1428 = vpow.pop %v1427
    %v1429 = vmul.f32 %v1425, 1.442695
    %v1430 = vpow.pop %v1429
    %v1431 = vmul.f32 %v1426, 1.442695
    %v1432 = vpow.pop %v1431
    %v1433 = vadd.f32 %v1428, 1.0
    %v1434 = vadd.f32 %v1430, 1.0
    %v1435 = vadd.f32 %v1432, 1.0
    %v1436 = vrcp.pop %v1433
    %v1437 = vrcp.pop %v1434
    %v1438 = vrcp.pop %v1435
    %v1439 = vtanh.pop %v1421
    %v1440 = vmul.f32 %v1437, 0.0
    %v1441 = vmul.f32 %v1436, %v1439
    %v1442 = vadd.f32 %v1440, %v1441
    %v1443 = vtanh.pop %v1442
    %v1444 = vmul.f32 %v1438, %v1443
    %s1445 = smul.u32 1, 4
    %s1446 = smul.addr %s1445, 8
    %s1447 = scalar_lea.vmem [#allocation2], %s1446
    %v1448 = vld [vmem:[%s1447] sm:$0xff]
    %v1449 = vld [vmem:[%s1447 + $0x8] sm:$0xff]
    %v1450 = vld [vmem:[%s1447 + $0x10] sm:$0xff]
    %v1451 = vld [vmem:[%s1447 + $0x18] sm:$0xff]
    %1452 = vmatpush.bf16.msra.mxu0 %v812
    %1453 = vmatpush.bf16.msra.mxu0 %v808
    %1454 = vmatpush.bf16.msra.mxu0 %v804
    %1455 = vmatpush.bf16.msra.mxu0 %v800
    %1456 = vmatpush.bf16.msra.mxu0 %v796
    %1457 = vmatpush.bf16.msra.mxu0 %v792
    %1458 = vmatpush.bf16.msra.mxu0 %v788
    %1459 = vmatpush.bf16.msra.mxu0 %v784
    %1460 = vmatmul.bf16.gmra.mxu0 %v925
    %v1461 = vpop.f32.mrf.mxu0
    %v1462 = vadd.f32 0.0, %v1461
    %v1463 = vpop.f32.mrf.mxu0
    %1464 = vdwg.mxu0
    %1465 = vmatpush.bf16.msra.mxu0 %v813
    %1466 = vmatpush.bf16.msra.mxu0 %v809
    %1467 = vmatpush.bf16.msra.mxu0 %v805
    %1468 = vmatpush.bf16.msra.mxu0 %v801
    %1469 = vmatpush.bf16.msra.mxu0 %v797
    %1470 = vmatpush.bf16.msra.mxu0 %v793
    %1471 = vmatpush.bf16.msra.mxu0 %v789
    %1472 = vmatpush.bf16.msra.mxu0 %v785
    %1473 = vmatmul.bf16.gmra.mxu0 %v925
    %v1474 = vpop.f32.mrf.mxu0
    %v1475 = vadd.f32 0.0, %v1474
    %v1476 = vpop.f32.mrf.mxu0
    %1477 = vdwg.mxu0
    %1478 = vmatpush.bf16.msra.mxu0 %v814
    %1479 = vmatpush.bf16.msra.mxu0 %v810
    %1480 = vmatpush.bf16.msra.mxu0 %v806
    %1481 = vmatpush.bf16.msra.mxu0 %v802
    %1482 = vmatpush.bf16.msra.mxu0 %v798
    %1483 = vmatpush.bf16.msra.mxu0 %v794
    %1484 = vmatpush.bf16.msra.mxu0 %v790
    %1485 = vmatpush.bf16.msra.mxu0 %v786
    %1486 = vmatmul.bf16.gmra.mxu0 %v925
    %v1487 = vpop.f32.mrf.mxu0
    %v1488 = vadd.f32 0.0, %v1487
    %v1489 = vpop.f32.mrf.mxu0
    %1490 = vdwg.mxu0
    %1491 = vmatpush.bf16.msra.mxu0 %v815
    %1492 = vmatpush.bf16.msra.mxu0 %v811
    %1493 = vmatpush.bf16.msra.mxu0 %v807
    %1494 = vmatpush.bf16.msra.mxu0 %v803
    %1495 = vmatpush.bf16.msra.mxu0 %v799
    %1496 = vmatpush.bf16.msra.mxu0 %v795
    %1497 = vmatpush.bf16.msra.mxu0 %v791
    %1498 = vmatpush.bf16.msra.mxu0 %v787
    %1499 = vmatmul.bf16.gmra.mxu0 %v925
    %v1500 = vpop.f32.mrf.mxu0
    %v1501 = vadd.f32 0.0, %v1500
    %v1502 = vpop.f32.mrf.mxu0
    %1503 = vdwg.mxu0
    %v1504 = vadd.f32 %v1448, %v1462
    %v1505 = vadd.f32 %v1449, %v1475
    %v1506 = vadd.f32 %v1450, %v1488
    %v1507 = vadd.f32 %v1451, %v1501
    %v1508 = vsub.f32 0.0, %v1504
    %v1509 = vsub.f32 0.0, %v1505
    %v1510 = vsub.f32 0.0, %v1506
    %v1511 = vmul.f32 %v1508, 1.442695
    %v1512 = vpow.pop %v1511
    %v1513 = vmul.f32 %v1509, 1.442695
    %v1514 = vpow.pop %v1513
    %v1515 = vmul.f32 %v1510, 1.442695
    %v1516 = vpow.pop %v1515
    %v1517 = vadd.f32 %v1512, 1.0
    %v1518 = vadd.f32 %v1514, 1.0
    %v1519 = vadd.f32 %v1516, 1.0
    %v1520 = vrcp.pop %v1517
    %v1521 = vrcp.pop %v1518
    %v1522 = vrcp.pop %v1519
    %v1523 = vtanh.pop %v1507
    %v1524 = vmul.f32 %v1521, %v922
    %v1525 = vmul.f32 %v1520, %v1523
    %v1526 = vadd.f32 %v1524, %v1525
    %v1527 = vtanh.pop %v1526
    %v1528 = vmul.f32 %v1522, %v1527
    %v1529 = vpack.c.bf16 %v1528, %v1528
    %v1530 = vpack.c.bf16 %v1444, %v1444
    %1531 = vmatpush.bf16.msra.mxu0 %v1220
    %1532 = vmatpush.bf16.msra.mxu0 %v1216
    %1533 = vmatpush.bf16.msra.mxu0 %v1212
    %1534 = vmatpush.bf16.msra.mxu0 %v1208
    %1535 = vmatpush.bf16.msra.mxu0 %v1204
    %1536 = vmatpush.bf16.msra.mxu0 %v1200
    %1537 = vmatpush.bf16.msra.mxu0 %v1196
    %1538 = vmatpush.bf16.msra.mxu0 %v1192
    %1539 = vmatmul.bf16.gmra.mxu0 %v1529
    %v1540 = vpop.f32.mrf.mxu0
    %v1541 = vadd.f32 %v992, %v1540
    %v1542 = vpop.f32.mrf.mxu0
    %1543 = vdwg.mxu0
    %1544 = vmatpush.bf16.msra.mxu0 %v1252
    %1545 = vmatpush.bf16.msra.mxu0 %v1248
    %1546 = vmatpush.bf16.msra.mxu0 %v1244
    %1547 = vmatpush.bf16.msra.mxu0 %v1240
    %1548 = vmatpush.bf16.msra.mxu0 %v1236
    %1549 = vmatpush.bf16.msra.mxu0 %v1232
    %1550 = vmatpush.bf16.msra.mxu0 %v1228
    %1551 = vmatpush.bf16.msra.mxu0 %v1224
    %1552 = vmatmul.bf16.gmra.mxu0 %v1530
    %v1553 = vpop.f32.mrf.mxu0
    %v1554 = vadd.f32 %v1541, %v1553
    %v1555 = vpop.f32.mrf.mxu0
    %1556 = vdwg.mxu0
    %1557 = vmatpush.bf16.msra.mxu0 %v1221
    %1558 = vmatpush.bf16.msra.mxu0 %v1217
    %1559 = vmatpush.bf16.msra.mxu0 %v1213
    %1560 = vmatpush.bf16.msra.mxu0 %v1209
    %1561 = vmatpush.bf16.msra.mxu0 %v1205
    %1562 = vmatpush.bf16.msra.mxu0 %v1201
    %1563 = vmatpush.bf16.msra.mxu0 %v1197
    %1564 = vmatpush.bf16.msra.mxu0 %v1193
    %1565 = vmatmul.bf16.gmra.mxu0 %v1529
    %v1566 = vpop.f32.mrf.mxu0
    %v1567 = vadd.f32 %v993, %v1566
    %v1568 = vpop.f32.mrf.mxu0
    %1569 = vdwg.mxu0
    %1570 = vmatpush.bf16.msra.mxu0 %v1253
    %1571 = vmatpush.bf16.msra.mxu0 %v1249
    %1572 = vmatpush.bf16.msra.mxu0 %v1245
    %1573 = vmatpush.bf16.msra.mxu0 %v1241
    %1574 = vmatpush.bf16.msra.mxu0 %v1237
    %1575 = vmatpush.bf16.msra.mxu0 %v1233
    %1576 = vmatpush.bf16.msra.mxu0 %v1229
    %1577 = vmatpush.bf16.msra.mxu0 %v1225
    %1578 = vmatmul.bf16.gmra.mxu0 %v1530
    %v1579 = vpop.f32.mrf.mxu0
    %v1580 = vadd.f32 %v1567, %v1579
    %v1581 = vpop.f32.mrf.mxu0
    %1582 = vdwg.mxu0
    %1583 = vmatpush.bf16.msra.mxu0 %v1222
    %1584 = vmatpush.bf16.msra.mxu0 %v1218
    %1585 = vmatpush.bf16.msra.mxu0 %v1214
    %1586 = vmatpush.bf16.msra.mxu0 %v1210
    %1587 = vmatpush.bf16.msra.mxu0 %v1206
    %1588 = vmatpush.bf16.msra.mxu0 %v1202
    %1589 = vmatpush.bf16.msra.mxu0 %v1198
    %1590 = vmatpush.bf16.msra.mxu0 %v1194
    %1591 = vmatmul.bf16.gmra.mxu0 %v1529
    %v1592 = vpop.f32.mrf.mxu0
    %v1593 = vadd.f32 %v994, %v1592
    %v1594 = vpop.f32.mrf.mxu0
    %1595 = vdwg.mxu0
    %1596 = vmatpush.bf16.msra.mxu0 %v1254
    %1597 = vmatpush.bf16.msra.mxu0 %v1250
    %1598 = vmatpush.bf16.msra.mxu0 %v1246
    %1599 = vmatpush.bf16.msra.mxu0 %v1242
    %1600 = vmatpush.bf16.msra.mxu0 %v1238
    %1601 = vmatpush.bf16.msra.mxu0 %v1234
    %1602 = vmatpush.bf16.msra.mxu0 %v1230
    %1603 = vmatpush.bf16.msra.mxu0 %v1226
    %1604 = vmatmul.bf16.gmra.mxu0 %v1530
    %v1605 = vpop.f32.mrf.mxu0
    %v1606 = vadd.f32 %v1593, %v1605
    %v1607 = vpop.f32.mrf.mxu0
    %1608 = vdwg.mxu0
    %1609 = vmatpush.bf16.msra.mxu0 %v1223
    %1610 = vmatpush.bf16.msra.mxu0 %v1219
    %1611 = vmatpush.bf16.msra.mxu0 %v1215
    %1612 = vmatpush.bf16.msra.mxu0 %v1211
    %1613 = vmatpush.bf16.msra.mxu0 %v1207
    %1614 = vmatpush.bf16.msra.mxu0 %v1203
    %1615 = vmatpush.bf16.msra.mxu0 %v1199
    %1616 = vmatpush.bf16.msra.mxu0 %v1195
    %1617 = vmatmul.bf16.gmra.mxu0 %v1529
    %v1618 = vpop.f32.mrf.mxu0
    %v1619 = vadd.f32 %v995, %v1618
    %v1620 = vpop.f32.mrf.mxu0
    %1621 = vdwg.mxu0
    %1622 = vmatpush.bf16.msra.mxu0 %v1255
    %1623 = vmatpush.bf16.msra.mxu0 %v1251
    %1624 = vmatpush.bf16.msra.mxu0 %v1247
    %1625 = vmatpush.bf16.msra.mxu0 %v1243
    %1626 = vmatpush.bf16.msra.mxu0 %v1239
    %1627 = vmatpush.bf16.msra.mxu0 %v1235
    %1628 = vmatpush.bf16.msra.mxu0 %v1231
    %1629 = vmatpush.bf16.msra.mxu0 %v1227
    %1630 = vmatmul.bf16.gmra.mxu0 %v1530
    %v1631 = vpop.f32.mrf.mxu0
    %v1632 = vadd.f32 %v1619, %v1631
    %v1633 = vpop.f32.mrf.mxu0
    %1634 = vdwg.mxu0
    %v1635 = vsub.f32 0.0, %v1554
    %v1636 = vsub.f32 0.0, %v1580
    %v1637 = vsub.f32 0.0, %v1606
    %v1638 = vmul.f32 %v1635, 1.442695
    %v1639 = vpow.pop %v1638
    %v1640 = vmul.f32 %v1636, 1.442695
    %v1641 = vpow.pop %v1640
    %v1642 = vmul.f32 %v1637, 1.442695
    %v1643 = vpow.pop %v1642
    %v1644 = vadd.f32 %v1639, 1.0
    %v1645 = vadd.f32 %v1641, 1.0
    %v1646 = vadd.f32 %v1643, 1.0
    %v1647 = vrcp.pop %v1644
    %v1648 = vrcp.pop %v1645
    %v1649 = vrcp.pop %v1646
    %v1650 = vtanh.pop %v1632
    %v1651 = vmul.f32 %v1648, %v1442
    %v1652 = vmul.f32 %v1647, %v1650
    %v1653 = vadd.f32 %v1651, %v1652
    %v1654 = vtanh.pop %v1653
    %v1655 = vmul.f32 %v1649, %v1654
    %s1656 = smul.u32 2, 4
    %s1657 = smul.addr %s1656, 8
    %s1658 = scalar_lea.vmem [#allocation2], %s1657
    %v1659 = vld [vmem:[%s1658] sm:$0xff]
    %v1660 = vld [vmem:[%s1658 + $0x8] sm:$0xff]
    %v1661 = vld [vmem:[%s1658 + $0x10] sm:$0xff]
    %v1662 = vld [vmem:[%s1658 + $0x18] sm:$0xff]
    %1663 = vmatpush.bf16.msra.mxu0 %v812
    %1664 = vmatpush.bf16.msra.mxu0 %v808
    %1665 = vmatpush.bf16.msra.mxu0 %v804
    %1666 = vmatpush.bf16.msra.mxu0 %v800
    %1667 = vmatpush.bf16.msra.mxu0 %v796
    %1668 = vmatpush.bf16.msra.mxu0 %v792
    %1669 = vmatpush.bf16.msra.mxu0 %v788
    %1670 = vmatpush.bf16.msra.mxu0 %v784
    %1671 = vmatmul.bf16.gmra.mxu0 %v1529
    %v1672 = vpop.f32.mrf.mxu0
    %v1673 = vadd.f32 0.0, %v1672
    %v1674 = vpop.f32.mrf.mxu0
    %1675 = vdwg.mxu0
    %1676 = vmatpush.bf16.msra.mxu0 %v813
    %1677 = vmatpush.bf16.msra.mxu0 %v809
    %1678 = vmatpush.bf16.msra.mxu0 %v805
    %1679 = vmatpush.bf16.msra.mxu0 %v801
    %1680 = vmatpush.bf16.msra.mxu0 %v797
    %1681 = vmatpush.bf16.msra.mxu0 %v793
    %1682 = vmatpush.bf16.msra.mxu0 %v789
    %1683 = vmatpush.bf16.msra.mxu0 %v785
    %1684 = vmatmul.bf16.gmra.mxu0 %v1529
    %v1685 = vpop.f32.mrf.mxu0
    %v1686 = vadd.f32 0.0, %v1685
    %v1687 = vpop.f32.mrf.mxu0
    %1688 = vdwg.mxu0
    %1689 = vmatpush.bf16.msra.mxu0 %v814
    %1690 = vmatpush.bf16.msra.mxu0 %v810
    %1691 = vmatpush.bf16.msra.mxu0 %v806
    %1692 = vmatpush.bf16.msra.mxu0 %v802
    %1693 = vmatpush.bf16.msra.mxu0 %v798
    %1694 = vmatpush.bf16.msra.mxu0 %v794
    %1695 = vmatpush.bf16.msra.mxu0 %v790
    %1696 = vmatpush.bf16.msra.mxu0 %v786
    %1697 = vmatmul.bf16.gmra.mxu0 %v1529
    %v1698 = vpop.f32.mrf.mxu0
    %v1699 = vadd.f32 0.0, %v1698
    %v1700 = vpop.f32.mrf.mxu0
    %1701 = vdwg.mxu0
    %1702 = vmatpush.bf16.msra.mxu0 %v815
    %1703 = vmatpush.bf16.msra.mxu0 %v811
    %1704 = vmatpush.bf16.msra.mxu0 %v807
    %1705 = vmatpush.bf16.msra.mxu0 %v803
    %1706 = vmatpush.bf16.msra.mxu0 %v799
    %1707 = vmatpush.bf16.msra.mxu0 %v795
    %1708 = vmatpush.bf16.msra.mxu0 %v791
    %1709 = vmatpush.bf16.msra.mxu0 %v787
    %1710 = vmatmul.bf16.gmra.mxu0 %v1529
    %v1711 = vpop.f32.mrf.mxu0
    %v1712 = vadd.f32 0.0, %v1711
    %v1713 = vpop.f32.mrf.mxu0
    %1714 = vdwg.mxu0
    %v1715 = vadd.f32 %v1659, %v1673
    %v1716 = vadd.f32 %v1660, %v1686
    %v1717 = vadd.f32 %v1661, %v1699
    %v1718 = vadd.f32 %v1662, %v1712
    %v1719 = vsub.f32 0.0, %v1715
    %v1720 = vsub.f32 0.0, %v1716
    %v1721 = vsub.f32 0.0, %v1717
    %v1722 = vmul.f32 %v1719, 1.442695
    %v1723 = vpow.pop %v1722
    %v1724 = vmul.f32 %v1720, 1.442695
    %v1725 = vpow.pop %v1724
    %v1726 = vmul.f32 %v1721, 1.442695
    %v1727 = vpow.pop %v1726
    %v1728 = vadd.f32 %v1723, 1.0
    %v1729 = vadd.f32 %v1725, 1.0
    %v1730 = vadd.f32 %v1727, 1.0
    %v1731 = vrcp.pop %v1728
    %v1732 = vrcp.pop %v1729
    %v1733 = vrcp.pop %v1730
    %v1734 = vtanh.pop %v1718
    %v1735 = vmul.f32 %v1732, %v1526
    %v1736 = vmul.f32 %v1731, %v1734
    %v1737 = vadd.f32 %v1735, %v1736
    %v1738 = vtanh.pop %v1737
    %v1739 = vmul.f32 %v1733, %v1738
    %v1740 = vpack.c.bf16 %v1739, %v1739
    %v1741 = vpack.c.bf16 %v1655, %v1655
    %1742 = vmatpush.bf16.msra.mxu0 %v1220
    %1743 = vmatpush.bf16.msra.mxu0 %v1216
    %1744 = vmatpush.bf16.msra.mxu0 %v1212
    %1745 = vmatpush.bf16.msra.mxu0 %v1208
    %1746 = vmatpush.bf16.msra.mxu0 %v1204
    %1747 = vmatpush.bf16.msra.mxu0 %v1200
    %1748 = vmatpush.bf16.msra.mxu0 %v1196
    %1749 = vmatpush.bf16.msra.mxu0 %v1192
    %1750 = vmatmul.bf16.gmra.mxu0 %v1740
    %v1751 = vpop.f32.mrf.mxu0
    %v1752 = vadd.f32 %v992, %v1751
    %v1753 = vpop.f32.mrf.mxu0
    %1754 = vdwg.mxu0
    %1755 = vmatpush.bf16.msra.mxu0 %v1252
    %1756 = vmatpush.bf16.msra.mxu0 %v1248
    %1757 = vmatpush.bf16.msra.mxu0 %v1244
    %1758 = vmatpush.bf16.msra.mxu0 %v1240
    %1759 = vmatpush.bf16.msra.mxu0 %v1236
    %1760 = vmatpush.bf16.msra.mxu0 %v1232
    %1761 = vmatpush.bf16.msra.mxu0 %v1228
    %1762 = vmatpush.bf16.msra.mxu0 %v1224
    %1763 = vmatmul.bf16.gmra.mxu0 %v1741
    %v1764 = vpop.f32.mrf.mxu0
    %v1765 = vadd.f32 %v1752, %v1764
    %v1766 = vpop.f32.mrf.mxu0
    %1767 = vdwg.mxu0
    %1768 = vmatpush.bf16.msra.mxu0 %v1221
    %1769 = vmatpush.bf16.msra.mxu0 %v1217
    %1770 = vmatpush.bf16.msra.mxu0 %v1213
    %1771 = vmatpush.bf16.msra.mxu0 %v1209
    %1772 = vmatpush.bf16.msra.mxu0 %v1205
    %1773 = vmatpush.bf16.msra.mxu0 %v1201
    %1774 = vmatpush.bf16.msra.mxu0 %v1197
    %1775 = vmatpush.bf16.msra.mxu0 %v1193
    %1776 = vmatmul.bf16.gmra.mxu0 %v1740
    %v1777 = vpop.f32.mrf.mxu0
    %v1778 = vadd.f32 %v993, %v1777
    %v1779 = vpop.f32.mrf.mxu0
    %1780 = vdwg.mxu0
    %1781 = vmatpush.bf16.msra.mxu0 %v1253
    %1782 = vmatpush.bf16.msra.mxu0 %v1249
    %1783 = vmatpush.bf16.msra.mxu0 %v1245
    %1784 = vmatpush.bf16.msra.mxu0 %v1241
    %1785 = vmatpush.bf16.msra.mxu0 %v1237
    %1786 = vmatpush.bf16.msra.mxu0 %v1233
    %1787 = vmatpush.bf16.msra.mxu0 %v1229
    %1788 = vmatpush.bf16.msra.mxu0 %v1225
    %1789 = vmatmul.bf16.gmra.mxu0 %v1741
    %v1790 = vpop.f32.mrf.mxu0
    %v1791 = vadd.f32 %v1778, %v1790
    %v1792 = vpop.f32.mrf.mxu0
    %1793 = vdwg.mxu0
    %1794 = vmatpush.bf16.msra.mxu0 %v1222
    %1795 = vmatpush.bf16.msra.mxu0 %v1218
    %1796 = vmatpush.bf16.msra.mxu0 %v1214
    %1797 = vmatpush.bf16.msra.mxu0 %v1210
    %1798 = vmatpush.bf16.msra.mxu0 %v1206
    %1799 = vmatpush.bf16.msra.mxu0 %v1202
    %1800 = vmatpush.bf16.msra.mxu0 %v1198
    %1801 = vmatpush.bf16.msra.mxu0 %v1194
    %1802 = vmatmul.bf16.gmra.mxu0 %v1740
    %v1803 = vpop.f32.mrf.mxu0
    %v1804 = vadd.f32 %v994, %v1803
    %v1805 = vpop.f32.mrf.mxu0
    %1806 = vdwg.mxu0
    %1807 = vmatpush.bf16.msra.mxu0 %v1254
    %1808 = vmatpush.bf16.msra.mxu0 %v1250
    %1809 = vmatpush.bf16.msra.mxu0 %v1246
    %1810 = vmatpush.bf16.msra.mxu0 %v1242
    %1811 = vmatpush.bf16.msra.mxu0 %v1238
    %1812 = vmatpush.bf16.msra.mxu0 %v1234
    %1813 = vmatpush.bf16.msra.mxu0 %v1230
    %1814 = vmatpush.bf16.msra.mxu0 %v1226
    %1815 = vmatmul.bf16.gmra.mxu0 %v1741
    %v1816 = vpop.f32.mrf.mxu0
    %v1817 = vadd.f32 %v1804, %v1816
    %v1818 = vpop.f32.mrf.mxu0
    %1819 = vdwg.mxu0
    %1820 = vmatpush.bf16.msra.mxu0 %v1223
    %1821 = vmatpush.bf16.msra.mxu0 %v1219
    %1822 = vmatpush.bf16.msra.mxu0 %v1215
    %1823 = vmatpush.bf16.msra.mxu0 %v1211
    %1824 = vmatpush.bf16.msra.mxu0 %v1207
    %1825 = vmatpush.bf16.msra.mxu0 %v1203
    %1826 = vmatpush.bf16.msra.mxu0 %v1199
    %1827 = vmatpush.bf16.msra.mxu0 %v1195
    %1828 = vmatmul.bf16.gmra.mxu0 %v1740
    %v1829 = vpop.f32.mrf.mxu0
    %v1830 = vadd.f32 %v995, %v1829
    %v1831 = vpop.f32.mrf.mxu0
    %1832 = vdwg.mxu0
    %1833 = vmatpush.bf16.msra.mxu0 %v1255
    %1834 = vmatpush.bf16.msra.mxu0 %v1251
    %1835 = vmatpush.bf16.msra.mxu0 %v1247
    %1836 = vmatpush.bf16.msra.mxu0 %v1243
    %1837 = vmatpush.bf16.msra.mxu0 %v1239
    %1838 = vmatpush.bf16.msra.mxu0 %v1235
    %1839 = vmatpush.bf16.msra.mxu0 %v1231
    %1840 = vmatpush.bf16.msra.mxu0 %v1227
    %1841 = vmatmul.bf16.gmra.mxu0 %v1741
    %v1842 = vpop.f32.mrf.mxu0
    %v1843 = vadd.f32 %v1830, %v1842
    %v1844 = vpop.f32.mrf.mxu0
    %1845 = vdwg.mxu0
    %v1846 = vsub.f32 0.0, %v1765
    %v1847 = vsub.f32 0.0, %v1791
    %v1848 = vsub.f32 0.0, %v1817
    %v1849 = vmul.f32 %v1846, 1.442695
    %v1850 = vpow.pop %v1849
    %v1851 = vmul.f32 %v1847, 1.442695
    %v1852 = vpow.pop %v1851
    %v1853 = vmul.f32 %v1848, 1.442695
    %v1854 = vpow.pop %v1853
    %v1855 = vadd.f32 %v1850, 1.0
    %v1856 = vadd.f32 %v1852, 1.0
    %v1857 = vadd.f32 %v1854, 1.0
    %v1858 = vrcp.pop %v1855
    %v1859 = vrcp.pop %v1856
    %v1860 = vrcp.pop %v1857
    %v1861 = vtanh.pop %v1843
    %v1862 = vmul.f32 %v1859, %v1653
    %v1863 = vmul.f32 %v1858, %v1861
    %v1864 = vadd.f32 %v1862, %v1863
    %v1865 = vtanh.pop %v1864
    %v1866 = vmul.f32 %v1860, %v1865
    %s1867 = smul.u32 3, 4
    %s1868 = smul.addr %s1867, 8
    %s1869 = scalar_lea.vmem [#allocation2], %s1868
    %v1870 = vld [vmem:[%s1869] sm:$0xff]
    %v1871 = vld [vmem:[%s1869 + $0x8] sm:$0xff]
    %v1872 = vld [vmem:[%s1869 + $0x10] sm:$0xff]
    %v1873 = vld [vmem:[%s1869 + $0x18] sm:$0xff]
    %1874 = vmatpush.bf16.msra.mxu0 %v812
    %1875 = vmatpush.bf16.msra.mxu0 %v808
    %1876 = vmatpush.bf16.msra.mxu0 %v804
    %1877 = vmatpush.bf16.msra.mxu0 %v800
    %1878 = vmatpush.bf16.msra.mxu0 %v796
    %1879 = vmatpush.bf16.msra.mxu0 %v792
    %1880 = vmatpush.bf16.msra.mxu0 %v788
    %1881 = vmatpush.bf16.msra.mxu0 %v784
    %1882 = vmatmul.bf16.gmra.mxu0 %v1740
    %v1883 = vpop.f32.mrf.mxu0
    %v1884 = vadd.f32 0.0, %v1883
    %v1885 = vpop.f32.mrf.mxu0
    %1886 = vdwg.mxu0
    %1887 = vmatpush.bf16.msra.mxu0 %v813
    %1888 = vmatpush.bf16.msra.mxu0 %v809
    %1889 = vmatpush.bf16.msra.mxu0 %v805
    %1890 = vmatpush.bf16.msra.mxu0 %v801
    %1891 = vmatpush.bf16.msra.mxu0 %v797
    %1892 = vmatpush.bf16.msra.mxu0 %v793
    %1893 = vmatpush.bf16.msra.mxu0 %v789
    %1894 = vmatpush.bf16.msra.mxu0 %v785
    %1895 = vmatmul.bf16.gmra.mxu0 %v1740
    %v1896 = vpop.f32.mrf.mxu0
    %v1897 = vadd.f32 0.0, %v1896
    %v1898 = vpop.f32.mrf.mxu0
    %1899 = vdwg.mxu0
    %1900 = vmatpush.bf16.msra.mxu0 %v814
    %1901 = vmatpush.bf16.msra.mxu0 %v810
    %1902 = vmatpush.bf16.msra.mxu0 %v806
    %1903 = vmatpush.bf16.msra.mxu0 %v802
    %1904 = vmatpush.bf16.msra.mxu0 %v798
    %1905 = vmatpush.bf16.msra.mxu0 %v794
    %1906 = vmatpush.bf16.msra.mxu0 %v790
    %1907 = vmatpush.bf16.msra.mxu0 %v786
    %1908 = vmatmul.bf16.gmra.mxu0 %v1740
    %v1909 = vpop.f32.mrf.mxu0
    %v1910 = vadd.f32 0.0, %v1909
    %v1911 = vpop.f32.mrf.mxu0
    %1912 = vdwg.mxu0
    %1913 = vmatpush.bf16.msra.mxu0 %v815
    %1914 = vmatpush.bf16.msra.mxu0 %v811
    %1915 = vmatpush.bf16.msra.mxu0 %v807
    %1916 = vmatpush.bf16.msra.mxu0 %v803
    %1917 = vmatpush.bf16.msra.mxu0 %v799
    %1918 = vmatpush.bf16.msra.mxu0 %v795
    %1919 = vmatpush.bf16.msra.mxu0 %v791
    %1920 = vmatpush.bf16.msra.mxu0 %v787
    %1921 = vmatmul.bf16.gmra.mxu0 %v1740
    %v1922 = vpop.f32.mrf.mxu0
    %v1923 = vadd.f32 0.0, %v1922
    %v1924 = vpop.f32.mrf.mxu0
    %1925 = vdwg.mxu0
    %v1926 = vadd.f32 %v1870, %v1884
    %v1927 = vadd.f32 %v1871, %v1897
    %v1928 = vadd.f32 %v1872, %v1910
    %v1929 = vadd.f32 %v1873, %v1923
    %v1930 = vsub.f32 0.0, %v1926
    %v1931 = vsub.f32 0.0, %v1927
    %v1932 = vsub.f32 0.0, %v1928
    %v1933 = vmul.f32 %v1930, 1.442695
    %v1934 = vpow.pop %v1933
    %v1935 = vmul.f32 %v1931, 1.442695
    %v1936 = vpow.pop %v1935
    %v1937 = vmul.f32 %v1932, 1.442695
    %v1938 = vpow.pop %v1937
    %v1939 = vadd.f32 %v1934, 1.0
    %v1940 = vadd.f32 %v1936, 1.0
    %v1941 = vadd.f32 %v1938, 1.0
    %v1942 = vrcp.pop %v1939
    %v1943 = vrcp.pop %v1940
    %v1944 = vrcp.pop %v1941
    %v1945 = vtanh.pop %v1929
    %v1946 = vmul.f32 %v1943, %v1737
    %v1947 = vmul.f32 %v1942, %v1945
    %v1948 = vadd.f32 %v1946, %v1947
    %v1949 = vtanh.pop %v1948
    %v1950 = vmul.f32 %v1944, %v1949
    %v1951 = vpack.c.bf16 %v1950, %v1950
    %v1952 = vpack.c.bf16 %v1866, %v1866
    %1953 = vmatpush.bf16.msra.mxu0 %v1220
    %1954 = vmatpush.bf16.msra.mxu0 %v1216
    %1955 = vmatpush.bf16.msra.mxu0 %v1212
    %1956 = vmatpush.bf16.msra.mxu0 %v1208
    %1957 = vmatpush.bf16.msra.mxu0 %v1204
    %1958 = vmatpush.bf16.msra.mxu0 %v1200
    %1959 = vmatpush.bf16.msra.mxu0 %v1196
    %1960 = vmatpush.bf16.msra.mxu0 %v1192
    %1961 = vmatmul.bf16.gmra.mxu0 %v1951
    %v1962 = vpop.f32.mrf.mxu0
    %v1963 = vadd.f32 %v992, %v1962
    %v1964 = vpop.f32.mrf.mxu0
    %1965 = vdwg.mxu0
    %1966 = vmatpush.bf16.msra.mxu0 %v1252
    %1967 = vmatpush.bf16.msra.mxu0 %v1248
    %1968 = vmatpush.bf16.msra.mxu0 %v1244
    %1969 = vmatpush.bf16.msra.mxu0 %v1240
    %1970 = vmatpush.bf16.msra.mxu0 %v1236
    %1971 = vmatpush.bf16.msra.mxu0 %v1232
    %1972 = vmatpush.bf16.msra.mxu0 %v1228
    %1973 = vmatpush.bf16.msra.mxu0 %v1224
    %1974 = vmatmul.bf16.gmra.mxu0 %v1952
    %v1975 = vpop.f32.mrf.mxu0
    %v1976 = vadd.f32 %v1963, %v1975
    %v1977 = vpop.f32.mrf.mxu0
    %1978 = vdwg.mxu0
    %1979 = vmatpush.bf16.msra.mxu0 %v1221
    %1980 = vmatpush.bf16.msra.mxu0 %v1217
    %1981 = vmatpush.bf16.msra.mxu0 %v1213
    %1982 = vmatpush.bf16.msra.mxu0 %v1209
    %1983 = vmatpush.bf16.msra.mxu0 %v1205
    %1984 = vmatpush.bf16.msra.mxu0 %v1201
    %1985 = vmatpush.bf16.msra.mxu0 %v1197
    %1986 = vmatpush.bf16.msra.mxu0 %v1193
    %1987 = vmatmul.bf16.gmra.mxu0 %v1951
    %v1988 = vpop.f32.mrf.mxu0
    %v1989 = vadd.f32 %v993, %v1988
    %v1990 = vpop.f32.mrf.mxu0
    %1991 = vdwg.mxu0
    %1992 = vmatpush.bf16.msra.mxu0 %v1253
    %1993 = vmatpush.bf16.msra.mxu0 %v1249
    %1994 = vmatpush.bf16.msra.mxu0 %v1245
    %1995 = vmatpush.bf16.msra.mxu0 %v1241
    %1996 = vmatpush.bf16.msra.mxu0 %v1237
    %1997 = vmatpush.bf16.msra.mxu0 %v1233
    %1998 = vmatpush.bf16.msra.mxu0 %v1229
    %1999 = vmatpush.bf16.msra.mxu0 %v1225
    %2000 = vmatmul.bf16.gmra.mxu0 %v1952
    %v2001 = vpop.f32.mrf.mxu0
    %v2002 = vadd.f32 %v1989, %v2001
    %v2003 = vpop.f32.mrf.mxu0
    %2004 = vdwg.mxu0
    %2005 = vmatpush.bf16.msra.mxu0 %v1222
    %2006 = vmatpush.bf16.msra.mxu0 %v1218
    %2007 = vmatpush.bf16.msra.mxu0 %v1214
    %2008 = vmatpush.bf16.msra.mxu0 %v1210
    %2009 = vmatpush.bf16.msra.mxu0 %v1206
    %2010 = vmatpush.bf16.msra.mxu0 %v1202
    %2011 = vmatpush.bf16.msra.mxu0 %v1198
    %2012 = vmatpush.bf16.msra.mxu0 %v1194
    %2013 = vmatmul.bf16.gmra.mxu0 %v1951
    %v2014 = vpop.f32.mrf.mxu0
    %v2015 = vadd.f32 %v994, %v2014
    %v2016 = vpop.f32.mrf.mxu0
    %2017 = vdwg.mxu0
    %2018 = vmatpush.bf16.msra.mxu0 %v1254
    %2019 = vmatpush.bf16.msra.mxu0 %v1250
    %2020 = vmatpush.bf16.msra.mxu0 %v1246
    %2021 = vmatpush.bf16.msra.mxu0 %v1242
    %2022 = vmatpush.bf16.msra.mxu0 %v1238
    %2023 = vmatpush.bf16.msra.mxu0 %v1234
    %2024 = vmatpush.bf16.msra.mxu0 %v1230
    %2025 = vmatpush.bf16.msra.mxu0 %v1226
    %2026 = vmatmul.bf16.gmra.mxu0 %v1952
    %v2027 = vpop.f32.mrf.mxu0
    %v2028 = vadd.f32 %v2015, %v2027
    %v2029 = vpop.f32.mrf.mxu0
    %2030 = vdwg.mxu0
    %2031 = vmatpush.bf16.msra.mxu0 %v1223
    %2032 = vmatpush.bf16.msra.mxu0 %v1219
    %2033 = vmatpush.bf16.msra.mxu0 %v1215
    %2034 = vmatpush.bf16.msra.mxu0 %v1211
    %2035 = vmatpush.bf16.msra.mxu0 %v1207
    %2036 = vmatpush.bf16.msra.mxu0 %v1203
    %2037 = vmatpush.bf16.msra.mxu0 %v1199
    %2038 = vmatpush.bf16.msra.mxu0 %v1195
    %2039 = vmatmul.bf16.gmra.mxu0 %v1951
    %v2040 = vpop.f32.mrf.mxu0
    %v2041 = vadd.f32 %v995, %v2040
    %v2042 = vpop.f32.mrf.mxu0
    %2043 = vdwg.mxu0
    %2044 = vmatpush.bf16.msra.mxu0 %v1255
    %2045 = vmatpush.bf16.msra.mxu0 %v1251
    %2046 = vmatpush.bf16.msra.mxu0 %v1247
    %2047 = vmatpush.bf16.msra.mxu0 %v1243
    %2048 = vmatpush.bf16.msra.mxu0 %v1239
    %2049 = vmatpush.bf16.msra.mxu0 %v1235
    %2050 = vmatpush.bf16.msra.mxu0 %v1231
    %2051 = vmatpush.bf16.msra.mxu0 %v1227
    %2052 = vmatmul.bf16.gmra.mxu0 %v1952
    %v2053 = vpop.f32.mrf.mxu0
    %v2054 = vadd.f32 %v2041, %v2053
    %v2055 = vpop.f32.mrf.mxu0
    %2056 = vdwg.mxu0
    %v2057 = vsub.f32 0.0, %v1976
    %v2058 = vsub.f32 0.0, %v2002
    %v2059 = vsub.f32 0.0, %v2028
    %v2060 = vmul.f32 %v2057, 1.442695
    %v2061 = vpow.pop %v2060
    %v2062 = vmul.f32 %v2058, 1.442695
    %v2063 = vpow.pop %v2062
    %v2064 = vmul.f32 %v2059, 1.442695
    %v2065 = vpow.pop %v2064
    %v2066 = vadd.f32 %v2061, 1.0
    %v2067 = vadd.f32 %v2063, 1.0
    %v2068 = vadd.f32 %v2065, 1.0
    %v2069 = vrcp.pop %v2066
    %v2070 = vrcp.pop %v2067
    %v2071 = vrcp.pop %v2068
    %v2072 = vtanh.pop %v2054
    %v2073 = vmul.f32 %v2070, %v1864
    %v2074 = vmul.f32 %v2069, %v2072
    %v2075 = vadd.f32 %v2073, %v2074
    %v2076 = vtanh.pop %v2075
    %v2077 = vmul.f32 %v2071, %v2076
    %s2078 = smul.u32 4, 4
    %s2079 = smul.addr %s2078, 8
    %s2080 = scalar_lea.vmem [#allocation2], %s2079
    %v2081 = vld [vmem:[%s2080] sm:$0xff]
    %v2082 = vld [vmem:[%s2080 + $0x8] sm:$0xff]
    %v2083 = vld [vmem:[%s2080 + $0x10] sm:$0xff]
    %v2084 = vld [vmem:[%s2080 + $0x18] sm:$0xff]
    %2085 = vmatpush.bf16.msra.mxu0 %v812
    %2086 = vmatpush.bf16.msra.mxu0 %v808
    %2087 = vmatpush.bf16.msra.mxu0 %v804
    %2088 = vmatpush.bf16.msra.mxu0 %v800
    %2089 = vmatpush.bf16.msra.mxu0 %v796
    %2090 = vmatpush.bf16.msra.mxu0 %v792
    %2091 = vmatpush.bf16.msra.mxu0 %v788
    %2092 = vmatpush.bf16.msra.mxu0 %v784
    %2093 = vmatmul.bf16.gmra.mxu0 %v1951
    %v2094 = vpop.f32.mrf.mxu0
    %v2095 = vadd.f32 0.0, %v2094
    %v2096 = vpop.f32.mrf.mxu0
    %2097 = vdwg.mxu0
    %2098 = vmatpush.bf16.msra.mxu0 %v813
    %2099 = vmatpush.bf16.msra.mxu0 %v809
    %2100 = vmatpush.bf16.msra.mxu0 %v805
    %2101 = vmatpush.bf16.msra.mxu0 %v801
    %2102 = vmatpush.bf16.msra.mxu0 %v797
    %2103 = vmatpush.bf16.msra.mxu0 %v793
    %2104 = vmatpush.bf16.msra.mxu0 %v789
    %2105 = vmatpush.bf16.msra.mxu0 %v785
    %2106 = vmatmul.bf16.gmra.mxu0 %v1951
    %v2107 = vpop.f32.mrf.mxu0
    %v2108 = vadd.f32 0.0, %v2107
    %v2109 = vpop.f32.mrf.mxu0
    %2110 = vdwg.mxu0
    %2111 = vmatpush.bf16.msra.mxu0 %v814
    %2112 = vmatpush.bf16.msra.mxu0 %v810
    %2113 = vmatpush.bf16.msra.mxu0 %v806
    %2114 = vmatpush.bf16.msra.mxu0 %v802
    %2115 = vmatpush.bf16.msra.mxu0 %v798
    %2116 = vmatpush.bf16.msra.mxu0 %v794
    %2117 = vmatpush.bf16.msra.mxu0 %v790
    %2118 = vmatpush.bf16.msra.mxu0 %v786
    %2119 = vmatmul.bf16.gmra.mxu0 %v1951
    %v2120 = vpop.f32.mrf.mxu0
    %v2121 = vadd.f32 0.0, %v2120
    %v2122 = vpop.f32.mrf.mxu0
    %2123 = vdwg.mxu0
    %2124 = vmatpush.bf16.msra.mxu0 %v815
    %2125 = vmatpush.bf16.msra.mxu0 %v811
    %2126 = vmatpush.bf16.msra.mxu0 %v807
    %2127 = vmatpush.bf16.msra.mxu0 %v803
    %2128 = vmatpush.bf16.msra.mxu0 %v799
    %2129 = vmatpush.bf16.msra.mxu0 %v795
    %2130 = vmatpush.bf16.msra.mxu0 %v791
    %2131 = vmatpush.bf16.msra.mxu0 %v787
    %2132 = vmatmul.bf16.gmra.mxu0 %v1951
    %v2133 = vpop.f32.mrf.mxu0
    %v2134 = vadd.f32 0.0, %v2133
    %v2135 = vpop.f32.mrf.mxu0
    %2136 = vdwg.mxu0
    %v2137 = vadd.f32 %v2081, %v2095
    %v2138 = vadd.f32 %v2082, %v2108
    %v2139 = vadd.f32 %v2083, %v2121
    %v2140 = vadd.f32 %v2084, %v2134
    %v2141 = vsub.f32 0.0, %v2137
    %v2142 = vsub.f32 0.0, %v2138
    %v2143 = vsub.f32 0.0, %v2139
    %v2144 = vmul.f32 %v2141, 1.442695
    %v2145 = vpow.pop %v2144
    %v2146 = vmul.f32 %v2142, 1.442695
    %v2147 = vpow.pop %v2146
    %v2148 = vmul.f32 %v2143, 1.442695
    %v2149 = vpow.pop %v2148
    %v2150 = vadd.f32 %v2145, 1.0
    %v2151 = vadd.f32 %v2147, 1.0
    %v2152 = vadd.f32 %v2149, 1.0
    %v2153 = vrcp.pop %v2150
    %v2154 = vrcp.pop %v2151
    %v2155 = vrcp.pop %v2152
    %v2156 = vtanh.pop %v2140
    %v2157 = vmul.f32 %v2154, %v1948
    %v2158 = vmul.f32 %v2153, %v2156
    %v2159 = vadd.f32 %v2157, %v2158
    %v2160 = vtanh.pop %v2159
    %v2161 = vmul.f32 %v2155, %v2160
    %v2162 = vpack.c.bf16 %v2161, %v2161
    %v2163 = vpack.c.bf16 %v2077, %v2077
    %2164 = vmatpush.bf16.msra.mxu0 %v1220
    %2165 = vmatpush.bf16.msra.mxu0 %v1216
    %2166 = vmatpush.bf16.msra.mxu0 %v1212
    %2167 = vmatpush.bf16.msra.mxu0 %v1208
    %2168 = vmatpush.bf16.msra.mxu0 %v1204
    %2169 = vmatpush.bf16.msra.mxu0 %v1200
    %2170 = vmatpush.bf16.msra.mxu0 %v1196
    %2171 = vmatpush.bf16.msra.mxu0 %v1192
    %2172 = vmatmul.bf16.gmra.mxu0 %v2162
    %v2173 = vpop.f32.mrf.mxu0
    %v2174 = vadd.f32 %v992, %v2173
    %v2175 = vpop.f32.mrf.mxu0
    %2176 = vdwg.mxu0
    %2177 = vmatpush.bf16.msra.mxu0 %v1252
    %2178 = vmatpush.bf16.msra.mxu0 %v1248
    %2179 = vmatpush.bf16.msra.mxu0 %v1244
    %2180 = vmatpush.bf16.msra.mxu0 %v1240
    %2181 = vmatpush.bf16.msra.mxu0 %v1236
    %2182 = vmatpush.bf16.msra.mxu0 %v1232
    %2183 = vmatpush.bf16.msra.mxu0 %v1228
    %2184 = vmatpush.bf16.msra.mxu0 %v1224
    %2185 = vmatmul.bf16.gmra.mxu0 %v2163
    %v2186 = vpop.f32.mrf.mxu0
    %v2187 = vadd.f32 %v2174, %v2186
    %v2188 = vpop.f32.mrf.mxu0
    %2189 = vdwg.mxu0
    %2190 = vmatpush.bf16.msra.mxu0 %v1221
    %2191 = vmatpush.bf16.msra.mxu0 %v1217
    %2192 = vmatpush.bf16.msra.mxu0 %v1213
    %2193 = vmatpush.bf16.msra.mxu0 %v1209
    %2194 = vmatpush.bf16.msra.mxu0 %v1205
    %2195 = vmatpush.bf16.msra.mxu0 %v1201
    %2196 = vmatpush.bf16.msra.mxu0 %v1197
    %2197 = vmatpush.bf16.msra.mxu0 %v1193
    %2198 = vmatmul.bf16.gmra.mxu0 %v2162
    %v2199 = vpop.f32.mrf.mxu0
    %v2200 = vadd.f32 %v993, %v2199
    %v2201 = vpop.f32.mrf.mxu0
    %2202 = vdwg.mxu0
    %2203 = vmatpush.bf16.msra.mxu0 %v1253
    %2204 = vmatpush.bf16.msra.mxu0 %v1249
    %2205 = vmatpush.bf16.msra.mxu0 %v1245
    %2206 = vmatpush.bf16.msra.mxu0 %v1241
    %2207 = vmatpush.bf16.msra.mxu0 %v1237
    %2208 = vmatpush.bf16.msra.mxu0 %v1233
    %2209 = vmatpush.bf16.msra.mxu0 %v1229
    %2210 = vmatpush.bf16.msra.mxu0 %v1225
    %2211 = vmatmul.bf16.gmra.mxu0 %v2163
    %v2212 = vpop.f32.mrf.mxu0
    %v2213 = vadd.f32 %v2200, %v2212
    %v2214 = vpop.f32.mrf.mxu0
    %2215 = vdwg.mxu0
    %2216 = vmatpush.bf16.msra.mxu0 %v1222
    %2217 = vmatpush.bf16.msra.mxu0 %v1218
    %2218 = vmatpush.bf16.msra.mxu0 %v1214
    %2219 = vmatpush.bf16.msra.mxu0 %v1210
    %2220 = vmatpush.bf16.msra.mxu0 %v1206
    %2221 = vmatpush.bf16.msra.mxu0 %v1202
    %2222 = vmatpush.bf16.msra.mxu0 %v1198
    %2223 = vmatpush.bf16.msra.mxu0 %v1194
    %2224 = vmatmul.bf16.gmra.mxu0 %v2162
    %v2225 = vpop.f32.mrf.mxu0
    %v2226 = vadd.f32 %v994, %v2225
    %v2227 = vpop.f32.mrf.mxu0
    %2228 = vdwg.mxu0
    %2229 = vmatpush.bf16.msra.mxu0 %v1254
    %2230 = vmatpush.bf16.msra.mxu0 %v1250
    %2231 = vmatpush.bf16.msra.mxu0 %v1246
    %2232 = vmatpush.bf16.msra.mxu0 %v1242
    %2233 = vmatpush.bf16.msra.mxu0 %v1238
    %2234 = vmatpush.bf16.msra.mxu0 %v1234
    %2235 = vmatpush.bf16.msra.mxu0 %v1230
    %2236 = vmatpush.bf16.msra.mxu0 %v1226
    %2237 = vmatmul.bf16.gmra.mxu0 %v2163
    %v2238 = vpop.f32.mrf.mxu0
    %v2239 = vadd.f32 %v2226, %v2238
    %v2240 = vpop.f32.mrf.mxu0
    %2241 = vdwg.mxu0
    %2242 = vmatpush.bf16.msra.mxu0 %v1223
    %2243 = vmatpush.bf16.msra.mxu0 %v1219
    %2244 = vmatpush.bf16.msra.mxu0 %v1215
    %2245 = vmatpush.bf16.msra.mxu0 %v1211
    %2246 = vmatpush.bf16.msra.mxu0 %v1207
    %2247 = vmatpush.bf16.msra.mxu0 %v1203
    %2248 = vmatpush.bf16.msra.mxu0 %v1199
    %2249 = vmatpush.bf16.msra.mxu0 %v1195
    %2250 = vmatmul.bf16.gmra.mxu0 %v2162
    %v2251 = vpop.f32.mrf.mxu0
    %v2252 = vadd.f32 %v995, %v2251
    %v2253 = vpop.f32.mrf.mxu0
    %2254 = vdwg.mxu0
    %2255 = vmatpush.bf16.msra.mxu0 %v1255
    %2256 = vmatpush.bf16.msra.mxu0 %v1251
    %2257 = vmatpush.bf16.msra.mxu0 %v1247
    %2258 = vmatpush.bf16.msra.mxu0 %v1243
    %2259 = vmatpush.bf16.msra.mxu0 %v1239
    %2260 = vmatpush.bf16.msra.mxu0 %v1235
    %2261 = vmatpush.bf16.msra.mxu0 %v1231
    %2262 = vmatpush.bf16.msra.mxu0 %v1227
    %2263 = vmatmul.bf16.gmra.mxu0 %v2163
    %v2264 = vpop.f32.mrf.mxu0
    %v2265 = vadd.f32 %v2252, %v2264
    %v2266 = vpop.f32.mrf.mxu0
    %2267 = vdwg.mxu0
    %v2268 = vsub.f32 0.0, %v2187
    %v2269 = vsub.f32 0.0, %v2213
    %v2270 = vsub.f32 0.0, %v2239
    %v2271 = vmul.f32 %v2268, 1.442695
    %v2272 = vpow.pop %v2271
    %v2273 = vmul.f32 %v2269, 1.442695
    %v2274 = vpow.pop %v2273
    %v2275 = vmul.f32 %v2270, 1.442695
    %v2276 = vpow.pop %v2275
    %v2277 = vadd.f32 %v2272, 1.0
    %v2278 = vadd.f32 %v2274, 1.0
    %v2279 = vadd.f32 %v2276, 1.0
    %v2280 = vrcp.pop %v2277
    %v2281 = vrcp.pop %v2278
    %v2282 = vrcp.pop %v2279
    %v2283 = vtanh.pop %v2265
    %v2284 = vmul.f32 %v2281, %v2075
    %v2285 = vmul.f32 %v2280, %v2283
    %v2286 = vadd.f32 %v2284, %v2285
    %v2287 = vtanh.pop %v2286
    %v2288 = vmul.f32 %v2282, %v2287
    %s2289 = smul.u32 5, 4
    %s2290 = smul.addr %s2289, 8
    %s2291 = scalar_lea.vmem [#allocation2], %s2290
    %v2292 = vld [vmem:[%s2291] sm:$0xff]
    %v2293 = vld [vmem:[%s2291 + $0x8] sm:$0xff]
    %v2294 = vld [vmem:[%s2291 + $0x10] sm:$0xff]
    %v2295 = vld [vmem:[%s2291 + $0x18] sm:$0xff]
    %2296 = vmatpush.bf16.msra.mxu0 %v812
    %2297 = vmatpush.bf16.msra.mxu0 %v808
    %2298 = vmatpush.bf16.msra.mxu0 %v804
    %2299 = vmatpush.bf16.msra.mxu0 %v800
    %2300 = vmatpush.bf16.msra.mxu0 %v796
    %2301 = vmatpush.bf16.msra.mxu0 %v792
    %2302 = vmatpush.bf16.msra.mxu0 %v788
    %2303 = vmatpush.bf16.msra.mxu0 %v784
    %2304 = vmatmul.bf16.gmra.mxu0 %v2162
    %v2305 = vpop.f32.mrf.mxu0
    %v2306 = vadd.f32 0.0, %v2305
    %v2307 = vpop.f32.mrf.mxu0
    %2308 = vdwg.mxu0
    %2309 = vmatpush.bf16.msra.mxu0 %v813
    %2310 = vmatpush.bf16.msra.mxu0 %v809
    %2311 = vmatpush.bf16.msra.mxu0 %v805
    %2312 = vmatpush.bf16.msra.mxu0 %v801
    %2313 = vmatpush.bf16.msra.mxu0 %v797
    %2314 = vmatpush.bf16.msra.mxu0 %v793
    %2315 = vmatpush.bf16.msra.mxu0 %v789
    %2316 = vmatpush.bf16.msra.mxu0 %v785
    %2317 = vmatmul.bf16.gmra.mxu0 %v2162
    %v2318 = vpop.f32.mrf.mxu0
    %v2319 = vadd.f32 0.0, %v2318
    %v2320 = vpop.f32.mrf.mxu0
    %2321 = vdwg.mxu0
    %2322 = vmatpush.bf16.msra.mxu0 %v814
    %2323 = vmatpush.bf16.msra.mxu0 %v810
    %2324 = vmatpush.bf16.msra.mxu0 %v806
    %2325 = vmatpush.bf16.msra.mxu0 %v802
    %2326 = vmatpush.bf16.msra.mxu0 %v798
    %2327 = vmatpush.bf16.msra.mxu0 %v794
    %2328 = vmatpush.bf16.msra.mxu0 %v790
    %2329 = vmatpush.bf16.msra.mxu0 %v786
    %2330 = vmatmul.bf16.gmra.mxu0 %v2162
    %v2331 = vpop.f32.mrf.mxu0
    %v2332 = vadd.f32 0.0, %v2331
    %v2333 = vpop.f32.mrf.mxu0
    %2334 = vdwg.mxu0
    %2335 = vmatpush.bf16.msra.mxu0 %v815
    %2336 = vmatpush.bf16.msra.mxu0 %v811
    %2337 = vmatpush.bf16.msra.mxu0 %v807
    %2338 = vmatpush.bf16.msra.mxu0 %v803
    %2339 = vmatpush.bf16.msra.mxu0 %v799
    %2340 = vmatpush.bf16.msra.mxu0 %v795
    %2341 = vmatpush.bf16.msra.mxu0 %v791
    %2342 = vmatpush.bf16.msra.mxu0 %v787
    %2343 = vmatmul.bf16.gmra.mxu0 %v2162
    %v2344 = vpop.f32.mrf.mxu0
    %v2345 = vadd.f32 0.0, %v2344
    %v2346 = vpop.f32.mrf.mxu0
    %2347 = vdwg.mxu0
    %v2348 = vadd.f32 %v2292, %v2306
    %v2349 = vadd.f32 %v2293, %v2319
    %v2350 = vadd.f32 %v2294, %v2332
    %v2351 = vadd.f32 %v2295, %v2345
    %v2352 = vsub.f32 0.0, %v2348
    %v2353 = vsub.f32 0.0, %v2349
    %v2354 = vsub.f32 0.0, %v2350
    %v2355 = vmul.f32 %v2352, 1.442695
    %v2356 = vpow.pop %v2355
    %v2357 = vmul.f32 %v2353, 1.442695
    %v2358 = vpow.pop %v2357
    %v2359 = vmul.f32 %v2354, 1.442695
    %v2360 = vpow.pop %v2359
    %v2361 = vadd.f32 %v2356, 1.0
    %v2362 = vadd.f32 %v2358, 1.0
    %v2363 = vadd.f32 %v2360, 1.0
    %v2364 = vrcp.pop %v2361
    %v2365 = vrcp.pop %v2362
    %v2366 = vrcp.pop %v2363
    %v2367 = vtanh.pop %v2351
    %v2368 = vmul.f32 %v2365, %v2159
    %v2369 = vmul.f32 %v2364, %v2367
    %v2370 = vadd.f32 %v2368, %v2369
    %v2371 = vtanh.pop %v2370
    %v2372 = vmul.f32 %v2366, %v2371
    %v2373 = vpack.c.bf16 %v2372, %v2372
    %v2374 = vpack.c.bf16 %v2288, %v2288
    %2375 = vmatpush.bf16.msra.mxu0 %v1220
    %2376 = vmatpush.bf16.msra.mxu0 %v1216
    %2377 = vmatpush.bf16.msra.mxu0 %v1212
    %2378 = vmatpush.bf16.msra.mxu0 %v1208
    %2379 = vmatpush.bf16.msra.mxu0 %v1204
    %2380 = vmatpush.bf16.msra.mxu0 %v1200
    %2381 = vmatpush.bf16.msra.mxu0 %v1196
    %2382 = vmatpush.bf16.msra.mxu0 %v1192
    %2383 = vmatmul.bf16.gmra.mxu0 %v2373
    %v2384 = vpop.f32.mrf.mxu0
    %v2385 = vadd.f32 %v992, %v2384
    %v2386 = vpop.f32.mrf.mxu0
    %2387 = vdwg.mxu0
    %2388 = vmatpush.bf16.msra.mxu0 %v1252
    %2389 = vmatpush.bf16.msra.mxu0 %v1248
    %2390 = vmatpush.bf16.msra.mxu0 %v1244
    %2391 = vmatpush.bf16.msra.mxu0 %v1240
    %2392 = vmatpush.bf16.msra.mxu0 %v1236
    %2393 = vmatpush.bf16.msra.mxu0 %v1232
    %2394 = vmatpush.bf16.msra.mxu0 %v1228
    %2395 = vmatpush.bf16.msra.mxu0 %v1224
    %2396 = vmatmul.bf16.gmra.mxu0 %v2374
    %v2397 = vpop.f32.mrf.mxu0
    %v2398 = vadd.f32 %v2385, %v2397
    %v2399 = vpop.f32.mrf.mxu0
    %2400 = vdwg.mxu0
    %2401 = vmatpush.bf16.msra.mxu0 %v1221
    %2402 = vmatpush.bf16.msra.mxu0 %v1217
    %2403 = vmatpush.bf16.msra.mxu0 %v1213
    %2404 = vmatpush.bf16.msra.mxu0 %v1209
    %2405 = vmatpush.bf16.msra.mxu0 %v1205
    %2406 = vmatpush.bf16.msra.mxu0 %v1201
    %2407 = vmatpush.bf16.msra.mxu0 %v1197
    %2408 = vmatpush.bf16.msra.mxu0 %v1193
    %2409 = vmatmul.bf16.gmra.mxu0 %v2373
    %v2410 = vpop.f32.mrf.mxu0
    %v2411 = vadd.f32 %v993, %v2410
    %v2412 = vpop.f32.mrf.mxu0
    %2413 = vdwg.mxu0
    %2414 = vmatpush.bf16.msra.mxu0 %v1253
    %2415 = vmatpush.bf16.msra.mxu0 %v1249
    %2416 = vmatpush.bf16.msra.mxu0 %v1245
    %2417 = vmatpush.bf16.msra.mxu0 %v1241
    %2418 = vmatpush.bf16.msra.mxu0 %v1237
    %2419 = vmatpush.bf16.msra.mxu0 %v1233
    %2420 = vmatpush.bf16.msra.mxu0 %v1229
    %2421 = vmatpush.bf16.msra.mxu0 %v1225
    %2422 = vmatmul.bf16.gmra.mxu0 %v2374
    %v2423 = vpop.f32.mrf.mxu0
    %v2424 = vadd.f32 %v2411, %v2423
    %v2425 = vpop.f32.mrf.mxu0
    %2426 = vdwg.mxu0
    %2427 = vmatpush.bf16.msra.mxu0 %v1222
    %2428 = vmatpush.bf16.msra.mxu0 %v1218
    %2429 = vmatpush.bf16.msra.mxu0 %v1214
    %2430 = vmatpush.bf16.msra.mxu0 %v1210
    %2431 = vmatpush.bf16.msra.mxu0 %v1206
    %2432 = vmatpush.bf16.msra.mxu0 %v1202
    %2433 = vmatpush.bf16.msra.mxu0 %v1198
    %2434 = vmatpush.bf16.msra.mxu0 %v1194
    %2435 = vmatmul.bf16.gmra.mxu0 %v2373
    %v2436 = vpop.f32.mrf.mxu0
    %v2437 = vadd.f32 %v994, %v2436
    %v2438 = vpop.f32.mrf.mxu0
    %2439 = vdwg.mxu0
    %2440 = vmatpush.bf16.msra.mxu0 %v1254
    %2441 = vmatpush.bf16.msra.mxu0 %v1250
    %2442 = vmatpush.bf16.msra.mxu0 %v1246
    %2443 = vmatpush.bf16.msra.mxu0 %v1242
    %2444 = vmatpush.bf16.msra.mxu0 %v1238
    %2445 = vmatpush.bf16.msra.mxu0 %v1234
    %2446 = vmatpush.bf16.msra.mxu0 %v1230
    %2447 = vmatpush.bf16.msra.mxu0 %v1226
    %2448 = vmatmul.bf16.gmra.mxu0 %v2374
    %v2449 = vpop.f32.mrf.mxu0
    %v2450 = vadd.f32 %v2437, %v2449
    %v2451 = vpop.f32.mrf.mxu0
    %2452 = vdwg.mxu0
    %2453 = vmatpush.bf16.msra.mxu0 %v1223
    %2454 = vmatpush.bf16.msra.mxu0 %v1219
    %2455 = vmatpush.bf16.msra.mxu0 %v1215
    %2456 = vmatpush.bf16.msra.mxu0 %v1211
    %2457 = vmatpush.bf16.msra.mxu0 %v1207
    %2458 = vmatpush.bf16.msra.mxu0 %v1203
    %2459 = vmatpush.bf16.msra.mxu0 %v1199
    %2460 = vmatpush.bf16.msra.mxu0 %v1195
    %2461 = vmatmul.bf16.gmra.mxu0 %v2373
    %v2462 = vpop.f32.mrf.mxu0
    %v2463 = vadd.f32 %v995, %v2462
    %v2464 = vpop.f32.mrf.mxu0
    %2465 = vdwg.mxu0
    %2466 = vmatpush.bf16.msra.mxu0 %v1255
    %2467 = vmatpush.bf16.msra.mxu0 %v1251
    %2468 = vmatpush.bf16.msra.mxu0 %v1247
    %2469 = vmatpush.bf16.msra.mxu0 %v1243
    %2470 = vmatpush.bf16.msra.mxu0 %v1239
    %2471 = vmatpush.bf16.msra.mxu0 %v1235
    %2472 = vmatpush.bf16.msra.mxu0 %v1231
    %2473 = vmatpush.bf16.msra.mxu0 %v1227
    %2474 = vmatmul.bf16.gmra.mxu0 %v2374
    %v2475 = vpop.f32.mrf.mxu0
    %v2476 = vadd.f32 %v2463, %v2475
    %v2477 = vpop.f32.mrf.mxu0
    %2478 = vdwg.mxu0
    %v2479 = vsub.f32 0.0, %v2398
    %v2480 = vsub.f32 0.0, %v2424
    %v2481 = vsub.f32 0.0, %v2450
    %v2482 = vmul.f32 %v2479, 1.442695
    %v2483 = vpow.pop %v2482
    %v2484 = vmul.f32 %v2480, 1.442695
    %v2485 = vpow.pop %v2484
    %v2486 = vmul.f32 %v2481, 1.442695
    %v2487 = vpow.pop %v2486
    %v2488 = vadd.f32 %v2483, 1.0
    %v2489 = vadd.f32 %v2485, 1.0
    %v2490 = vadd.f32 %v2487, 1.0
    %v2491 = vrcp.pop %v2488
    %v2492 = vrcp.pop %v2489
    %v2493 = vrcp.pop %v2490
    %v2494 = vtanh.pop %v2476
    %v2495 = vmul.f32 %v2492, %v2286
    %v2496 = vmul.f32 %v2491, %v2494
    %v2497 = vadd.f32 %v2495, %v2496
    %v2498 = vtanh.pop %v2497
    %v2499 = vmul.f32 %v2493, %v2498
    %s2500 = smul.u32 6, 4
    %s2501 = smul.addr %s2500, 8
    %s2502 = scalar_lea.vmem [#allocation2], %s2501
    %v2503 = vld [vmem:[%s2502] sm:$0xff]
    %v2504 = vld [vmem:[%s2502 + $0x8] sm:$0xff]
    %v2505 = vld [vmem:[%s2502 + $0x10] sm:$0xff]
    %v2506 = vld [vmem:[%s2502 + $0x18] sm:$0xff]
    %2507 = vmatpush.bf16.msra.mxu0 %v812
    %2508 = vmatpush.bf16.msra.mxu0 %v808
    %2509 = vmatpush.bf16.msra.mxu0 %v804
    %2510 = vmatpush.bf16.msra.mxu0 %v800
    %2511 = vmatpush.bf16.msra.mxu0 %v796
    %2512 = vmatpush.bf16.msra.mxu0 %v792
    %2513 = vmatpush.bf16.msra.mxu0 %v788
    %2514 = vmatpush.bf16.msra.mxu0 %v784
    %2515 = vmatmul.bf16.gmra.mxu0 %v2373
    %v2516 = vpop.f32.mrf.mxu0
    %v2517 = vadd.f32 0.0, %v2516
    %v2518 = vpop.f32.mrf.mxu0
    %2519 = vdwg.mxu0
    %2520 = vmatpush.bf16.msra.mxu0 %v813
    %2521 = vmatpush.bf16.msra.mxu0 %v809
    %2522 = vmatpush.bf16.msra.mxu0 %v805
    %2523 = vmatpush.bf16.msra.mxu0 %v801
    %2524 = vmatpush.bf16.msra.mxu0 %v797
    %2525 = vmatpush.bf16.msra.mxu0 %v793
    %2526 = vmatpush.bf16.msra.mxu0 %v789
    %2527 = vmatpush.bf16.msra.mxu0 %v785
    %2528 = vmatmul.bf16.gmra.mxu0 %v2373
    %v2529 = vpop.f32.mrf.mxu0
    %v2530 = vadd.f32 0.0, %v2529
    %v2531 = vpop.f32.mrf.mxu0
    %2532 = vdwg.mxu0
    %2533 = vmatpush.bf16.msra.mxu0 %v814
    %2534 = vmatpush.bf16.msra.mxu0 %v810
    %2535 = vmatpush.bf16.msra.mxu0 %v806
    %2536 = vmatpush.bf16.msra.mxu0 %v802
    %2537 = vmatpush.bf16.msra.mxu0 %v798
    %2538 = vmatpush.bf16.msra.mxu0 %v794
    %2539 = vmatpush.bf16.msra.mxu0 %v790
    %2540 = vmatpush.bf16.msra.mxu0 %v786
    %2541 = vmatmul.bf16.gmra.mxu0 %v2373
    %v2542 = vpop.f32.mrf.mxu0
    %v2543 = vadd.f32 0.0, %v2542
    %v2544 = vpop.f32.mrf.mxu0
    %2545 = vdwg.mxu0
    %2546 = vmatpush.bf16.msra.mxu0 %v815
    %2547 = vmatpush.bf16.msra.mxu0 %v811
    %2548 = vmatpush.bf16.msra.mxu0 %v807
    %2549 = vmatpush.bf16.msra.mxu0 %v803
    %2550 = vmatpush.bf16.msra.mxu0 %v799
    %2551 = vmatpush.bf16.msra.mxu0 %v795
    %2552 = vmatpush.bf16.msra.mxu0 %v791
    %2553 = vmatpush.bf16.msra.mxu0 %v787
    %2554 = vmatmul.bf16.gmra.mxu0 %v2373
    %v2555 = vpop.f32.mrf.mxu0
    %v2556 = vadd.f32 0.0, %v2555
    %v2557 = vpop.f32.mrf.mxu0
    %2558 = vdwg.mxu0
    %v2559 = vadd.f32 %v2503, %v2517
    %v2560 = vadd.f32 %v2504, %v2530
    %v2561 = vadd.f32 %v2505, %v2543
    %v2562 = vadd.f32 %v2506, %v2556
    %v2563 = vsub.f32 0.0, %v2559
    %v2564 = vsub.f32 0.0, %v2560
    %v2565 = vsub.f32 0.0, %v2561
    %v2566 = vmul.f32 %v2563, 1.442695
    %v2567 = vpow.pop %v2566
    %v2568 = vmul.f32 %v2564, 1.442695
    %v2569 = vpow.pop %v2568
    %v2570 = vmul.f32 %v2565, 1.442695
    %v2571 = vpow.pop %v2570
    %v2572 = vadd.f32 %v2567, 1.0
    %v2573 = vadd.f32 %v2569, 1.0
    %v2574 = vadd.f32 %v2571, 1.0
    %v2575 = vrcp.pop %v2572
    %v2576 = vrcp.pop %v2573
    %v2577 = vrcp.pop %v2574
    %v2578 = vtanh.pop %v2562
    %v2579 = vmul.f32 %v2576, %v2370
    %v2580 = vmul.f32 %v2575, %v2578
    %v2581 = vadd.f32 %v2579, %v2580
    %v2582 = vtanh.pop %v2581
    %v2583 = vmul.f32 %v2577, %v2582
    %v2584 = vpack.c.bf16 %v2583, %v2583
    %v2585 = vpack.c.bf16 %v2499, %v2499
    %2586 = vmatpush.bf16.msra.mxu0 %v1220
    %2587 = vmatpush.bf16.msra.mxu0 %v1216
    %2588 = vmatpush.bf16.msra.mxu0 %v1212
    %2589 = vmatpush.bf16.msra.mxu0 %v1208
    %2590 = vmatpush.bf16.msra.mxu0 %v1204
    %2591 = vmatpush.bf16.msra.mxu0 %v1200
    %2592 = vmatpush.bf16.msra.mxu0 %v1196
    %2593 = vmatpush.bf16.msra.mxu0 %v1192
    %2594 = vmatmul.bf16.gmra.mxu0 %v2584
    %v2595 = vpop.f32.mrf.mxu0
    %v2596 = vadd.f32 %v992, %v2595
    %v2597 = vpop.f32.mrf.mxu0
    %2598 = vdwg.mxu0
    %2599 = vmatpush.bf16.msra.mxu0 %v1252
    %2600 = vmatpush.bf16.msra.mxu0 %v1248
    %2601 = vmatpush.bf16.msra.mxu0 %v1244
    %2602 = vmatpush.bf16.msra.mxu0 %v1240
    %2603 = vmatpush.bf16.msra.mxu0 %v1236
    %2604 = vmatpush.bf16.msra.mxu0 %v1232
    %2605 = vmatpush.bf16.msra.mxu0 %v1228
    %2606 = vmatpush.bf16.msra.mxu0 %v1224
    %2607 = vmatmul.bf16.gmra.mxu0 %v2585
    %v2608 = vpop.f32.mrf.mxu0
    %v2609 = vadd.f32 %v2596, %v2608
    %v2610 = vpop.f32.mrf.mxu0
    %2611 = vdwg.mxu0
    %2612 = vmatpush.bf16.msra.mxu0 %v1221
    %2613 = vmatpush.bf16.msra.mxu0 %v1217
    %2614 = vmatpush.bf16.msra.mxu0 %v1213
    %2615 = vmatpush.bf16.msra.mxu0 %v1209
    %2616 = vmatpush.bf16.msra.mxu0 %v1205
    %2617 = vmatpush.bf16.msra.mxu0 %v1201
    %2618 = vmatpush.bf16.msra.mxu0 %v1197
    %2619 = vmatpush.bf16.msra.mxu0 %v1193
    %2620 = vmatmul.bf16.gmra.mxu0 %v2584
    %v2621 = vpop.f32.mrf.mxu0
    %v2622 = vadd.f32 %v993, %v2621
    %v2623 = vpop.f32.mrf.mxu0
    %2624 = vdwg.mxu0
    %2625 = vmatpush.bf16.msra.mxu0 %v1253
    %2626 = vmatpush.bf16.msra.mxu0 %v1249
    %2627 = vmatpush.bf16.msra.mxu0 %v1245
    %2628 = vmatpush.bf16.msra.mxu0 %v1241
    %2629 = vmatpush.bf16.msra.mxu0 %v1237
    %2630 = vmatpush.bf16.msra.mxu0 %v1233
    %2631 = vmatpush.bf16.msra.mxu0 %v1229
    %2632 = vmatpush.bf16.msra.mxu0 %v1225
    %2633 = vmatmul.bf16.gmra.mxu0 %v2585
    %v2634 = vpop.f32.mrf.mxu0
    %v2635 = vadd.f32 %v2622, %v2634
    %v2636 = vpop.f32.mrf.mxu0
    %2637 = vdwg.mxu0
    %2638 = vmatpush.bf16.msra.mxu0 %v1222
    %2639 = vmatpush.bf16.msra.mxu0 %v1218
    %2640 = vmatpush.bf16.msra.mxu0 %v1214
    %2641 = vmatpush.bf16.msra.mxu0 %v1210
    %2642 = vmatpush.bf16.msra.mxu0 %v1206
    %2643 = vmatpush.bf16.msra.mxu0 %v1202
    %2644 = vmatpush.bf16.msra.mxu0 %v1198
    %2645 = vmatpush.bf16.msra.mxu0 %v1194
    %2646 = vmatmul.bf16.gmra.mxu0 %v2584
    %v2647 = vpop.f32.mrf.mxu0
    %v2648 = vadd.f32 %v994, %v2647
    %v2649 = vpop.f32.mrf.mxu0
    %2650 = vdwg.mxu0
    %2651 = vmatpush.bf16.msra.mxu0 %v1254
    %2652 = vmatpush.bf16.msra.mxu0 %v1250
    %2653 = vmatpush.bf16.msra.mxu0 %v1246
    %2654 = vmatpush.bf16.msra.mxu0 %v1242
    %2655 = vmatpush.bf16.msra.mxu0 %v1238
    %2656 = vmatpush.bf16.msra.mxu0 %v1234
    %2657 = vmatpush.bf16.msra.mxu0 %v1230
    %2658 = vmatpush.bf16.msra.mxu0 %v1226
    %2659 = vmatmul.bf16.gmra.mxu0 %v2585
    %v2660 = vpop.f32.mrf.mxu0
    %v2661 = vadd.f32 %v2648, %v2660
    %v2662 = vpop.f32.mrf.mxu0
    %2663 = vdwg.mxu0
    %2664 = vmatpush.bf16.msra.mxu0 %v1223
    %2665 = vmatpush.bf16.msra.mxu0 %v1219
    %2666 = vmatpush.bf16.msra.mxu0 %v1215
    %2667 = vmatpush.bf16.msra.mxu0 %v1211
    %2668 = vmatpush.bf16.msra.mxu0 %v1207
    %2669 = vmatpush.bf16.msra.mxu0 %v1203
    %2670 = vmatpush.bf16.msra.mxu0 %v1199
    %2671 = vmatpush.bf16.msra.mxu0 %v1195
    %2672 = vmatmul.bf16.gmra.mxu0 %v2584
    %v2673 = vpop.f32.mrf.mxu0
    %v2674 = vadd.f32 %v995, %v2673
    %v2675 = vpop.f32.mrf.mxu0
    %2676 = vdwg.mxu0
    %2677 = vmatpush.bf16.msra.mxu0 %v1255
    %2678 = vmatpush.bf16.msra.mxu0 %v1251
    %2679 = vmatpush.bf16.msra.mxu0 %v1247
    %2680 = vmatpush.bf16.msra.mxu0 %v1243
    %2681 = vmatpush.bf16.msra.mxu0 %v1239
    %2682 = vmatpush.bf16.msra.mxu0 %v1235
    %2683 = vmatpush.bf16.msra.mxu0 %v1231
    %2684 = vmatpush.bf16.msra.mxu0 %v1227
    %2685 = vmatmul.bf16.gmra.mxu0 %v2585
    %v2686 = vpop.f32.mrf.mxu0
    %v2687 = vadd.f32 %v2674, %v2686
    %v2688 = vpop.f32.mrf.mxu0
    %2689 = vdwg.mxu0
    %v2690 = vsub.f32 0.0, %v2609
    %v2691 = vsub.f32 0.0, %v2635
    %v2692 = vsub.f32 0.0, %v2661
    %v2693 = vmul.f32 %v2690, 1.442695
    %v2694 = vpow.pop %v2693
    %v2695 = vmul.f32 %v2691, 1.442695
    %v2696 = vpow.pop %v2695
    %v2697 = vmul.f32 %v2692, 1.442695
    %v2698 = vpow.pop %v2697
    %v2699 = vadd.f32 %v2694, 1.0
    %v2700 = vadd.f32 %v2696, 1.0
    %v2701 = vadd.f32 %v2698, 1.0
    %v2702 = vrcp.pop %v2699
    %v2703 = vrcp.pop %v2700
    %v2704 = vrcp.pop %v2701
    %v2705 = vtanh.pop %v2687
    %v2706 = vmul.f32 %v2703, %v2497
    %v2707 = vmul.f32 %v2702, %v2705
    %v2708 = vadd.f32 %v2706, %v2707
    %v2709 = vtanh.pop %v2708
    %v2710 = vmul.f32 %v2704, %v2709
    %s2711 = smul.u32 7, 4
    %s2712 = smul.addr %s2711, 8
    %s2713 = scalar_lea.vmem [#allocation2], %s2712
    %v2714 = vld [vmem:[%s2713] sm:$0xff]
    %v2715 = vld [vmem:[%s2713 + $0x8] sm:$0xff]
    %v2716 = vld [vmem:[%s2713 + $0x10] sm:$0xff]
    %v2717 = vld [vmem:[%s2713 + $0x18] sm:$0xff]
    %2718 = vmatpush.bf16.msra.mxu0 %v812
    %2719 = vmatpush.bf16.msra.mxu0 %v808
    %2720 = vmatpush.bf16.msra.mxu0 %v804
    %2721 = vmatpush.bf16.msra.mxu0 %v800
    %2722 = vmatpush.bf16.msra.mxu0 %v796
    %2723 = vmatpush.bf16.msra.mxu0 %v792
    %2724 = vmatpush.bf16.msra.mxu0 %v788
    %2725 = vmatpush.bf16.msra.mxu0 %v784
    %2726 = vmatmul.bf16.gmra.mxu0 %v2584
    %v2727 = vpop.f32.mrf.mxu0
    %v2728 = vadd.f32 0.0, %v2727
    %v2729 = vpop.f32.mrf.mxu0
    %2730 = vdwg.mxu0
    %2731 = vmatpush.bf16.msra.mxu0 %v813
    %2732 = vmatpush.bf16.msra.mxu0 %v809
    %2733 = vmatpush.bf16.msra.mxu0 %v805
    %2734 = vmatpush.bf16.msra.mxu0 %v801
    %2735 = vmatpush.bf16.msra.mxu0 %v797
    %2736 = vmatpush.bf16.msra.mxu0 %v793
    %2737 = vmatpush.bf16.msra.mxu0 %v789
    %2738 = vmatpush.bf16.msra.mxu0 %v785
    %2739 = vmatmul.bf16.gmra.mxu0 %v2584
    %v2740 = vpop.f32.mrf.mxu0
    %v2741 = vadd.f32 0.0, %v2740
    %v2742 = vpop.f32.mrf.mxu0
    %2743 = vdwg.mxu0
    %2744 = vmatpush.bf16.msra.mxu0 %v814
    %2745 = vmatpush.bf16.msra.mxu0 %v810
    %2746 = vmatpush.bf16.msra.mxu0 %v806
    %2747 = vmatpush.bf16.msra.mxu0 %v802
    %2748 = vmatpush.bf16.msra.mxu0 %v798
    %2749 = vmatpush.bf16.msra.mxu0 %v794
    %2750 = vmatpush.bf16.msra.mxu0 %v790
    %2751 = vmatpush.bf16.msra.mxu0 %v786
    %2752 = vmatmul.bf16.gmra.mxu0 %v2584
    %v2753 = vpop.f32.mrf.mxu0
    %v2754 = vadd.f32 0.0, %v2753
    %v2755 = vpop.f32.mrf.mxu0
    %2756 = vdwg.mxu0
    %2757 = vmatpush.bf16.msra.mxu0 %v815
    %2758 = vmatpush.bf16.msra.mxu0 %v811
    %2759 = vmatpush.bf16.msra.mxu0 %v807
    %2760 = vmatpush.bf16.msra.mxu0 %v803
    %2761 = vmatpush.bf16.msra.mxu0 %v799
    %2762 = vmatpush.bf16.msra.mxu0 %v795
    %2763 = vmatpush.bf16.msra.mxu0 %v791
    %2764 = vmatpush.bf16.msra.mxu0 %v787
    %2765 = vmatmul.bf16.gmra.mxu0 %v2584
    %v2766 = vpop.f32.mrf.mxu0
    %v2767 = vadd.f32 0.0, %v2766
    %v2768 = vpop.f32.mrf.mxu0
    %2769 = vdwg.mxu0
    %v2770 = vadd.f32 %v2714, %v2728
    %v2771 = vadd.f32 %v2715, %v2741
    %v2772 = vadd.f32 %v2716, %v2754
    %v2773 = vadd.f32 %v2717, %v2767
    %v2774 = vsub.f32 0.0, %v2770
    %v2775 = vsub.f32 0.0, %v2771
    %v2776 = vsub.f32 0.0, %v2772
    %v2777 = vmul.f32 %v2774, 1.442695
    %v2778 = vpow.pop %v2777
    %v2779 = vmul.f32 %v2775, 1.442695
    %v2780 = vpow.pop %v2779
    %v2781 = vmul.f32 %v2776, 1.442695
    %v2782 = vpow.pop %v2781
    %v2783 = vadd.f32 %v2778, 1.0
    %v2784 = vadd.f32 %v2780, 1.0
    %v2785 = vadd.f32 %v2782, 1.0
    %v2786 = vrcp.pop %v2783
    %v2787 = vrcp.pop %v2784
    %v2788 = vrcp.pop %v2785
    %v2789 = vtanh.pop %v2773
    %v2790 = vmul.f32 %v2787, %v2581
    %v2791 = vmul.f32 %v2786, %v2789
    %v2792 = vadd.f32 %v2790, %v2791
    %v2793 = vtanh.pop %v2792
    %v2794 = vmul.f32 %v2788, %v2793
    %v2795 = vpack.c.bf16 %v2794, %v2794
    %v2796 = vpack.c.bf16 %v2710, %v2710
    %2797 = vmatpush.bf16.msra.mxu0 %v1220
    %2798 = vmatpush.bf16.msra.mxu0 %v1216
    %2799 = vmatpush.bf16.msra.mxu0 %v1212
    %2800 = vmatpush.bf16.msra.mxu0 %v1208
    %2801 = vmatpush.bf16.msra.mxu0 %v1204
    %2802 = vmatpush.bf16.msra.mxu0 %v1200
    %2803 = vmatpush.bf16.msra.mxu0 %v1196
    %2804 = vmatpush.bf16.msra.mxu0 %v1192
    %2805 = vmatmul.bf16.gmra.mxu0 %v2795
    %v2806 = vpop.f32.mrf.mxu0
    %v2807 = vadd.f32 %v992, %v2806
    %v2808 = vpop.f32.mrf.mxu0
    %2809 = vdwg.mxu0
    %2810 = vmatpush.bf16.msra.mxu0 %v1252
    %2811 = vmatpush.bf16.msra.mxu0 %v1248
    %2812 = vmatpush.bf16.msra.mxu0 %v1244
    %2813 = vmatpush.bf16.msra.mxu0 %v1240
    %2814 = vmatpush.bf16.msra.mxu0 %v1236
    %2815 = vmatpush.bf16.msra.mxu0 %v1232
    %2816 = vmatpush.bf16.msra.mxu0 %v1228
    %2817 = vmatpush.bf16.msra.mxu0 %v1224
    %2818 = vmatmul.bf16.gmra.mxu0 %v2796
    %v2819 = vpop.f32.mrf.mxu0
    %v2820 = vadd.f32 %v2807, %v2819
    %v2821 = vpop.f32.mrf.mxu0
    %2822 = vdwg.mxu0
    %2823 = vmatpush.bf16.msra.mxu0 %v1221
    %2824 = vmatpush.bf16.msra.mxu0 %v1217
    %2825 = vmatpush.bf16.msra.mxu0 %v1213
    %2826 = vmatpush.bf16.msra.mxu0 %v1209
    %2827 = vmatpush.bf16.msra.mxu0 %v1205
    %2828 = vmatpush.bf16.msra.mxu0 %v1201
    %2829 = vmatpush.bf16.msra.mxu0 %v1197
    %2830 = vmatpush.bf16.msra.mxu0 %v1193
    %2831 = vmatmul.bf16.gmra.mxu0 %v2795
    %v2832 = vpop.f32.mrf.mxu0
    %v2833 = vadd.f32 %v993, %v2832
    %v2834 = vpop.f32.mrf.mxu0
    %2835 = vdwg.mxu0
    %2836 = vmatpush.bf16.msra.mxu0 %v1253
    %2837 = vmatpush.bf16.msra.mxu0 %v1249
    %2838 = vmatpush.bf16.msra.mxu0 %v1245
    %2839 = vmatpush.bf16.msra.mxu0 %v1241
    %2840 = vmatpush.bf16.msra.mxu0 %v1237
    %2841 = vmatpush.bf16.msra.mxu0 %v1233
    %2842 = vmatpush.bf16.msra.mxu0 %v1229
    %2843 = vmatpush.bf16.msra.mxu0 %v1225
    %2844 = vmatmul.bf16.gmra.mxu0 %v2796
    %v2845 = vpop.f32.mrf.mxu0
    %v2846 = vadd.f32 %v2833, %v2845
    %v2847 = vpop.f32.mrf.mxu0
    %2848 = vdwg.mxu0
    %2849 = vmatpush.bf16.msra.mxu0 %v1222
    %2850 = vmatpush.bf16.msra.mxu0 %v1218
    %2851 = vmatpush.bf16.msra.mxu0 %v1214
    %2852 = vmatpush.bf16.msra.mxu0 %v1210
    %2853 = vmatpush.bf16.msra.mxu0 %v1206
    %2854 = vmatpush.bf16.msra.mxu0 %v1202
    %2855 = vmatpush.bf16.msra.mxu0 %v1198
    %2856 = vmatpush.bf16.msra.mxu0 %v1194
    %2857 = vmatmul.bf16.gmra.mxu0 %v2795
    %v2858 = vpop.f32.mrf.mxu0
    %v2859 = vadd.f32 %v994, %v2858
    %v2860 = vpop.f32.mrf.mxu0
    %2861 = vdwg.mxu0
    %2862 = vmatpush.bf16.msra.mxu0 %v1254
    %2863 = vmatpush.bf16.msra.mxu0 %v1250
    %2864 = vmatpush.bf16.msra.mxu0 %v1246
    %2865 = vmatpush.bf16.msra.mxu0 %v1242
    %2866 = vmatpush.bf16.msra.mxu0 %v1238
    %2867 = vmatpush.bf16.msra.mxu0 %v1234
    %2868 = vmatpush.bf16.msra.mxu0 %v1230
    %2869 = vmatpush.bf16.msra.mxu0 %v1226
    %2870 = vmatmul.bf16.gmra.mxu0 %v2796
    %v2871 = vpop.f32.mrf.mxu0
    %v2872 = vadd.f32 %v2859, %v2871
    %v2873 = vpop.f32.mrf.mxu0
    %2874 = vdwg.mxu0
    %2875 = vmatpush.bf16.msra.mxu0 %v1223
    %2876 = vmatpush.bf16.msra.mxu0 %v1219
    %2877 = vmatpush.bf16.msra.mxu0 %v1215
    %2878 = vmatpush.bf16.msra.mxu0 %v1211
    %2879 = vmatpush.bf16.msra.mxu0 %v1207
    %2880 = vmatpush.bf16.msra.mxu0 %v1203
    %2881 = vmatpush.bf16.msra.mxu0 %v1199
    %2882 = vmatpush.bf16.msra.mxu0 %v1195
    %2883 = vmatmul.bf16.gmra.mxu0 %v2795
    %v2884 = vpop.f32.mrf.mxu0
    %v2885 = vadd.f32 %v995, %v2884
    %v2886 = vpop.f32.mrf.mxu0
    %2887 = vdwg.mxu0
    %2888 = vmatpush.bf16.msra.mxu0 %v1255
    %2889 = vmatpush.bf16.msra.mxu0 %v1251
    %2890 = vmatpush.bf16.msra.mxu0 %v1247
    %2891 = vmatpush.bf16.msra.mxu0 %v1243
    %2892 = vmatpush.bf16.msra.mxu0 %v1239
    %2893 = vmatpush.bf16.msra.mxu0 %v1235
    %2894 = vmatpush.bf16.msra.mxu0 %v1231
    %2895 = vmatpush.bf16.msra.mxu0 %v1227
    %2896 = vmatmul.bf16.gmra.mxu0 %v2796
    %v2897 = vpop.f32.mrf.mxu0
    %v2898 = vadd.f32 %v2885, %v2897
    %v2899 = vpop.f32.mrf.mxu0
    %2900 = vdwg.mxu0
    %v2901 = vsub.f32 0.0, %v2820
    %v2902 = vsub.f32 0.0, %v2846
    %v2903 = vsub.f32 0.0, %v2872
    %v2904 = vmul.f32 %v2901, 1.442695
    %v2905 = vpow.pop %v2904
    %v2906 = vmul.f32 %v2902, 1.442695
    %v2907 = vpow.pop %v2906
    %v2908 = vmul.f32 %v2903, 1.442695
    %v2909 = vpow.pop %v2908
    %v2910 = vadd.f32 %v2905, 1.0
    %v2911 = vadd.f32 %v2907, 1.0
    %v2912 = vadd.f32 %v2909, 1.0
    %v2913 = vrcp.pop %v2910
    %v2914 = vrcp.pop %v2911
    %v2915 = vrcp.pop %v2912
    %v2916 = vtanh.pop %v2898
    %v2917 = vmul.f32 %v2914, %v2708
    %v2918 = vmul.f32 %v2913, %v2916
    %v2919 = vadd.f32 %v2917, %v2918
    %v2920 = vtanh.pop %v2919
    %v2921 = vmul.f32 %v2915, %v2920
    %s2922 = smul.u32 8, 4
    %s2923 = smul.addr %s2922, 8
    %s2924 = scalar_lea.vmem [#allocation2], %s2923
    %v2925 = vld [vmem:[%s2924] sm:$0xff]
    %v2926 = vld [vmem:[%s2924 + $0x8] sm:$0xff]
    %v2927 = vld [vmem:[%s2924 + $0x10] sm:$0xff]
    %v2928 = vld [vmem:[%s2924 + $0x18] sm:$0xff]
    %2929 = vmatpush.bf16.msra.mxu0 %v812
    %2930 = vmatpush.bf16.msra.mxu0 %v808
    %2931 = vmatpush.bf16.msra.mxu0 %v804
    %2932 = vmatpush.bf16.msra.mxu0 %v800
    %2933 = vmatpush.bf16.msra.mxu0 %v796
    %2934 = vmatpush.bf16.msra.mxu0 %v792
    %2935 = vmatpush.bf16.msra.mxu0 %v788
    %2936 = vmatpush.bf16.msra.mxu0 %v784
    %2937 = vmatmul.bf16.gmra.mxu0 %v2795
    %v2938 = vpop.f32.mrf.mxu0
    %v2939 = vadd.f32 0.0, %v2938
    %v2940 = vpop.f32.mrf.mxu0
    %2941 = vdwg.mxu0
    %2942 = vmatpush.bf16.msra.mxu0 %v813
    %2943 = vmatpush.bf16.msra.mxu0 %v809
    %2944 = vmatpush.bf16.msra.mxu0 %v805
    %2945 = vmatpush.bf16.msra.mxu0 %v801
    %2946 = vmatpush.bf16.msra.mxu0 %v797
    %2947 = vmatpush.bf16.msra.mxu0 %v793
    %2948 = vmatpush.bf16.msra.mxu0 %v789
    %2949 = vmatpush.bf16.msra.mxu0 %v785
    %2950 = vmatmul.bf16.gmra.mxu0 %v2795
    %v2951 = vpop.f32.mrf.mxu0
    %v2952 = vadd.f32 0.0, %v2951
    %v2953 = vpop.f32.mrf.mxu0
    %2954 = vdwg.mxu0
    %2955 = vmatpush.bf16.msra.mxu0 %v814
    %2956 = vmatpush.bf16.msra.mxu0 %v810
    %2957 = vmatpush.bf16.msra.mxu0 %v806
    %2958 = vmatpush.bf16.msra.mxu0 %v802
    %2959 = vmatpush.bf16.msra.mxu0 %v798
    %2960 = vmatpush.bf16.msra.mxu0 %v794
    %2961 = vmatpush.bf16.msra.mxu0 %v790
    %2962 = vmatpush.bf16.msra.mxu0 %v786
    %2963 = vmatmul.bf16.gmra.mxu0 %v2795
    %v2964 = vpop.f32.mrf.mxu0
    %v2965 = vadd.f32 0.0, %v2964
    %v2966 = vpop.f32.mrf.mxu0
    %2967 = vdwg.mxu0
    %2968 = vmatpush.bf16.msra.mxu0 %v815
    %2969 = vmatpush.bf16.msra.mxu0 %v811
    %2970 = vmatpush.bf16.msra.mxu0 %v807
    %2971 = vmatpush.bf16.msra.mxu0 %v803
    %2972 = vmatpush.bf16.msra.mxu0 %v799
    %2973 = vmatpush.bf16.msra.mxu0 %v795
    %2974 = vmatpush.bf16.msra.mxu0 %v791
    %2975 = vmatpush.bf16.msra.mxu0 %v787
    %2976 = vmatmul.bf16.gmra.mxu0 %v2795
    %v2977 = vpop.f32.mrf.mxu0
    %v2978 = vadd.f32 0.0, %v2977
    %v2979 = vpop.f32.mrf.mxu0
    %2980 = vdwg.mxu0
    %v2981 = vadd.f32 %v2925, %v2939
    %v2982 = vadd.f32 %v2926, %v2952
    %v2983 = vadd.f32 %v2927, %v2965
    %v2984 = vadd.f32 %v2928, %v2978
    %v2985 = vsub.f32 0.0, %v2981
    %v2986 = vsub.f32 0.0, %v2982
    %v2987 = vsub.f32 0.0, %v2983
    %v2988 = vmul.f32 %v2985, 1.442695
    %v2989 = vpow.pop %v2988
    %v2990 = vmul.f32 %v2986, 1.442695
    %v2991 = vpow.pop %v2990
    %v2992 = vmul.f32 %v2987, 1.442695
    %v2993 = vpow.pop %v2992
    %v2994 = vadd.f32 %v2989, 1.0
    %v2995 = vadd.f32 %v2991, 1.0
    %v2996 = vadd.f32 %v2993, 1.0
    %v2997 = vrcp.pop %v2994
    %v2998 = vrcp.pop %v2995
    %v2999 = vrcp.pop %v2996
    %v3000 = vtanh.pop %v2984
    %v3001 = vmul.f32 %v2998, %v2792
    %v3002 = vmul.f32 %v2997, %v3000
    %v3003 = vadd.f32 %v3001, %v3002
    %v3004 = vtanh.pop %v3003
    %v3005 = vmul.f32 %v2999, %v3004
    %v3006 = vpack.c.bf16 %v3005, %v3005
    %v3007 = vpack.c.bf16 %v2921, %v2921
    %3008 = vmatpush.bf16.msra.mxu0 %v1220
    %3009 = vmatpush.bf16.msra.mxu0 %v1216
    %3010 = vmatpush.bf16.msra.mxu0 %v1212
    %3011 = vmatpush.bf16.msra.mxu0 %v1208
    %3012 = vmatpush.bf16.msra.mxu0 %v1204
    %3013 = vmatpush.bf16.msra.mxu0 %v1200
    %3014 = vmatpush.bf16.msra.mxu0 %v1196
    %3015 = vmatpush.bf16.msra.mxu0 %v1192
    %3016 = vmatmul.bf16.gmra.mxu0 %v3006
    %v3017 = vpop.f32.mrf.mxu0
    %v3018 = vadd.f32 %v992, %v3017
    %v3019 = vpop.f32.mrf.mxu0
    %3020 = vdwg.mxu0
    %3021 = vmatpush.bf16.msra.mxu0 %v1252
    %3022 = vmatpush.bf16.msra.mxu0 %v1248
    %3023 = vmatpush.bf16.msra.mxu0 %v1244
    %3024 = vmatpush.bf16.msra.mxu0 %v1240
    %3025 = vmatpush.bf16.msra.mxu0 %v1236
    %3026 = vmatpush.bf16.msra.mxu0 %v1232
    %3027 = vmatpush.bf16.msra.mxu0 %v1228
    %3028 = vmatpush.bf16.msra.mxu0 %v1224
    %3029 = vmatmul.bf16.gmra.mxu0 %v3007
    %v3030 = vpop.f32.mrf.mxu0
    %v3031 = vadd.f32 %v3018, %v3030
    %v3032 = vpop.f32.mrf.mxu0
    %3033 = vdwg.mxu0
    %3034 = vmatpush.bf16.msra.mxu0 %v1221
    %3035 = vmatpush.bf16.msra.mxu0 %v1217
    %3036 = vmatpush.bf16.msra.mxu0 %v1213
    %3037 = vmatpush.bf16.msra.mxu0 %v1209
    %3038 = vmatpush.bf16.msra.mxu0 %v1205
    %3039 = vmatpush.bf16.msra.mxu0 %v1201
    %3040 = vmatpush.bf16.msra.mxu0 %v1197
    %3041 = vmatpush.bf16.msra.mxu0 %v1193
    %3042 = vmatmul.bf16.gmra.mxu0 %v3006
    %v3043 = vpop.f32.mrf.mxu0
    %v3044 = vadd.f32 %v993, %v3043
    %v3045 = vpop.f32.mrf.mxu0
    %3046 = vdwg.mxu0
    %3047 = vmatpush.bf16.msra.mxu0 %v1253
    %3048 = vmatpush.bf16.msra.mxu0 %v1249
    %3049 = vmatpush.bf16.msra.mxu0 %v1245
    %3050 = vmatpush.bf16.msra.mxu0 %v1241
    %3051 = vmatpush.bf16.msra.mxu0 %v1237
    %3052 = vmatpush.bf16.msra.mxu0 %v1233
    %3053 = vmatpush.bf16.msra.mxu0 %v1229
    %3054 = vmatpush.bf16.msra.mxu0 %v1225
    %3055 = vmatmul.bf16.gmra.mxu0 %v3007
    %v3056 = vpop.f32.mrf.mxu0
    %v3057 = vadd.f32 %v3044, %v3056
    %v3058 = vpop.f32.mrf.mxu0
    %3059 = vdwg.mxu0
    %3060 = vmatpush.bf16.msra.mxu0 %v1222
    %3061 = vmatpush.bf16.msra.mxu0 %v1218
    %3062 = vmatpush.bf16.msra.mxu0 %v1214
    %3063 = vmatpush.bf16.msra.mxu0 %v1210
    %3064 = vmatpush.bf16.msra.mxu0 %v1206
    %3065 = vmatpush.bf16.msra.mxu0 %v1202
    %3066 = vmatpush.bf16.msra.mxu0 %v1198
    %3067 = vmatpush.bf16.msra.mxu0 %v1194
    %3068 = vmatmul.bf16.gmra.mxu0 %v3006
    %v3069 = vpop.f32.mrf.mxu0
    %v3070 = vadd.f32 %v994, %v3069
    %v3071 = vpop.f32.mrf.mxu0
    %3072 = vdwg.mxu0
    %3073 = vmatpush.bf16.msra.mxu0 %v1254
    %3074 = vmatpush.bf16.msra.mxu0 %v1250
    %3075 = vmatpush.bf16.msra.mxu0 %v1246
    %3076 = vmatpush.bf16.msra.mxu0 %v1242
    %3077 = vmatpush.bf16.msra.mxu0 %v1238
    %3078 = vmatpush.bf16.msra.mxu0 %v1234
    %3079 = vmatpush.bf16.msra.mxu0 %v1230
    %3080 = vmatpush.bf16.msra.mxu0 %v1226
    %3081 = vmatmul.bf16.gmra.mxu0 %v3007
    %v3082 = vpop.f32.mrf.mxu0
    %v3083 = vadd.f32 %v3070, %v3082
    %v3084 = vpop.f32.mrf.mxu0
    %3085 = vdwg.mxu0
    %3086 = vmatpush.bf16.msra.mxu0 %v1223
    %3087 = vmatpush.bf16.msra.mxu0 %v1219
    %3088 = vmatpush.bf16.msra.mxu0 %v1215
    %3089 = vmatpush.bf16.msra.mxu0 %v1211
    %3090 = vmatpush.bf16.msra.mxu0 %v1207
    %3091 = vmatpush.bf16.msra.mxu0 %v1203
    %3092 = vmatpush.bf16.msra.mxu0 %v1199
    %3093 = vmatpush.bf16.msra.mxu0 %v1195
    %3094 = vmatmul.bf16.gmra.mxu0 %v3006
    %v3095 = vpop.f32.mrf.mxu0
    %v3096 = vadd.f32 %v995, %v3095
    %v3097 = vpop.f32.mrf.mxu0
    %3098 = vdwg.mxu0
    %3099 = vmatpush.bf16.msra.mxu0 %v1255
    %3100 = vmatpush.bf16.msra.mxu0 %v1251
    %3101 = vmatpush.bf16.msra.mxu0 %v1247
    %3102 = vmatpush.bf16.msra.mxu0 %v1243
    %3103 = vmatpush.bf16.msra.mxu0 %v1239
    %3104 = vmatpush.bf16.msra.mxu0 %v1235
    %3105 = vmatpush.bf16.msra.mxu0 %v1231
    %3106 = vmatpush.bf16.msra.mxu0 %v1227
    %3107 = vmatmul.bf16.gmra.mxu0 %v3007
    %v3108 = vpop.f32.mrf.mxu0
    %v3109 = vadd.f32 %v3096, %v3108
    %v3110 = vpop.f32.mrf.mxu0
    %3111 = vdwg.mxu0
    %v3112 = vsub.f32 0.0, %v3031
    %v3113 = vsub.f32 0.0, %v3057
    %v3114 = vsub.f32 0.0, %v3083
    %v3115 = vmul.f32 %v3112, 1.442695
    %v3116 = vpow.pop %v3115
    %v3117 = vmul.f32 %v3113, 1.442695
    %v3118 = vpow.pop %v3117
    %v3119 = vmul.f32 %v3114, 1.442695
    %v3120 = vpow.pop %v3119
    %v3121 = vadd.f32 %v3116, 1.0
    %v3122 = vadd.f32 %v3118, 1.0
    %v3123 = vadd.f32 %v3120, 1.0
    %v3124 = vrcp.pop %v3121
    %v3125 = vrcp.pop %v3122
    %v3126 = vrcp.pop %v3123
    %v3127 = vtanh.pop %v3109
    %v3128 = vmul.f32 %v3125, %v2919
    %v3129 = vmul.f32 %v3124, %v3127
    %v3130 = vadd.f32 %v3128, %v3129
    %v3131 = vtanh.pop %v3130
    %v3132 = vmul.f32 %v3126, %v3131
    %s3133 = smul.u32 9, 4
    %s3134 = smul.addr %s3133, 8
    %s3135 = scalar_lea.vmem [#allocation2], %s3134
    %v3136 = vld [vmem:[%s3135] sm:$0xff]
    %v3137 = vld [vmem:[%s3135 + $0x8] sm:$0xff]
    %v3138 = vld [vmem:[%s3135 + $0x10] sm:$0xff]
    %v3139 = vld [vmem:[%s3135 + $0x18] sm:$0xff]
    %3140 = vmatpush.bf16.msra.mxu0 %v812
    %3141 = vmatpush.bf16.msra.mxu0 %v808
    %3142 = vmatpush.bf16.msra.mxu0 %v804
    %3143 = vmatpush.bf16.msra.mxu0 %v800
    %3144 = vmatpush.bf16.msra.mxu0 %v796
    %3145 = vmatpush.bf16.msra.mxu0 %v792
    %3146 = vmatpush.bf16.msra.mxu0 %v788
    %3147 = vmatpush.bf16.msra.mxu0 %v784
    %3148 = vmatmul.bf16.gmra.mxu0 %v3006
    %v3149 = vpop.f32.mrf.mxu0
    %v3150 = vadd.f32 0.0, %v3149
    %v3151 = vpop.f32.mrf.mxu0
    %3152 = vdwg.mxu0
    %3153 = vmatpush.bf16.msra.mxu0 %v813
    %3154 = vmatpush.bf16.msra.mxu0 %v809
    %3155 = vmatpush.bf16.msra.mxu0 %v805
    %3156 = vmatpush.bf16.msra.mxu0 %v801
    %3157 = vmatpush.bf16.msra.mxu0 %v797
    %3158 = vmatpush.bf16.msra.mxu0 %v793
    %3159 = vmatpush.bf16.msra.mxu0 %v789
    %3160 = vmatpush.bf16.msra.mxu0 %v785
    %3161 = vmatmul.bf16.gmra.mxu0 %v3006
    %v3162 = vpop.f32.mrf.mxu0
    %v3163 = vadd.f32 0.0, %v3162
    %v3164 = vpop.f32.mrf.mxu0
    %3165 = vdwg.mxu0
    %3166 = vmatpush.bf16.msra.mxu0 %v814
    %3167 = vmatpush.bf16.msra.mxu0 %v810
    %3168 = vmatpush.bf16.msra.mxu0 %v806
    %3169 = vmatpush.bf16.msra.mxu0 %v802
    %3170 = vmatpush.bf16.msra.mxu0 %v798
    %3171 = vmatpush.bf16.msra.mxu0 %v794
    %3172 = vmatpush.bf16.msra.mxu0 %v790
    %3173 = vmatpush.bf16.msra.mxu0 %v786
    %3174 = vmatmul.bf16.gmra.mxu0 %v3006
    %v3175 = vpop.f32.mrf.mxu0
    %v3176 = vadd.f32 0.0, %v3175
    %v3177 = vpop.f32.mrf.mxu0
    %3178 = vdwg.mxu0
    %3179 = vmatpush.bf16.msra.mxu0 %v815
    %3180 = vmatpush.bf16.msra.mxu0 %v811
    %3181 = vmatpush.bf16.msra.mxu0 %v807
    %3182 = vmatpush.bf16.msra.mxu0 %v803
    %3183 = vmatpush.bf16.msra.mxu0 %v799
    %3184 = vmatpush.bf16.msra.mxu0 %v795
    %3185 = vmatpush.bf16.msra.mxu0 %v791
    %3186 = vmatpush.bf16.msra.mxu0 %v787
    %3187 = vmatmul.bf16.gmra.mxu0 %v3006
    %v3188 = vpop.f32.mrf.mxu0
    %v3189 = vadd.f32 0.0, %v3188
    %v3190 = vpop.f32.mrf.mxu0
    %3191 = vdwg.mxu0
    %v3192 = vadd.f32 %v3136, %v3150
    %v3193 = vadd.f32 %v3137, %v3163
    %v3194 = vadd.f32 %v3138, %v3176
    %v3195 = vadd.f32 %v3139, %v3189
    %v3196 = vsub.f32 0.0, %v3192
    %v3197 = vsub.f32 0.0, %v3193
    %v3198 = vsub.f32 0.0, %v3194
    %v3199 = vmul.f32 %v3196, 1.442695
    %v3200 = vpow.pop %v3199
    %v3201 = vmul.f32 %v3197, 1.442695
    %v3202 = vpow.pop %v3201
    %v3203 = vmul.f32 %v3198, 1.442695
    %v3204 = vpow.pop %v3203
    %v3205 = vadd.f32 %v3200, 1.0
    %v3206 = vadd.f32 %v3202, 1.0
    %v3207 = vadd.f32 %v3204, 1.0
    %v3208 = vrcp.pop %v3205
    %v3209 = vrcp.pop %v3206
    %v3210 = vrcp.pop %v3207
    %v3211 = vtanh.pop %v3195
    %v3212 = vmul.f32 %v3209, %v3003
    %v3213 = vmul.f32 %v3208, %v3211
    %v3214 = vadd.f32 %v3212, %v3213
    %v3215 = vtanh.pop %v3214
    %v3216 = vmul.f32 %v3210, %v3215
    %v3217 = vpack.c.bf16 %v3216, %v3216
    %v3218 = vpack.c.bf16 %v3132, %v3132
    %3219 = vmatpush.bf16.msra.mxu0 %v1220
    %3220 = vmatpush.bf16.msra.mxu0 %v1216
    %3221 = vmatpush.bf16.msra.mxu0 %v1212
    %3222 = vmatpush.bf16.msra.mxu0 %v1208
    %3223 = vmatpush.bf16.msra.mxu0 %v1204
    %3224 = vmatpush.bf16.msra.mxu0 %v1200
    %3225 = vmatpush.bf16.msra.mxu0 %v1196
    %3226 = vmatpush.bf16.msra.mxu0 %v1192
    %3227 = vmatmul.bf16.gmra.mxu0 %v3217
    %v3228 = vpop.f32.mrf.mxu0
    %v3229 = vadd.f32 %v992, %v3228
    %v3230 = vpop.f32.mrf.mxu0
    %3231 = vdwg.mxu0
    %3232 = vmatpush.bf16.msra.mxu0 %v1252
    %3233 = vmatpush.bf16.msra.mxu0 %v1248
    %3234 = vmatpush.bf16.msra.mxu0 %v1244
    %3235 = vmatpush.bf16.msra.mxu0 %v1240
    %3236 = vmatpush.bf16.msra.mxu0 %v1236
    %3237 = vmatpush.bf16.msra.mxu0 %v1232
    %3238 = vmatpush.bf16.msra.mxu0 %v1228
    %3239 = vmatpush.bf16.msra.mxu0 %v1224
    %3240 = vmatmul.bf16.gmra.mxu0 %v3218
    %v3241 = vpop.f32.mrf.mxu0
    %v3242 = vadd.f32 %v3229, %v3241
    %v3243 = vpop.f32.mrf.mxu0
    %3244 = vdwg.mxu0
    %3245 = vmatpush.bf16.msra.mxu0 %v1221
    %3246 = vmatpush.bf16.msra.mxu0 %v1217
    %3247 = vmatpush.bf16.msra.mxu0 %v1213
    %3248 = vmatpush.bf16.msra.mxu0 %v1209
    %3249 = vmatpush.bf16.msra.mxu0 %v1205
    %3250 = vmatpush.bf16.msra.mxu0 %v1201
    %3251 = vmatpush.bf16.msra.mxu0 %v1197
    %3252 = vmatpush.bf16.msra.mxu0 %v1193
    %3253 = vmatmul.bf16.gmra.mxu0 %v3217
    %v3254 = vpop.f32.mrf.mxu0
    %v3255 = vadd.f32 %v993, %v3254
    %v3256 = vpop.f32.mrf.mxu0
    %3257 = vdwg.mxu0
    %3258 = vmatpush.bf16.msra.mxu0 %v1253
    %3259 = vmatpush.bf16.msra.mxu0 %v1249
    %3260 = vmatpush.bf16.msra.mxu0 %v1245
    %3261 = vmatpush.bf16.msra.mxu0 %v1241
    %3262 = vmatpush.bf16.msra.mxu0 %v1237
    %3263 = vmatpush.bf16.msra.mxu0 %v1233
    %3264 = vmatpush.bf16.msra.mxu0 %v1229
    %3265 = vmatpush.bf16.msra.mxu0 %v1225
    %3266 = vmatmul.bf16.gmra.mxu0 %v3218
    %v3267 = vpop.f32.mrf.mxu0
    %v3268 = vadd.f32 %v3255, %v3267
    %v3269 = vpop.f32.mrf.mxu0
    %3270 = vdwg.mxu0
    %3271 = vmatpush.bf16.msra.mxu0 %v1222
    %3272 = vmatpush.bf16.msra.mxu0 %v1218
    %3273 = vmatpush.bf16.msra.mxu0 %v1214
    %3274 = vmatpush.bf16.msra.mxu0 %v1210
    %3275 = vmatpush.bf16.msra.mxu0 %v1206
    %3276 = vmatpush.bf16.msra.mxu0 %v1202
    %3277 = vmatpush.bf16.msra.mxu0 %v1198
    %3278 = vmatpush.bf16.msra.mxu0 %v1194
    %3279 = vmatmul.bf16.gmra.mxu0 %v3217
    %v3280 = vpop.f32.mrf.mxu0
    %v3281 = vadd.f32 %v994, %v3280
    %v3282 = vpop.f32.mrf.mxu0
    %3283 = vdwg.mxu0
    %3284 = vmatpush.bf16.msra.mxu0 %v1254
    %3285 = vmatpush.bf16.msra.mxu0 %v1250
    %3286 = vmatpush.bf16.msra.mxu0 %v1246
    %3287 = vmatpush.bf16.msra.mxu0 %v1242
    %3288 = vmatpush.bf16.msra.mxu0 %v1238
    %3289 = vmatpush.bf16.msra.mxu0 %v1234
    %3290 = vmatpush.bf16.msra.mxu0 %v1230
    %3291 = vmatpush.bf16.msra.mxu0 %v1226
    %3292 = vmatmul.bf16.gmra.mxu0 %v3218
    %v3293 = vpop.f32.mrf.mxu0
    %v3294 = vadd.f32 %v3281, %v3293
    %v3295 = vpop.f32.mrf.mxu0
    %3296 = vdwg.mxu0
    %3297 = vmatpush.bf16.msra.mxu0 %v1223
    %3298 = vmatpush.bf16.msra.mxu0 %v1219
    %3299 = vmatpush.bf16.msra.mxu0 %v1215
    %3300 = vmatpush.bf16.msra.mxu0 %v1211
    %3301 = vmatpush.bf16.msra.mxu0 %v1207
    %3302 = vmatpush.bf16.msra.mxu0 %v1203
    %3303 = vmatpush.bf16.msra.mxu0 %v1199
    %3304 = vmatpush.bf16.msra.mxu0 %v1195
    %3305 = vmatmul.bf16.gmra.mxu0 %v3217
    %v3306 = vpop.f32.mrf.mxu0
    %v3307 = vadd.f32 %v995, %v3306
    %v3308 = vpop.f32.mrf.mxu0
    %3309 = vdwg.mxu0
    %3310 = vmatpush.bf16.msra.mxu0 %v1255
    %3311 = vmatpush.bf16.msra.mxu0 %v1251
    %3312 = vmatpush.bf16.msra.mxu0 %v1247
    %3313 = vmatpush.bf16.msra.mxu0 %v1243
    %3314 = vmatpush.bf16.msra.mxu0 %v1239
    %3315 = vmatpush.bf16.msra.mxu0 %v1235
    %3316 = vmatpush.bf16.msra.mxu0 %v1231
    %3317 = vmatpush.bf16.msra.mxu0 %v1227
    %3318 = vmatmul.bf16.gmra.mxu0 %v3218
    %v3319 = vpop.f32.mrf.mxu0
    %v3320 = vadd.f32 %v3307, %v3319
    %v3321 = vpop.f32.mrf.mxu0
    %3322 = vdwg.mxu0
    %v3323 = vsub.f32 0.0, %v3242
    %v3324 = vsub.f32 0.0, %v3268
    %v3325 = vsub.f32 0.0, %v3294
    %v3326 = vmul.f32 %v3323, 1.442695
    %v3327 = vpow.pop %v3326
    %v3328 = vmul.f32 %v3324, 1.442695
    %v3329 = vpow.pop %v3328
    %v3330 = vmul.f32 %v3325, 1.442695
    %v3331 = vpow.pop %v3330
    %v3332 = vadd.f32 %v3327, 1.0
    %v3333 = vadd.f32 %v3329, 1.0
    %v3334 = vadd.f32 %v3331, 1.0
    %v3335 = vrcp.pop %v3332
    %v3336 = vrcp.pop %v3333
    %v3337 = vrcp.pop %v3334
    %v3338 = vtanh.pop %v3320
    %v3339 = vmul.f32 %v3336, %v3130
    %v3340 = vmul.f32 %v3335, %v3338
    %v3341 = vadd.f32 %v3339, %v3340
    %v3342 = vtanh.pop %v3341
    %v3343 = vmul.f32 %v3337, %v3342
    %s3344 = smul.u32 10, 4
    %s3345 = smul.addr %s3344, 8
    %s3346 = scalar_lea.vmem [#allocation2], %s3345
    %v3347 = vld [vmem:[%s3346] sm:$0xff]
    %v3348 = vld [vmem:[%s3346 + $0x8] sm:$0xff]
    %v3349 = vld [vmem:[%s3346 + $0x10] sm:$0xff]
    %v3350 = vld [vmem:[%s3346 + $0x18] sm:$0xff]
    %3351 = vmatpush.bf16.msra.mxu0 %v812
    %3352 = vmatpush.bf16.msra.mxu0 %v808
    %3353 = vmatpush.bf16.msra.mxu0 %v804
    %3354 = vmatpush.bf16.msra.mxu0 %v800
    %3355 = vmatpush.bf16.msra.mxu0 %v796
    %3356 = vmatpush.bf16.msra.mxu0 %v792
    %3357 = vmatpush.bf16.msra.mxu0 %v788
    %3358 = vmatpush.bf16.msra.mxu0 %v784
    %3359 = vmatmul.bf16.gmra.mxu0 %v3217
    %v3360 = vpop.f32.mrf.mxu0
    %v3361 = vadd.f32 0.0, %v3360
    %v3362 = vpop.f32.mrf.mxu0
    %3363 = vdwg.mxu0
    %3364 = vmatpush.bf16.msra.mxu0 %v813
    %3365 = vmatpush.bf16.msra.mxu0 %v809
    %3366 = vmatpush.bf16.msra.mxu0 %v805
    %3367 = vmatpush.bf16.msra.mxu0 %v801
    %3368 = vmatpush.bf16.msra.mxu0 %v797
    %3369 = vmatpush.bf16.msra.mxu0 %v793
    %3370 = vmatpush.bf16.msra.mxu0 %v789
    %3371 = vmatpush.bf16.msra.mxu0 %v785
    %3372 = vmatmul.bf16.gmra.mxu0 %v3217
    %v3373 = vpop.f32.mrf.mxu0
    %v3374 = vadd.f32 0.0, %v3373
    %v3375 = vpop.f32.mrf.mxu0
    %3376 = vdwg.mxu0
    %3377 = vmatpush.bf16.msra.mxu0 %v814
    %3378 = vmatpush.bf16.msra.mxu0 %v810
    %3379 = vmatpush.bf16.msra.mxu0 %v806
    %3380 = vmatpush.bf16.msra.mxu0 %v802
    %3381 = vmatpush.bf16.msra.mxu0 %v798
    %3382 = vmatpush.bf16.msra.mxu0 %v794
    %3383 = vmatpush.bf16.msra.mxu0 %v790
    %3384 = vmatpush.bf16.msra.mxu0 %v786
    %3385 = vmatmul.bf16.gmra.mxu0 %v3217
    %v3386 = vpop.f32.mrf.mxu0
    %v3387 = vadd.f32 0.0, %v3386
    %v3388 = vpop.f32.mrf.mxu0
    %3389 = vdwg.mxu0
    %3390 = vmatpush.bf16.msra.mxu0 %v815
    %3391 = vmatpush.bf16.msra.mxu0 %v811
    %3392 = vmatpush.bf16.msra.mxu0 %v807
    %3393 = vmatpush.bf16.msra.mxu0 %v803
    %3394 = vmatpush.bf16.msra.mxu0 %v799
    %3395 = vmatpush.bf16.msra.mxu0 %v795
    %3396 = vmatpush.bf16.msra.mxu0 %v791
    %3397 = vmatpush.bf16.msra.mxu0 %v787
    %3398 = vmatmul.bf16.gmra.mxu0 %v3217
    %v3399 = vpop.f32.mrf.mxu0
    %v3400 = vadd.f32 0.0, %v3399
    %v3401 = vpop.f32.mrf.mxu0
    %3402 = vdwg.mxu0
    %v3403 = vadd.f32 %v3347, %v3361
    %v3404 = vadd.f32 %v3348, %v3374
    %v3405 = vadd.f32 %v3349, %v3387
    %v3406 = vadd.f32 %v3350, %v3400
    %v3407 = vsub.f32 0.0, %v3403
    %v3408 = vsub.f32 0.0, %v3404
    %v3409 = vsub.f32 0.0, %v3405
    %v3410 = vmul.f32 %v3407, 1.442695
    %v3411 = vpow.pop %v3410
    %v3412 = vmul.f32 %v3408, 1.442695
    %v3413 = vpow.pop %v3412
    %v3414 = vmul.f32 %v3409, 1.442695
    %v3415 = vpow.pop %v3414
    %v3416 = vadd.f32 %v3411, 1.0
    %v3417 = vadd.f32 %v3413, 1.0
    %v3418 = vadd.f32 %v3415, 1.0
    %v3419 = vrcp.pop %v3416
    %v3420 = vrcp.pop %v3417
    %v3421 = vrcp.pop %v3418
    %v3422 = vtanh.pop %v3406
    %v3423 = vmul.f32 %v3420, %v3214
    %v3424 = vmul.f32 %v3419, %v3422
    %v3425 = vadd.f32 %v3423, %v3424
    %v3426 = vtanh.pop %v3425
    %v3427 = vmul.f32 %v3421, %v3426
    %v3428 = vpack.c.bf16 %v3427, %v3427
    %v3429 = vpack.c.bf16 %v3343, %v3343
    %3430 = vmatpush.bf16.msra.mxu0 %v1220
    %3431 = vmatpush.bf16.msra.mxu0 %v1216
    %3432 = vmatpush.bf16.msra.mxu0 %v1212
    %3433 = vmatpush.bf16.msra.mxu0 %v1208
    %3434 = vmatpush.bf16.msra.mxu0 %v1204
    %3435 = vmatpush.bf16.msra.mxu0 %v1200
    %3436 = vmatpush.bf16.msra.mxu0 %v1196
    %3437 = vmatpush.bf16.msra.mxu0 %v1192
    %3438 = vmatmul.bf16.gmra.mxu0 %v3428
    %v3439 = vpop.f32.mrf.mxu0
    %v3440 = vadd.f32 %v992, %v3439
    %v3441 = vpop.f32.mrf.mxu0
    %3442 = vdwg.mxu0
    %3443 = vmatpush.bf16.msra.mxu0 %v1252
    %3444 = vmatpush.bf16.msra.mxu0 %v1248
    %3445 = vmatpush.bf16.msra.mxu0 %v1244
    %3446 = vmatpush.bf16.msra.mxu0 %v1240
    %3447 = vmatpush.bf16.msra.mxu0 %v1236
    %3448 = vmatpush.bf16.msra.mxu0 %v1232
    %3449 = vmatpush.bf16.msra.mxu0 %v1228
    %3450 = vmatpush.bf16.msra.mxu0 %v1224
    %3451 = vmatmul.bf16.gmra.mxu0 %v3429
    %v3452 = vpop.f32.mrf.mxu0
    %v3453 = vadd.f32 %v3440, %v3452
    %v3454 = vpop.f32.mrf.mxu0
    %3455 = vdwg.mxu0
    %3456 = vmatpush.bf16.msra.mxu0 %v1221
    %3457 = vmatpush.bf16.msra.mxu0 %v1217
    %3458 = vmatpush.bf16.msra.mxu0 %v1213
    %3459 = vmatpush.bf16.msra.mxu0 %v1209
    %3460 = vmatpush.bf16.msra.mxu0 %v1205
    %3461 = vmatpush.bf16.msra.mxu0 %v1201
    %3462 = vmatpush.bf16.msra.mxu0 %v1197
    %3463 = vmatpush.bf16.msra.mxu0 %v1193
    %3464 = vmatmul.bf16.gmra.mxu0 %v3428
    %v3465 = vpop.f32.mrf.mxu0
    %v3466 = vadd.f32 %v993, %v3465
    %v3467 = vpop.f32.mrf.mxu0
    %3468 = vdwg.mxu0
    %3469 = vmatpush.bf16.msra.mxu0 %v1253
    %3470 = vmatpush.bf16.msra.mxu0 %v1249
    %3471 = vmatpush.bf16.msra.mxu0 %v1245
    %3472 = vmatpush.bf16.msra.mxu0 %v1241
    %3473 = vmatpush.bf16.msra.mxu0 %v1237
    %3474 = vmatpush.bf16.msra.mxu0 %v1233
    %3475 = vmatpush.bf16.msra.mxu0 %v1229
    %3476 = vmatpush.bf16.msra.mxu0 %v1225
    %3477 = vmatmul.bf16.gmra.mxu0 %v3429
    %v3478 = vpop.f32.mrf.mxu0
    %v3479 = vadd.f32 %v3466, %v3478
    %v3480 = vpop.f32.mrf.mxu0
    %3481 = vdwg.mxu0
    %3482 = vmatpush.bf16.msra.mxu0 %v1222
    %3483 = vmatpush.bf16.msra.mxu0 %v1218
    %3484 = vmatpush.bf16.msra.mxu0 %v1214
    %3485 = vmatpush.bf16.msra.mxu0 %v1210
    %3486 = vmatpush.bf16.msra.mxu0 %v1206
    %3487 = vmatpush.bf16.msra.mxu0 %v1202
    %3488 = vmatpush.bf16.msra.mxu0 %v1198
    %3489 = vmatpush.bf16.msra.mxu0 %v1194
    %3490 = vmatmul.bf16.gmra.mxu0 %v3428
    %v3491 = vpop.f32.mrf.mxu0
    %v3492 = vadd.f32 %v994, %v3491
    %v3493 = vpop.f32.mrf.mxu0
    %3494 = vdwg.mxu0
    %3495 = vmatpush.bf16.msra.mxu0 %v1254
    %3496 = vmatpush.bf16.msra.mxu0 %v1250
    %3497 = vmatpush.bf16.msra.mxu0 %v1246
    %3498 = vmatpush.bf16.msra.mxu0 %v1242
    %3499 = vmatpush.bf16.msra.mxu0 %v1238
    %3500 = vmatpush.bf16.msra.mxu0 %v1234
    %3501 = vmatpush.bf16.msra.mxu0 %v1230
    %3502 = vmatpush.bf16.msra.mxu0 %v1226
    %3503 = vmatmul.bf16.gmra.mxu0 %v3429
    %v3504 = vpop.f32.mrf.mxu0
    %v3505 = vadd.f32 %v3492, %v3504
    %v3506 = vpop.f32.mrf.mxu0
    %3507 = vdwg.mxu0
    %3508 = vmatpush.bf16.msra.mxu0 %v1223
    %3509 = vmatpush.bf16.msra.mxu0 %v1219
    %3510 = vmatpush.bf16.msra.mxu0 %v1215
    %3511 = vmatpush.bf16.msra.mxu0 %v1211
    %3512 = vmatpush.bf16.msra.mxu0 %v1207
    %3513 = vmatpush.bf16.msra.mxu0 %v1203
    %3514 = vmatpush.bf16.msra.mxu0 %v1199
    %3515 = vmatpush.bf16.msra.mxu0 %v1195
    %3516 = vmatmul.bf16.gmra.mxu0 %v3428
    %v3517 = vpop.f32.mrf.mxu0
    %v3518 = vadd.f32 %v995, %v3517
    %v3519 = vpop.f32.mrf.mxu0
    %3520 = vdwg.mxu0
    %3521 = vmatpush.bf16.msra.mxu0 %v1255
    %3522 = vmatpush.bf16.msra.mxu0 %v1251
    %3523 = vmatpush.bf16.msra.mxu0 %v1247
    %3524 = vmatpush.bf16.msra.mxu0 %v1243
    %3525 = vmatpush.bf16.msra.mxu0 %v1239
    %3526 = vmatpush.bf16.msra.mxu0 %v1235
    %3527 = vmatpush.bf16.msra.mxu0 %v1231
    %3528 = vmatpush.bf16.msra.mxu0 %v1227
    %3529 = vmatmul.bf16.gmra.mxu0 %v3429
    %v3530 = vpop.f32.mrf.mxu0
    %v3531 = vadd.f32 %v3518, %v3530
    %v3532 = vpop.f32.mrf.mxu0
    %3533 = vdwg.mxu0
    %v3534 = vsub.f32 0.0, %v3453
    %v3535 = vsub.f32 0.0, %v3479
    %v3536 = vsub.f32 0.0, %v3505
    %v3537 = vmul.f32 %v3534, 1.442695
    %v3538 = vpow.pop %v3537
    %v3539 = vmul.f32 %v3535, 1.442695
    %v3540 = vpow.pop %v3539
    %v3541 = vmul.f32 %v3536, 1.442695
    %v3542 = vpow.pop %v3541
    %v3543 = vadd.f32 %v3538, 1.0
    %v3544 = vadd.f32 %v3540, 1.0
    %v3545 = vadd.f32 %v3542, 1.0
    %v3546 = vrcp.pop %v3543
    %v3547 = vrcp.pop %v3544
    %v3548 = vrcp.pop %v3545
    %v3549 = vtanh.pop %v3531
    %v3550 = vmul.f32 %v3547, %v3341
    %v3551 = vmul.f32 %v3546, %v3549
    %v3552 = vadd.f32 %v3550, %v3551
    %v3553 = vtanh.pop %v3552
    %v3554 = vmul.f32 %v3548, %v3553
    %s3555 = smul.u32 11, 4
    %s3556 = smul.addr %s3555, 8
    %s3557 = scalar_lea.vmem [#allocation2], %s3556
    %v3558 = vld [vmem:[%s3557] sm:$0xff]
    %v3559 = vld [vmem:[%s3557 + $0x8] sm:$0xff]
    %v3560 = vld [vmem:[%s3557 + $0x10] sm:$0xff]
    %v3561 = vld [vmem:[%s3557 + $0x18] sm:$0xff]
    %3562 = vmatpush.bf16.msra.mxu0 %v812
    %3563 = vmatpush.bf16.msra.mxu0 %v808
    %3564 = vmatpush.bf16.msra.mxu0 %v804
    %3565 = vmatpush.bf16.msra.mxu0 %v800
    %3566 = vmatpush.bf16.msra.mxu0 %v796
    %3567 = vmatpush.bf16.msra.mxu0 %v792
    %3568 = vmatpush.bf16.msra.mxu0 %v788
    %3569 = vmatpush.bf16.msra.mxu0 %v784
    %3570 = vmatmul.bf16.gmra.mxu0 %v3428
    %v3571 = vpop.f32.mrf.mxu0
    %v3572 = vadd.f32 0.0, %v3571
    %v3573 = vpop.f32.mrf.mxu0
    %3574 = vdwg.mxu0
    %3575 = vmatpush.bf16.msra.mxu0 %v813
    %3576 = vmatpush.bf16.msra.mxu0 %v809
    %3577 = vmatpush.bf16.msra.mxu0 %v805
    %3578 = vmatpush.bf16.msra.mxu0 %v801
    %3579 = vmatpush.bf16.msra.mxu0 %v797
    %3580 = vmatpush.bf16.msra.mxu0 %v793
    %3581 = vmatpush.bf16.msra.mxu0 %v789
    %3582 = vmatpush.bf16.msra.mxu0 %v785
    %3583 = vmatmul.bf16.gmra.mxu0 %v3428
    %v3584 = vpop.f32.mrf.mxu0
    %v3585 = vadd.f32 0.0, %v3584
    %v3586 = vpop.f32.mrf.mxu0
    %3587 = vdwg.mxu0
    %3588 = vmatpush.bf16.msra.mxu0 %v814
    %3589 = vmatpush.bf16.msra.mxu0 %v810
    %3590 = vmatpush.bf16.msra.mxu0 %v806
    %3591 = vmatpush.bf16.msra.mxu0 %v802
    %3592 = vmatpush.bf16.msra.mxu0 %v798
    %3593 = vmatpush.bf16.msra.mxu0 %v794
    %3594 = vmatpush.bf16.msra.mxu0 %v790
    %3595 = vmatpush.bf16.msra.mxu0 %v786
    %3596 = vmatmul.bf16.gmra.mxu0 %v3428
    %v3597 = vpop.f32.mrf.mxu0
    %v3598 = vadd.f32 0.0, %v3597
    %v3599 = vpop.f32.mrf.mxu0
    %3600 = vdwg.mxu0
    %3601 = vmatpush.bf16.msra.mxu0 %v815
    %3602 = vmatpush.bf16.msra.mxu0 %v811
    %3603 = vmatpush.bf16.msra.mxu0 %v807
    %3604 = vmatpush.bf16.msra.mxu0 %v803
    %3605 = vmatpush.bf16.msra.mxu0 %v799
    %3606 = vmatpush.bf16.msra.mxu0 %v795
    %3607 = vmatpush.bf16.msra.mxu0 %v791
    %3608 = vmatpush.bf16.msra.mxu0 %v787
    %3609 = vmatmul.bf16.gmra.mxu0 %v3428
    %v3610 = vpop.f32.mrf.mxu0
    %v3611 = vadd.f32 0.0, %v3610
    %v3612 = vpop.f32.mrf.mxu0
    %3613 = vdwg.mxu0
    %v3614 = vadd.f32 %v3558, %v3572
    %v3615 = vadd.f32 %v3559, %v3585
    %v3616 = vadd.f32 %v3560, %v3598
    %v3617 = vadd.f32 %v3561, %v3611
    %v3618 = vsub.f32 0.0, %v3614
    %v3619 = vsub.f32 0.0, %v3615
    %v3620 = vsub.f32 0.0, %v3616
    %v3621 = vmul.f32 %v3618, 1.442695
    %v3622 = vpow.pop %v3621
    %v3623 = vmul.f32 %v3619, 1.442695
    %v3624 = vpow.pop %v3623
    %v3625 = vmul.f32 %v3620, 1.442695
    %v3626 = vpow.pop %v3625
    %v3627 = vadd.f32 %v3622, 1.0
    %v3628 = vadd.f32 %v3624, 1.0
    %v3629 = vadd.f32 %v3626, 1.0
    %v3630 = vrcp.pop %v3627
    %v3631 = vrcp.pop %v3628
    %v3632 = vrcp.pop %v3629
    %v3633 = vtanh.pop %v3617
    %v3634 = vmul.f32 %v3631, %v3425
    %v3635 = vmul.f32 %v3630, %v3633
    %v3636 = vadd.f32 %v3634, %v3635
    %v3637 = vtanh.pop %v3636
    %v3638 = vmul.f32 %v3632, %v3637
    %v3639 = vpack.c.bf16 %v3638, %v3638
    %v3640 = vpack.c.bf16 %v3554, %v3554
    %3641 = vmatpush.bf16.msra.mxu0 %v1220
    %3642 = vmatpush.bf16.msra.mxu0 %v1216
    %3643 = vmatpush.bf16.msra.mxu0 %v1212
    %3644 = vmatpush.bf16.msra.mxu0 %v1208
    %3645 = vmatpush.bf16.msra.mxu0 %v1204
    %3646 = vmatpush.bf16.msra.mxu0 %v1200
    %3647 = vmatpush.bf16.msra.mxu0 %v1196
    %3648 = vmatpush.bf16.msra.mxu0 %v1192
    %3649 = vmatmul.bf16.gmra.mxu0 %v3639
    %v3650 = vpop.f32.mrf.mxu0
    %v3651 = vadd.f32 %v992, %v3650
    %v3652 = vpop.f32.mrf.mxu0
    %3653 = vdwg.mxu0
    %3654 = vmatpush.bf16.msra.mxu0 %v1252
    %3655 = vmatpush.bf16.msra.mxu0 %v1248
    %3656 = vmatpush.bf16.msra.mxu0 %v1244
    %3657 = vmatpush.bf16.msra.mxu0 %v1240
    %3658 = vmatpush.bf16.msra.mxu0 %v1236
    %3659 = vmatpush.bf16.msra.mxu0 %v1232
    %3660 = vmatpush.bf16.msra.mxu0 %v1228
    %3661 = vmatpush.bf16.msra.mxu0 %v1224
    %3662 = vmatmul.bf16.gmra.mxu0 %v3640
    %v3663 = vpop.f32.mrf.mxu0
    %v3664 = vadd.f32 %v3651, %v3663
    %v3665 = vpop.f32.mrf.mxu0
    %3666 = vdwg.mxu0
    %3667 = vmatpush.bf16.msra.mxu0 %v1221
    %3668 = vmatpush.bf16.msra.mxu0 %v1217
    %3669 = vmatpush.bf16.msra.mxu0 %v1213
    %3670 = vmatpush.bf16.msra.mxu0 %v1209
    %3671 = vmatpush.bf16.msra.mxu0 %v1205
    %3672 = vmatpush.bf16.msra.mxu0 %v1201
    %3673 = vmatpush.bf16.msra.mxu0 %v1197
    %3674 = vmatpush.bf16.msra.mxu0 %v1193
    %3675 = vmatmul.bf16.gmra.mxu0 %v3639
    %v3676 = vpop.f32.mrf.mxu0
    %v3677 = vadd.f32 %v993, %v3676
    %v3678 = vpop.f32.mrf.mxu0
    %3679 = vdwg.mxu0
    %3680 = vmatpush.bf16.msra.mxu0 %v1253
    %3681 = vmatpush.bf16.msra.mxu0 %v1249
    %3682 = vmatpush.bf16.msra.mxu0 %v1245
    %3683 = vmatpush.bf16.msra.mxu0 %v1241
    %3684 = vmatpush.bf16.msra.mxu0 %v1237
    %3685 = vmatpush.bf16.msra.mxu0 %v1233
    %3686 = vmatpush.bf16.msra.mxu0 %v1229
    %3687 = vmatpush.bf16.msra.mxu0 %v1225
    %3688 = vmatmul.bf16.gmra.mxu0 %v3640
    %v3689 = vpop.f32.mrf.mxu0
    %v3690 = vadd.f32 %v3677, %v3689
    %v3691 = vpop.f32.mrf.mxu0
    %3692 = vdwg.mxu0
    %3693 = vmatpush.bf16.msra.mxu0 %v1222
    %3694 = vmatpush.bf16.msra.mxu0 %v1218
    %3695 = vmatpush.bf16.msra.mxu0 %v1214
    %3696 = vmatpush.bf16.msra.mxu0 %v1210
    %3697 = vmatpush.bf16.msra.mxu0 %v1206
    %3698 = vmatpush.bf16.msra.mxu0 %v1202
    %3699 = vmatpush.bf16.msra.mxu0 %v1198
    %3700 = vmatpush.bf16.msra.mxu0 %v1194
    %3701 = vmatmul.bf16.gmra.mxu0 %v3639
    %v3702 = vpop.f32.mrf.mxu0
    %v3703 = vadd.f32 %v994, %v3702
    %v3704 = vpop.f32.mrf.mxu0
    %3705 = vdwg.mxu0
    %3706 = vmatpush.bf16.msra.mxu0 %v1254
    %3707 = vmatpush.bf16.msra.mxu0 %v1250
    %3708 = vmatpush.bf16.msra.mxu0 %v1246
    %3709 = vmatpush.bf16.msra.mxu0 %v1242
    %3710 = vmatpush.bf16.msra.mxu0 %v1238
    %3711 = vmatpush.bf16.msra.mxu0 %v1234
    %3712 = vmatpush.bf16.msra.mxu0 %v1230
    %3713 = vmatpush.bf16.msra.mxu0 %v1226
    %3714 = vmatmul.bf16.gmra.mxu0 %v3640
    %v3715 = vpop.f32.mrf.mxu0
    %v3716 = vadd.f32 %v3703, %v3715
    %v3717 = vpop.f32.mrf.mxu0
    %3718 = vdwg.mxu0
    %3719 = vmatpush.bf16.msra.mxu0 %v1223
    %3720 = vmatpush.bf16.msra.mxu0 %v1219
    %3721 = vmatpush.bf16.msra.mxu0 %v1215
    %3722 = vmatpush.bf16.msra.mxu0 %v1211
    %3723 = vmatpush.bf16.msra.mxu0 %v1207
    %3724 = vmatpush.bf16.msra.mxu0 %v1203
    %3725 = vmatpush.bf16.msra.mxu0 %v1199
    %3726 = vmatpush.bf16.msra.mxu0 %v1195
    %3727 = vmatmul.bf16.gmra.mxu0 %v3639
    %v3728 = vpop.f32.mrf.mxu0
    %v3729 = vadd.f32 %v995, %v3728
    %v3730 = vpop.f32.mrf.mxu0
    %3731 = vdwg.mxu0
    %3732 = vmatpush.bf16.msra.mxu0 %v1255
    %3733 = vmatpush.bf16.msra.mxu0 %v1251
    %3734 = vmatpush.bf16.msra.mxu0 %v1247
    %3735 = vmatpush.bf16.msra.mxu0 %v1243
    %3736 = vmatpush.bf16.msra.mxu0 %v1239
    %3737 = vmatpush.bf16.msra.mxu0 %v1235
    %3738 = vmatpush.bf16.msra.mxu0 %v1231
    %3739 = vmatpush.bf16.msra.mxu0 %v1227
    %3740 = vmatmul.bf16.gmra.mxu0 %v3640
    %v3741 = vpop.f32.mrf.mxu0
    %v3742 = vadd.f32 %v3729, %v3741
    %v3743 = vpop.f32.mrf.mxu0
    %3744 = vdwg.mxu0
    %v3745 = vsub.f32 0.0, %v3664
    %v3746 = vsub.f32 0.0, %v3690
    %v3747 = vsub.f32 0.0, %v3716
    %v3748 = vmul.f32 %v3745, 1.442695
    %v3749 = vpow.pop %v3748
    %v3750 = vmul.f32 %v3746, 1.442695
    %v3751 = vpow.pop %v3750
    %v3752 = vmul.f32 %v3747, 1.442695
    %v3753 = vpow.pop %v3752
    %v3754 = vadd.f32 %v3749, 1.0
    %v3755 = vadd.f32 %v3751, 1.0
    %v3756 = vadd.f32 %v3753, 1.0
    %v3757 = vrcp.pop %v3754
    %v3758 = vrcp.pop %v3755
    %v3759 = vrcp.pop %v3756
    %v3760 = vtanh.pop %v3742
    %v3761 = vmul.f32 %v3758, %v3552
    %v3762 = vmul.f32 %v3757, %v3760
    %v3763 = vadd.f32 %v3761, %v3762
    %v3764 = vtanh.pop %v3763
    %v3765 = vmul.f32 %v3759, %v3764
    %s3766 = smul.u32 12, 4
    %s3767 = smul.addr %s3766, 8
    %s3768 = scalar_lea.vmem [#allocation2], %s3767
    %v3769 = vld [vmem:[%s3768] sm:$0xff]
    %v3770 = vld [vmem:[%s3768 + $0x8] sm:$0xff]
    %v3771 = vld [vmem:[%s3768 + $0x10] sm:$0xff]
    %v3772 = vld [vmem:[%s3768 + $0x18] sm:$0xff]
    %3773 = vmatpush.bf16.msra.mxu0 %v812
    %3774 = vmatpush.bf16.msra.mxu0 %v808
    %3775 = vmatpush.bf16.msra.mxu0 %v804
    %3776 = vmatpush.bf16.msra.mxu0 %v800
    %3777 = vmatpush.bf16.msra.mxu0 %v796
    %3778 = vmatpush.bf16.msra.mxu0 %v792
    %3779 = vmatpush.bf16.msra.mxu0 %v788
    %3780 = vmatpush.bf16.msra.mxu0 %v784
    %3781 = vmatmul.bf16.gmra.mxu0 %v3639
    %v3782 = vpop.f32.mrf.mxu0
    %v3783 = vadd.f32 0.0, %v3782
    %v3784 = vpop.f32.mrf.mxu0
    %3785 = vdwg.mxu0
    %3786 = vmatpush.bf16.msra.mxu0 %v813
    %3787 = vmatpush.bf16.msra.mxu0 %v809
    %3788 = vmatpush.bf16.msra.mxu0 %v805
    %3789 = vmatpush.bf16.msra.mxu0 %v801
    %3790 = vmatpush.bf16.msra.mxu0 %v797
    %3791 = vmatpush.bf16.msra.mxu0 %v793
    %3792 = vmatpush.bf16.msra.mxu0 %v789
    %3793 = vmatpush.bf16.msra.mxu0 %v785
    %3794 = vmatmul.bf16.gmra.mxu0 %v3639
    %v3795 = vpop.f32.mrf.mxu0
    %v3796 = vadd.f32 0.0, %v3795
    %v3797 = vpop.f32.mrf.mxu0
    %3798 = vdwg.mxu0
    %3799 = vmatpush.bf16.msra.mxu0 %v814
    %3800 = vmatpush.bf16.msra.mxu0 %v810
    %3801 = vmatpush.bf16.msra.mxu0 %v806
    %3802 = vmatpush.bf16.msra.mxu0 %v802
    %3803 = vmatpush.bf16.msra.mxu0 %v798
    %3804 = vmatpush.bf16.msra.mxu0 %v794
    %3805 = vmatpush.bf16.msra.mxu0 %v790
    %3806 = vmatpush.bf16.msra.mxu0 %v786
    %3807 = vmatmul.bf16.gmra.mxu0 %v3639
    %v3808 = vpop.f32.mrf.mxu0
    %v3809 = vadd.f32 0.0, %v3808
    %v3810 = vpop.f32.mrf.mxu0
    %3811 = vdwg.mxu0
    %3812 = vmatpush.bf16.msra.mxu0 %v815
    %3813 = vmatpush.bf16.msra.mxu0 %v811
    %3814 = vmatpush.bf16.msra.mxu0 %v807
    %3815 = vmatpush.bf16.msra.mxu0 %v803
    %3816 = vmatpush.bf16.msra.mxu0 %v799
    %3817 = vmatpush.bf16.msra.mxu0 %v795
    %3818 = vmatpush.bf16.msra.mxu0 %v791
    %3819 = vmatpush.bf16.msra.mxu0 %v787
    %3820 = vmatmul.bf16.gmra.mxu0 %v3639
    %v3821 = vpop.f32.mrf.mxu0
    %v3822 = vadd.f32 0.0, %v3821
    %v3823 = vpop.f32.mrf.mxu0
    %3824 = vdwg.mxu0
    %v3825 = vadd.f32 %v3769, %v3783
    %v3826 = vadd.f32 %v3770, %v3796
    %v3827 = vadd.f32 %v3771, %v3809
    %v3828 = vadd.f32 %v3772, %v3822
    %v3829 = vsub.f32 0.0, %v3825
    %v3830 = vsub.f32 0.0, %v3826
    %v3831 = vsub.f32 0.0, %v3827
    %v3832 = vmul.f32 %v3829, 1.442695
    %v3833 = vpow.pop %v3832
    %v3834 = vmul.f32 %v3830, 1.442695
    %v3835 = vpow.pop %v3834
    %v3836 = vmul.f32 %v3831, 1.442695
    %v3837 = vpow.pop %v3836
    %v3838 = vadd.f32 %v3833, 1.0
    %v3839 = vadd.f32 %v3835, 1.0
    %v3840 = vadd.f32 %v3837, 1.0
    %v3841 = vrcp.pop %v3838
    %v3842 = vrcp.pop %v3839
    %v3843 = vrcp.pop %v3840
    %v3844 = vtanh.pop %v3828
    %v3845 = vmul.f32 %v3842, %v3636
    %v3846 = vmul.f32 %v3841, %v3844
    %v3847 = vadd.f32 %v3845, %v3846
    %v3848 = vtanh.pop %v3847
    %v3849 = vmul.f32 %v3843, %v3848
    %v3850 = vpack.c.bf16 %v3849, %v3849
    %v3851 = vpack.c.bf16 %v3765, %v3765
    %3852 = vmatpush.bf16.msra.mxu0 %v1220
    %3853 = vmatpush.bf16.msra.mxu0 %v1216
    %3854 = vmatpush.bf16.msra.mxu0 %v1212
    %3855 = vmatpush.bf16.msra.mxu0 %v1208
    %3856 = vmatpush.bf16.msra.mxu0 %v1204
    %3857 = vmatpush.bf16.msra.mxu0 %v1200
    %3858 = vmatpush.bf16.msra.mxu0 %v1196
    %3859 = vmatpush.bf16.msra.mxu0 %v1192
    %3860 = vmatmul.bf16.gmra.mxu0 %v3850
    %v3861 = vpop.f32.mrf.mxu0
    %v3862 = vadd.f32 %v992, %v3861
    %v3863 = vpop.f32.mrf.mxu0
    %3864 = vdwg.mxu0
    %3865 = vmatpush.bf16.msra.mxu0 %v1252
    %3866 = vmatpush.bf16.msra.mxu0 %v1248
    %3867 = vmatpush.bf16.msra.mxu0 %v1244
    %3868 = vmatpush.bf16.msra.mxu0 %v1240
    %3869 = vmatpush.bf16.msra.mxu0 %v1236
    %3870 = vmatpush.bf16.msra.mxu0 %v1232
    %3871 = vmatpush.bf16.msra.mxu0 %v1228
    %3872 = vmatpush.bf16.msra.mxu0 %v1224
    %3873 = vmatmul.bf16.gmra.mxu0 %v3851
    %v3874 = vpop.f32.mrf.mxu0
    %v3875 = vadd.f32 %v3862, %v3874
    %v3876 = vpop.f32.mrf.mxu0
    %3877 = vdwg.mxu0
    %3878 = vmatpush.bf16.msra.mxu0 %v1221
    %3879 = vmatpush.bf16.msra.mxu0 %v1217
    %3880 = vmatpush.bf16.msra.mxu0 %v1213
    %3881 = vmatpush.bf16.msra.mxu0 %v1209
    %3882 = vmatpush.bf16.msra.mxu0 %v1205
    %3883 = vmatpush.bf16.msra.mxu0 %v1201
    %3884 = vmatpush.bf16.msra.mxu0 %v1197
    %3885 = vmatpush.bf16.msra.mxu0 %v1193
    %3886 = vmatmul.bf16.gmra.mxu0 %v3850
    %v3887 = vpop.f32.mrf.mxu0
    %v3888 = vadd.f32 %v993, %v3887
    %v3889 = vpop.f32.mrf.mxu0
    %3890 = vdwg.mxu0
    %3891 = vmatpush.bf16.msra.mxu0 %v1253
    %3892 = vmatpush.bf16.msra.mxu0 %v1249
    %3893 = vmatpush.bf16.msra.mxu0 %v1245
    %3894 = vmatpush.bf16.msra.mxu0 %v1241
    %3895 = vmatpush.bf16.msra.mxu0 %v1237
    %3896 = vmatpush.bf16.msra.mxu0 %v1233
    %3897 = vmatpush.bf16.msra.mxu0 %v1229
    %3898 = vmatpush.bf16.msra.mxu0 %v1225
    %3899 = vmatmul.bf16.gmra.mxu0 %v3851
    %v3900 = vpop.f32.mrf.mxu0
    %v3901 = vadd.f32 %v3888, %v3900
    %v3902 = vpop.f32.mrf.mxu0
    %3903 = vdwg.mxu0
    %3904 = vmatpush.bf16.msra.mxu0 %v1222
    %3905 = vmatpush.bf16.msra.mxu0 %v1218
    %3906 = vmatpush.bf16.msra.mxu0 %v1214
    %3907 = vmatpush.bf16.msra.mxu0 %v1210
    %3908 = vmatpush.bf16.msra.mxu0 %v1206
    %3909 = vmatpush.bf16.msra.mxu0 %v1202
    %3910 = vmatpush.bf16.msra.mxu0 %v1198
    %3911 = vmatpush.bf16.msra.mxu0 %v1194
    %3912 = vmatmul.bf16.gmra.mxu0 %v3850
    %v3913 = vpop.f32.mrf.mxu0
    %v3914 = vadd.f32 %v994, %v3913
    %v3915 = vpop.f32.mrf.mxu0
    %3916 = vdwg.mxu0
    %3917 = vmatpush.bf16.msra.mxu0 %v1254
    %3918 = vmatpush.bf16.msra.mxu0 %v1250
    %3919 = vmatpush.bf16.msra.mxu0 %v1246
    %3920 = vmatpush.bf16.msra.mxu0 %v1242
    %3921 = vmatpush.bf16.msra.mxu0 %v1238
    %3922 = vmatpush.bf16.msra.mxu0 %v1234
    %3923 = vmatpush.bf16.msra.mxu0 %v1230
    %3924 = vmatpush.bf16.msra.mxu0 %v1226
    %3925 = vmatmul.bf16.gmra.mxu0 %v3851
    %v3926 = vpop.f32.mrf.mxu0
    %v3927 = vadd.f32 %v3914, %v3926
    %v3928 = vpop.f32.mrf.mxu0
    %3929 = vdwg.mxu0
    %3930 = vmatpush.bf16.msra.mxu0 %v1223
    %3931 = vmatpush.bf16.msra.mxu0 %v1219
    %3932 = vmatpush.bf16.msra.mxu0 %v1215
    %3933 = vmatpush.bf16.msra.mxu0 %v1211
    %3934 = vmatpush.bf16.msra.mxu0 %v1207
    %3935 = vmatpush.bf16.msra.mxu0 %v1203
    %3936 = vmatpush.bf16.msra.mxu0 %v1199
    %3937 = vmatpush.bf16.msra.mxu0 %v1195
    %3938 = vmatmul.bf16.gmra.mxu0 %v3850
    %v3939 = vpop.f32.mrf.mxu0
    %v3940 = vadd.f32 %v995, %v3939
    %v3941 = vpop.f32.mrf.mxu0
    %3942 = vdwg.mxu0
    %3943 = vmatpush.bf16.msra.mxu0 %v1255
    %3944 = vmatpush.bf16.msra.mxu0 %v1251
    %3945 = vmatpush.bf16.msra.mxu0 %v1247
    %3946 = vmatpush.bf16.msra.mxu0 %v1243
    %3947 = vmatpush.bf16.msra.mxu0 %v1239
    %3948 = vmatpush.bf16.msra.mxu0 %v1235
    %3949 = vmatpush.bf16.msra.mxu0 %v1231
    %3950 = vmatpush.bf16.msra.mxu0 %v1227
    %3951 = vmatmul.bf16.gmra.mxu0 %v3851
    %v3952 = vpop.f32.mrf.mxu0
    %v3953 = vadd.f32 %v3940, %v3952
    %v3954 = vpop.f32.mrf.mxu0
    %3955 = vdwg.mxu0
    %v3956 = vsub.f32 0.0, %v3875
    %v3957 = vsub.f32 0.0, %v3901
    %v3958 = vsub.f32 0.0, %v3927
    %v3959 = vmul.f32 %v3956, 1.442695
    %v3960 = vpow.pop %v3959
    %v3961 = vmul.f32 %v3957, 1.442695
    %v3962 = vpow.pop %v3961
    %v3963 = vmul.f32 %v3958, 1.442695
    %v3964 = vpow.pop %v3963
    %v3965 = vadd.f32 %v3960, 1.0
    %v3966 = vadd.f32 %v3962, 1.0
    %v3967 = vadd.f32 %v3964, 1.0
    %v3968 = vrcp.pop %v3965
    %v3969 = vrcp.pop %v3966
    %v3970 = vrcp.pop %v3967
    %v3971 = vtanh.pop %v3953
    %v3972 = vmul.f32 %v3969, %v3763
    %v3973 = vmul.f32 %v3968, %v3971
    %v3974 = vadd.f32 %v3972, %v3973
    %v3975 = vtanh.pop %v3974
    %v3976 = vmul.f32 %v3970, %v3975
    %s3977 = smul.u32 13, 4
    %s3978 = smul.addr %s3977, 8
    %s3979 = scalar_lea.vmem [#allocation2], %s3978
    %v3980 = vld [vmem:[%s3979] sm:$0xff]
    %v3981 = vld [vmem:[%s3979 + $0x8] sm:$0xff]
    %v3982 = vld [vmem:[%s3979 + $0x10] sm:$0xff]
    %v3983 = vld [vmem:[%s3979 + $0x18] sm:$0xff]
    %3984 = vmatpush.bf16.msra.mxu0 %v812
    %3985 = vmatpush.bf16.msra.mxu0 %v808
    %3986 = vmatpush.bf16.msra.mxu0 %v804
    %3987 = vmatpush.bf16.msra.mxu0 %v800
    %3988 = vmatpush.bf16.msra.mxu0 %v796
    %3989 = vmatpush.bf16.msra.mxu0 %v792
    %3990 = vmatpush.bf16.msra.mxu0 %v788
    %3991 = vmatpush.bf16.msra.mxu0 %v784
    %3992 = vmatmul.bf16.gmra.mxu0 %v3850
    %v3993 = vpop.f32.mrf.mxu0
    %v3994 = vadd.f32 0.0, %v3993
    %v3995 = vpop.f32.mrf.mxu0
    %3996 = vdwg.mxu0
    %3997 = vmatpush.bf16.msra.mxu0 %v813
    %3998 = vmatpush.bf16.msra.mxu0 %v809
    %3999 = vmatpush.bf16.msra.mxu0 %v805
    %4000 = vmatpush.bf16.msra.mxu0 %v801
    %4001 = vmatpush.bf16.msra.mxu0 %v797
    %4002 = vmatpush.bf16.msra.mxu0 %v793
    %4003 = vmatpush.bf16.msra.mxu0 %v789
    %4004 = vmatpush.bf16.msra.mxu0 %v785
    %4005 = vmatmul.bf16.gmra.mxu0 %v3850
    %v4006 = vpop.f32.mrf.mxu0
    %v4007 = vadd.f32 0.0, %v4006
    %v4008 = vpop.f32.mrf.mxu0
    %4009 = vdwg.mxu0
    %4010 = vmatpush.bf16.msra.mxu0 %v814
    %4011 = vmatpush.bf16.msra.mxu0 %v810
    %4012 = vmatpush.bf16.msra.mxu0 %v806
    %4013 = vmatpush.bf16.msra.mxu0 %v802
    %4014 = vmatpush.bf16.msra.mxu0 %v798
    %4015 = vmatpush.bf16.msra.mxu0 %v794
    %4016 = vmatpush.bf16.msra.mxu0 %v790
    %4017 = vmatpush.bf16.msra.mxu0 %v786
    %4018 = vmatmul.bf16.gmra.mxu0 %v3850
    %v4019 = vpop.f32.mrf.mxu0
    %v4020 = vadd.f32 0.0, %v4019
    %v4021 = vpop.f32.mrf.mxu0
    %4022 = vdwg.mxu0
    %4023 = vmatpush.bf16.msra.mxu0 %v815
    %4024 = vmatpush.bf16.msra.mxu0 %v811
    %4025 = vmatpush.bf16.msra.mxu0 %v807
    %4026 = vmatpush.bf16.msra.mxu0 %v803
    %4027 = vmatpush.bf16.msra.mxu0 %v799
    %4028 = vmatpush.bf16.msra.mxu0 %v795
    %4029 = vmatpush.bf16.msra.mxu0 %v791
    %4030 = vmatpush.bf16.msra.mxu0 %v787
    %4031 = vmatmul.bf16.gmra.mxu0 %v3850
    %v4032 = vpop.f32.mrf.mxu0
    %v4033 = vadd.f32 0.0, %v4032
    %v4034 = vpop.f32.mrf.mxu0
    %4035 = vdwg.mxu0
    %v4036 = vadd.f32 %v3980, %v3994
    %v4037 = vadd.f32 %v3981, %v4007
    %v4038 = vadd.f32 %v3982, %v4020
    %v4039 = vadd.f32 %v3983, %v4033
    %v4040 = vsub.f32 0.0, %v4036
    %v4041 = vsub.f32 0.0, %v4037
    %v4042 = vsub.f32 0.0, %v4038
    %v4043 = vmul.f32 %v4040, 1.442695
    %v4044 = vpow.pop %v4043
    %v4045 = vmul.f32 %v4041, 1.442695
    %v4046 = vpow.pop %v4045
    %v4047 = vmul.f32 %v4042, 1.442695
    %v4048 = vpow.pop %v4047
    %v4049 = vadd.f32 %v4044, 1.0
    %v4050 = vadd.f32 %v4046, 1.0
    %v4051 = vadd.f32 %v4048, 1.0
    %v4052 = vrcp.pop %v4049
    %v4053 = vrcp.pop %v4050
    %v4054 = vrcp.pop %v4051
    %v4055 = vtanh.pop %v4039
    %v4056 = vmul.f32 %v4053, %v3847
    %v4057 = vmul.f32 %v4052, %v4055
    %v4058 = vadd.f32 %v4056, %v4057
    %v4059 = vtanh.pop %v4058
    %v4060 = vmul.f32 %v4054, %v4059
    %v4061 = vpack.c.bf16 %v4060, %v4060
    %v4062 = vpack.c.bf16 %v3976, %v3976
    %4063 = vmatpush.bf16.msra.mxu0 %v1220
    %4064 = vmatpush.bf16.msra.mxu0 %v1216
    %4065 = vmatpush.bf16.msra.mxu0 %v1212
    %4066 = vmatpush.bf16.msra.mxu0 %v1208
    %4067 = vmatpush.bf16.msra.mxu0 %v1204
    %4068 = vmatpush.bf16.msra.mxu0 %v1200
    %4069 = vmatpush.bf16.msra.mxu0 %v1196
    %4070 = vmatpush.bf16.msra.mxu0 %v1192
    %4071 = vmatmul.bf16.gmra.mxu0 %v4061
    %v4072 = vpop.f32.mrf.mxu0
    %v4073 = vadd.f32 %v992, %v4072
    %v4074 = vpop.f32.mrf.mxu0
    %4075 = vdwg.mxu0
    %4076 = vmatpush.bf16.msra.mxu0 %v1252
    %4077 = vmatpush.bf16.msra.mxu0 %v1248
    %4078 = vmatpush.bf16.msra.mxu0 %v1244
    %4079 = vmatpush.bf16.msra.mxu0 %v1240
    %4080 = vmatpush.bf16.msra.mxu0 %v1236
    %4081 = vmatpush.bf16.msra.mxu0 %v1232
    %4082 = vmatpush.bf16.msra.mxu0 %v1228
    %4083 = vmatpush.bf16.msra.mxu0 %v1224
    %4084 = vmatmul.bf16.gmra.mxu0 %v4062
    %v4085 = vpop.f32.mrf.mxu0
    %v4086 = vadd.f32 %v4073, %v4085
    %v4087 = vpop.f32.mrf.mxu0
    %4088 = vdwg.mxu0
    %4089 = vmatpush.bf16.msra.mxu0 %v1221
    %4090 = vmatpush.bf16.msra.mxu0 %v1217
    %4091 = vmatpush.bf16.msra.mxu0 %v1213
    %4092 = vmatpush.bf16.msra.mxu0 %v1209
    %4093 = vmatpush.bf16.msra.mxu0 %v1205
    %4094 = vmatpush.bf16.msra.mxu0 %v1201
    %4095 = vmatpush.bf16.msra.mxu0 %v1197
    %4096 = vmatpush.bf16.msra.mxu0 %v1193
    %4097 = vmatmul.bf16.gmra.mxu0 %v4061
    %v4098 = vpop.f32.mrf.mxu0
    %v4099 = vadd.f32 %v993, %v4098
    %v4100 = vpop.f32.mrf.mxu0
    %4101 = vdwg.mxu0
    %4102 = vmatpush.bf16.msra.mxu0 %v1253
    %4103 = vmatpush.bf16.msra.mxu0 %v1249
    %4104 = vmatpush.bf16.msra.mxu0 %v1245
    %4105 = vmatpush.bf16.msra.mxu0 %v1241
    %4106 = vmatpush.bf16.msra.mxu0 %v1237
    %4107 = vmatpush.bf16.msra.mxu0 %v1233
    %4108 = vmatpush.bf16.msra.mxu0 %v1229
    %4109 = vmatpush.bf16.msra.mxu0 %v1225
    %4110 = vmatmul.bf16.gmra.mxu0 %v4062
    %v4111 = vpop.f32.mrf.mxu0
    %v4112 = vadd.f32 %v4099, %v4111
    %v4113 = vpop.f32.mrf.mxu0
    %4114 = vdwg.mxu0
    %4115 = vmatpush.bf16.msra.mxu0 %v1222
    %4116 = vmatpush.bf16.msra.mxu0 %v1218
    %4117 = vmatpush.bf16.msra.mxu0 %v1214
    %4118 = vmatpush.bf16.msra.mxu0 %v1210
    %4119 = vmatpush.bf16.msra.mxu0 %v1206
    %4120 = vmatpush.bf16.msra.mxu0 %v1202
    %4121 = vmatpush.bf16.msra.mxu0 %v1198
    %4122 = vmatpush.bf16.msra.mxu0 %v1194
    %4123 = vmatmul.bf16.gmra.mxu0 %v4061
    %v4124 = vpop.f32.mrf.mxu0
    %v4125 = vadd.f32 %v994, %v4124
    %v4126 = vpop.f32.mrf.mxu0
    %4127 = vdwg.mxu0
    %4128 = vmatpush.bf16.msra.mxu0 %v1254
    %4129 = vmatpush.bf16.msra.mxu0 %v1250
    %4130 = vmatpush.bf16.msra.mxu0 %v1246
    %4131 = vmatpush.bf16.msra.mxu0 %v1242
    %4132 = vmatpush.bf16.msra.mxu0 %v1238
    %4133 = vmatpush.bf16.msra.mxu0 %v1234
    %4134 = vmatpush.bf16.msra.mxu0 %v1230
    %4135 = vmatpush.bf16.msra.mxu0 %v1226
    %4136 = vmatmul.bf16.gmra.mxu0 %v4062
    %v4137 = vpop.f32.mrf.mxu0
    %v4138 = vadd.f32 %v4125, %v4137
    %v4139 = vpop.f32.mrf.mxu0
    %4140 = vdwg.mxu0
    %4141 = vmatpush.bf16.msra.mxu0 %v1223
    %4142 = vmatpush.bf16.msra.mxu0 %v1219
    %4143 = vmatpush.bf16.msra.mxu0 %v1215
    %4144 = vmatpush.bf16.msra.mxu0 %v1211
    %4145 = vmatpush.bf16.msra.mxu0 %v1207
    %4146 = vmatpush.bf16.msra.mxu0 %v1203
    %4147 = vmatpush.bf16.msra.mxu0 %v1199
    %4148 = vmatpush.bf16.msra.mxu0 %v1195
    %4149 = vmatmul.bf16.gmra.mxu0 %v4061
    %v4150 = vpop.f32.mrf.mxu0
    %v4151 = vadd.f32 %v995, %v4150
    %v4152 = vpop.f32.mrf.mxu0
    %4153 = vdwg.mxu0
    %4154 = vmatpush.bf16.msra.mxu0 %v1255
    %4155 = vmatpush.bf16.msra.mxu0 %v1251
    %4156 = vmatpush.bf16.msra.mxu0 %v1247
    %4157 = vmatpush.bf16.msra.mxu0 %v1243
    %4158 = vmatpush.bf16.msra.mxu0 %v1239
    %4159 = vmatpush.bf16.msra.mxu0 %v1235
    %4160 = vmatpush.bf16.msra.mxu0 %v1231
    %4161 = vmatpush.bf16.msra.mxu0 %v1227
    %4162 = vmatmul.bf16.gmra.mxu0 %v4062
    %v4163 = vpop.f32.mrf.mxu0
    %v4164 = vadd.f32 %v4151, %v4163
    %v4165 = vpop.f32.mrf.mxu0
    %4166 = vdwg.mxu0
    %v4167 = vsub.f32 0.0, %v4086
    %v4168 = vsub.f32 0.0, %v4112
    %v4169 = vsub.f32 0.0, %v4138
    %v4170 = vmul.f32 %v4167, 1.442695
    %v4171 = vpow.pop %v4170
    %v4172 = vmul.f32 %v4168, 1.442695
    %v4173 = vpow.pop %v4172
    %v4174 = vmul.f32 %v4169, 1.442695
    %v4175 = vpow.pop %v4174
    %v4176 = vadd.f32 %v4171, 1.0
    %v4177 = vadd.f32 %v4173, 1.0
    %v4178 = vadd.f32 %v4175, 1.0
    %v4179 = vrcp.pop %v4176
    %v4180 = vrcp.pop %v4177
    %v4181 = vrcp.pop %v4178
    %v4182 = vtanh.pop %v4164
    %v4183 = vmul.f32 %v4180, %v3974
    %v4184 = vmul.f32 %v4179, %v4182
    %v4185 = vadd.f32 %v4183, %v4184
    %v4186 = vtanh.pop %v4185
    %v4187 = vmul.f32 %v4181, %v4186
    %s4188 = smul.u32 14, 4
    %s4189 = smul.addr %s4188, 8
    %s4190 = scalar_lea.vmem [#allocation2], %s4189
    %v4191 = vld [vmem:[%s4190] sm:$0xff]
    %v4192 = vld [vmem:[%s4190 + $0x8] sm:$0xff]
    %v4193 = vld [vmem:[%s4190 + $0x10] sm:$0xff]
    %v4194 = vld [vmem:[%s4190 + $0x18] sm:$0xff]
    %4195 = vmatpush.bf16.msra.mxu0 %v812
    %4196 = vmatpush.bf16.msra.mxu0 %v808
    %4197 = vmatpush.bf16.msra.mxu0 %v804
    %4198 = vmatpush.bf16.msra.mxu0 %v800
    %4199 = vmatpush.bf16.msra.mxu0 %v796
    %4200 = vmatpush.bf16.msra.mxu0 %v792
    %4201 = vmatpush.bf16.msra.mxu0 %v788
    %4202 = vmatpush.bf16.msra.mxu0 %v784
    %4203 = vmatmul.bf16.gmra.mxu0 %v4061
    %v4204 = vpop.f32.mrf.mxu0
    %v4205 = vadd.f32 0.0, %v4204
    %v4206 = vpop.f32.mrf.mxu0
    %4207 = vdwg.mxu0
    %4208 = vmatpush.bf16.msra.mxu0 %v813
    %4209 = vmatpush.bf16.msra.mxu0 %v809
    %4210 = vmatpush.bf16.msra.mxu0 %v805
    %4211 = vmatpush.bf16.msra.mxu0 %v801
    %4212 = vmatpush.bf16.msra.mxu0 %v797
    %4213 = vmatpush.bf16.msra.mxu0 %v793
    %4214 = vmatpush.bf16.msra.mxu0 %v789
    %4215 = vmatpush.bf16.msra.mxu0 %v785
    %4216 = vmatmul.bf16.gmra.mxu0 %v4061
    %v4217 = vpop.f32.mrf.mxu0
    %v4218 = vadd.f32 0.0, %v4217
    %v4219 = vpop.f32.mrf.mxu0
    %4220 = vdwg.mxu0
    %4221 = vmatpush.bf16.msra.mxu0 %v814
    %4222 = vmatpush.bf16.msra.mxu0 %v810
    %4223 = vmatpush.bf16.msra.mxu0 %v806
    %4224 = vmatpush.bf16.msra.mxu0 %v802
    %4225 = vmatpush.bf16.msra.mxu0 %v798
    %4226 = vmatpush.bf16.msra.mxu0 %v794
    %4227 = vmatpush.bf16.msra.mxu0 %v790
    %4228 = vmatpush.bf16.msra.mxu0 %v786
    %4229 = vmatmul.bf16.gmra.mxu0 %v4061
    %v4230 = vpop.f32.mrf.mxu0
    %v4231 = vadd.f32 0.0, %v4230
    %v4232 = vpop.f32.mrf.mxu0
    %4233 = vdwg.mxu0
    %4234 = vmatpush.bf16.msra.mxu0 %v815
    %4235 = vmatpush.bf16.msra.mxu0 %v811
    %4236 = vmatpush.bf16.msra.mxu0 %v807
    %4237 = vmatpush.bf16.msra.mxu0 %v803
    %4238 = vmatpush.bf16.msra.mxu0 %v799
    %4239 = vmatpush.bf16.msra.mxu0 %v795
    %4240 = vmatpush.bf16.msra.mxu0 %v791
    %4241 = vmatpush.bf16.msra.mxu0 %v787
    %4242 = vmatmul.bf16.gmra.mxu0 %v4061
    %v4243 = vpop.f32.mrf.mxu0
    %v4244 = vadd.f32 0.0, %v4243
    %v4245 = vpop.f32.mrf.mxu0
    %4246 = vdwg.mxu0
    %v4247 = vadd.f32 %v4191, %v4205
    %v4248 = vadd.f32 %v4192, %v4218
    %v4249 = vadd.f32 %v4193, %v4231
    %v4250 = vadd.f32 %v4194, %v4244
    %v4251 = vsub.f32 0.0, %v4247
    %v4252 = vsub.f32 0.0, %v4248
    %v4253 = vsub.f32 0.0, %v4249
    %v4254 = vmul.f32 %v4251, 1.442695
    %v4255 = vpow.pop %v4254
    %v4256 = vmul.f32 %v4252, 1.442695
    %v4257 = vpow.pop %v4256
    %v4258 = vmul.f32 %v4253, 1.442695
    %v4259 = vpow.pop %v4258
    %v4260 = vadd.f32 %v4255, 1.0
    %v4261 = vadd.f32 %v4257, 1.0
    %v4262 = vadd.f32 %v4259, 1.0
    %v4263 = vrcp.pop %v4260
    %v4264 = vrcp.pop %v4261
    %v4265 = vrcp.pop %v4262
    %v4266 = vtanh.pop %v4250
    %v4267 = vmul.f32 %v4264, %v4058
    %v4268 = vmul.f32 %v4263, %v4266
    %v4269 = vadd.f32 %v4267, %v4268
    %v4270 = vtanh.pop %v4269
    %v4271 = vmul.f32 %v4265, %v4270
    %v4272 = vpack.c.bf16 %v4271, %v4271
    %v4273 = vpack.c.bf16 %v4187, %v4187
    %4274 = vmatpush.bf16.msra.mxu0 %v1220
    %4275 = vmatpush.bf16.msra.mxu0 %v1216
    %4276 = vmatpush.bf16.msra.mxu0 %v1212
    %4277 = vmatpush.bf16.msra.mxu0 %v1208
    %4278 = vmatpush.bf16.msra.mxu0 %v1204
    %4279 = vmatpush.bf16.msra.mxu0 %v1200
    %4280 = vmatpush.bf16.msra.mxu0 %v1196
    %4281 = vmatpush.bf16.msra.mxu0 %v1192
    %4282 = vmatmul.bf16.gmra.mxu0 %v4272
    %v4283 = vpop.f32.mrf.mxu0
    %v4284 = vadd.f32 %v992, %v4283
    %v4285 = vpop.f32.mrf.mxu0
    %4286 = vdwg.mxu0
    %4287 = vmatpush.bf16.msra.mxu0 %v1252
    %4288 = vmatpush.bf16.msra.mxu0 %v1248
    %4289 = vmatpush.bf16.msra.mxu0 %v1244
    %4290 = vmatpush.bf16.msra.mxu0 %v1240
    %4291 = vmatpush.bf16.msra.mxu0 %v1236
    %4292 = vmatpush.bf16.msra.mxu0 %v1232
    %4293 = vmatpush.bf16.msra.mxu0 %v1228
    %4294 = vmatpush.bf16.msra.mxu0 %v1224
    %4295 = vmatmul.bf16.gmra.mxu0 %v4273
    %v4296 = vpop.f32.mrf.mxu0
    %v4297 = vadd.f32 %v4284, %v4296
    %v4298 = vpop.f32.mrf.mxu0
    %4299 = vdwg.mxu0
    %4300 = vmatpush.bf16.msra.mxu0 %v1221
    %4301 = vmatpush.bf16.msra.mxu0 %v1217
    %4302 = vmatpush.bf16.msra.mxu0 %v1213
    %4303 = vmatpush.bf16.msra.mxu0 %v1209
    %4304 = vmatpush.bf16.msra.mxu0 %v1205
    %4305 = vmatpush.bf16.msra.mxu0 %v1201
    %4306 = vmatpush.bf16.msra.mxu0 %v1197
    %4307 = vmatpush.bf16.msra.mxu0 %v1193
    %4308 = vmatmul.bf16.gmra.mxu0 %v4272
    %v4309 = vpop.f32.mrf.mxu0
    %v4310 = vadd.f32 %v993, %v4309
    %v4311 = vpop.f32.mrf.mxu0
    %4312 = vdwg.mxu0
    %4313 = vmatpush.bf16.msra.mxu0 %v1253
    %4314 = vmatpush.bf16.msra.mxu0 %v1249
    %4315 = vmatpush.bf16.msra.mxu0 %v1245
    %4316 = vmatpush.bf16.msra.mxu0 %v1241
    %4317 = vmatpush.bf16.msra.mxu0 %v1237
    %4318 = vmatpush.bf16.msra.mxu0 %v1233
    %4319 = vmatpush.bf16.msra.mxu0 %v1229
    %4320 = vmatpush.bf16.msra.mxu0 %v1225
    %4321 = vmatmul.bf16.gmra.mxu0 %v4273
    %v4322 = vpop.f32.mrf.mxu0
    %v4323 = vadd.f32 %v4310, %v4322
    %v4324 = vpop.f32.mrf.mxu0
    %4325 = vdwg.mxu0
    %4326 = vmatpush.bf16.msra.mxu0 %v1222
    %4327 = vmatpush.bf16.msra.mxu0 %v1218
    %4328 = vmatpush.bf16.msra.mxu0 %v1214
    %4329 = vmatpush.bf16.msra.mxu0 %v1210
    %4330 = vmatpush.bf16.msra.mxu0 %v1206
    %4331 = vmatpush.bf16.msra.mxu0 %v1202
    %4332 = vmatpush.bf16.msra.mxu0 %v1198
    %4333 = vmatpush.bf16.msra.mxu0 %v1194
    %4334 = vmatmul.bf16.gmra.mxu0 %v4272
    %v4335 = vpop.f32.mrf.mxu0
    %v4336 = vadd.f32 %v994, %v4335
    %v4337 = vpop.f32.mrf.mxu0
    %4338 = vdwg.mxu0
    %4339 = vmatpush.bf16.msra.mxu0 %v1254
    %4340 = vmatpush.bf16.msra.mxu0 %v1250
    %4341 = vmatpush.bf16.msra.mxu0 %v1246
    %4342 = vmatpush.bf16.msra.mxu0 %v1242
    %4343 = vmatpush.bf16.msra.mxu0 %v1238
    %4344 = vmatpush.bf16.msra.mxu0 %v1234
    %4345 = vmatpush.bf16.msra.mxu0 %v1230
    %4346 = vmatpush.bf16.msra.mxu0 %v1226
    %4347 = vmatmul.bf16.gmra.mxu0 %v4273
    %v4348 = vpop.f32.mrf.mxu0
    %v4349 = vadd.f32 %v4336, %v4348
    %v4350 = vpop.f32.mrf.mxu0
    %4351 = vdwg.mxu0
    %4352 = vmatpush.bf16.msra.mxu0 %v1223
    %4353 = vmatpush.bf16.msra.mxu0 %v1219
    %4354 = vmatpush.bf16.msra.mxu0 %v1215
    %4355 = vmatpush.bf16.msra.mxu0 %v1211
    %4356 = vmatpush.bf16.msra.mxu0 %v1207
    %4357 = vmatpush.bf16.msra.mxu0 %v1203
    %4358 = vmatpush.bf16.msra.mxu0 %v1199
    %4359 = vmatpush.bf16.msra.mxu0 %v1195
    %4360 = vmatmul.bf16.gmra.mxu0 %v4272
    %v4361 = vpop.f32.mrf.mxu0
    %v4362 = vadd.f32 %v995, %v4361
    %v4363 = vpop.f32.mrf.mxu0
    %4364 = vdwg.mxu0
    %4365 = vmatpush.bf16.msra.mxu0 %v1255
    %4366 = vmatpush.bf16.msra.mxu0 %v1251
    %4367 = vmatpush.bf16.msra.mxu0 %v1247
    %4368 = vmatpush.bf16.msra.mxu0 %v1243
    %4369 = vmatpush.bf16.msra.mxu0 %v1239
    %4370 = vmatpush.bf16.msra.mxu0 %v1235
    %4371 = vmatpush.bf16.msra.mxu0 %v1231
    %4372 = vmatpush.bf16.msra.mxu0 %v1227
    %4373 = vmatmul.bf16.gmra.mxu0 %v4273
    %v4374 = vpop.f32.mrf.mxu0
    %v4375 = vadd.f32 %v4362, %v4374
    %v4376 = vpop.f32.mrf.mxu0
    %4377 = vdwg.mxu0
    %v4378 = vsub.f32 0.0, %v4297
    %v4379 = vsub.f32 0.0, %v4323
    %v4380 = vsub.f32 0.0, %v4349
    %v4381 = vmul.f32 %v4378, 1.442695
    %v4382 = vpow.pop %v4381
    %v4383 = vmul.f32 %v4379, 1.442695
    %v4384 = vpow.pop %v4383
    %v4385 = vmul.f32 %v4380, 1.442695
    %v4386 = vpow.pop %v4385
    %v4387 = vadd.f32 %v4382, 1.0
    %v4388 = vadd.f32 %v4384, 1.0
    %v4389 = vadd.f32 %v4386, 1.0
    %v4390 = vrcp.pop %v4387
    %v4391 = vrcp.pop %v4388
    %v4392 = vrcp.pop %v4389
    %v4393 = vtanh.pop %v4375
    %v4394 = vmul.f32 %v4391, %v4185
    %v4395 = vmul.f32 %v4390, %v4393
    %v4396 = vadd.f32 %v4394, %v4395
    %v4397 = vtanh.pop %v4396
    %v4398 = vmul.f32 %v4392, %v4397
    %s4399 = smul.u32 15, 4
    %s4400 = smul.addr %s4399, 8
    %s4401 = scalar_lea.vmem [#allocation2], %s4400
    %v4402 = vld [vmem:[%s4401] sm:$0xff]
    %v4403 = vld [vmem:[%s4401 + $0x8] sm:$0xff]
    %v4404 = vld [vmem:[%s4401 + $0x10] sm:$0xff]
    %v4405 = vld [vmem:[%s4401 + $0x18] sm:$0xff]
    %4406 = vmatpush.bf16.msra.mxu0 %v812
    %4407 = vmatpush.bf16.msra.mxu0 %v808
    %4408 = vmatpush.bf16.msra.mxu0 %v804
    %4409 = vmatpush.bf16.msra.mxu0 %v800
    %4410 = vmatpush.bf16.msra.mxu0 %v796
    %4411 = vmatpush.bf16.msra.mxu0 %v792
    %4412 = vmatpush.bf16.msra.mxu0 %v788
    %4413 = vmatpush.bf16.msra.mxu0 %v784
    %4414 = vmatmul.bf16.gmra.mxu0 %v4272
    %v4415 = vpop.f32.mrf.mxu0
    %v4416 = vadd.f32 0.0, %v4415
    %v4417 = vpop.f32.mrf.mxu0
    %4418 = vdwg.mxu0
    %4419 = vmatpush.bf16.msra.mxu0 %v813
    %4420 = vmatpush.bf16.msra.mxu0 %v809
    %4421 = vmatpush.bf16.msra.mxu0 %v805
    %4422 = vmatpush.bf16.msra.mxu0 %v801
    %4423 = vmatpush.bf16.msra.mxu0 %v797
    %4424 = vmatpush.bf16.msra.mxu0 %v793
    %4425 = vmatpush.bf16.msra.mxu0 %v789
    %4426 = vmatpush.bf16.msra.mxu0 %v785
    %4427 = vmatmul.bf16.gmra.mxu0 %v4272
    %v4428 = vpop.f32.mrf.mxu0
    %v4429 = vadd.f32 0.0, %v4428
    %v4430 = vpop.f32.mrf.mxu0
    %4431 = vdwg.mxu0
    %4432 = vmatpush.bf16.msra.mxu0 %v814
    %4433 = vmatpush.bf16.msra.mxu0 %v810
    %4434 = vmatpush.bf16.msra.mxu0 %v806
    %4435 = vmatpush.bf16.msra.mxu0 %v802
    %4436 = vmatpush.bf16.msra.mxu0 %v798
    %4437 = vmatpush.bf16.msra.mxu0 %v794
    %4438 = vmatpush.bf16.msra.mxu0 %v790
    %4439 = vmatpush.bf16.msra.mxu0 %v786
    %4440 = vmatmul.bf16.gmra.mxu0 %v4272
    %v4441 = vpop.f32.mrf.mxu0
    %v4442 = vadd.f32 0.0, %v4441
    %v4443 = vpop.f32.mrf.mxu0
    %4444 = vdwg.mxu0
    %4445 = vmatpush.bf16.msra.mxu0 %v815
    %4446 = vmatpush.bf16.msra.mxu0 %v811
    %4447 = vmatpush.bf16.msra.mxu0 %v807
    %4448 = vmatpush.bf16.msra.mxu0 %v803
    %4449 = vmatpush.bf16.msra.mxu0 %v799
    %4450 = vmatpush.bf16.msra.mxu0 %v795
    %4451 = vmatpush.bf16.msra.mxu0 %v791
    %4452 = vmatpush.bf16.msra.mxu0 %v787
    %4453 = vmatmul.bf16.gmra.mxu0 %v4272
    %v4454 = vpop.f32.mrf.mxu0
    %v4455 = vadd.f32 0.0, %v4454
    %v4456 = vpop.f32.mrf.mxu0
    %4457 = vdwg.mxu0
    %v4458 = vadd.f32 %v4402, %v4416
    %v4459 = vadd.f32 %v4403, %v4429
    %v4460 = vadd.f32 %v4404, %v4442
    %v4461 = vadd.f32 %v4405, %v4455
    %v4462 = vsub.f32 0.0, %v4458
    %v4463 = vsub.f32 0.0, %v4459
    %v4464 = vsub.f32 0.0, %v4460
    %v4465 = vmul.f32 %v4462, 1.442695
    %v4466 = vpow.pop %v4465
    %v4467 = vmul.f32 %v4463, 1.442695
    %v4468 = vpow.pop %v4467
    %v4469 = vmul.f32 %v4464, 1.442695
    %v4470 = vpow.pop %v4469
    %v4471 = vadd.f32 %v4466, 1.0
    %v4472 = vadd.f32 %v4468, 1.0
    %v4473 = vadd.f32 %v4470, 1.0
    %v4474 = vrcp.pop %v4471
    %v4475 = vrcp.pop %v4472
    %v4476 = vrcp.pop %v4473
    %v4477 = vtanh.pop %v4461
    %v4478 = vmul.f32 %v4475, %v4269
    %v4479 = vmul.f32 %v4474, %v4477
    %v4480 = vadd.f32 %v4478, %v4479
    %v4481 = vtanh.pop %v4480
    %v4482 = vmul.f32 %v4476, %v4481
    %v4483 = vpack.c.bf16 %v4482, %v4482
    %v4484 = vpack.c.bf16 %v4398, %v4398
    %4485 = vmatpush.bf16.msra.mxu0 %v1220
    %4486 = vmatpush.bf16.msra.mxu0 %v1216
    %4487 = vmatpush.bf16.msra.mxu0 %v1212
    %4488 = vmatpush.bf16.msra.mxu0 %v1208
    %4489 = vmatpush.bf16.msra.mxu0 %v1204
    %4490 = vmatpush.bf16.msra.mxu0 %v1200
    %4491 = vmatpush.bf16.msra.mxu0 %v1196
    %4492 = vmatpush.bf16.msra.mxu0 %v1192
    %4493 = vmatmul.bf16.gmra.mxu0 %v4483
    %v4494 = vpop.f32.mrf.mxu0
    %v4495 = vadd.f32 %v992, %v4494
    %v4496 = vpop.f32.mrf.mxu0
    %4497 = vdwg.mxu0
    %4498 = vmatpush.bf16.msra.mxu0 %v1252
    %4499 = vmatpush.bf16.msra.mxu0 %v1248
    %4500 = vmatpush.bf16.msra.mxu0 %v1244
    %4501 = vmatpush.bf16.msra.mxu0 %v1240
    %4502 = vmatpush.bf16.msra.mxu0 %v1236
    %4503 = vmatpush.bf16.msra.mxu0 %v1232
    %4504 = vmatpush.bf16.msra.mxu0 %v1228
    %4505 = vmatpush.bf16.msra.mxu0 %v1224
    %4506 = vmatmul.bf16.gmra.mxu0 %v4484
    %v4507 = vpop.f32.mrf.mxu0
    %v4508 = vadd.f32 %v4495, %v4507
    %v4509 = vpop.f32.mrf.mxu0
    %4510 = vdwg.mxu0
    %4511 = vmatpush.bf16.msra.mxu0 %v1221
    %4512 = vmatpush.bf16.msra.mxu0 %v1217
    %4513 = vmatpush.bf16.msra.mxu0 %v1213
    %4514 = vmatpush.bf16.msra.mxu0 %v1209
    %4515 = vmatpush.bf16.msra.mxu0 %v1205
    %4516 = vmatpush.bf16.msra.mxu0 %v1201
    %4517 = vmatpush.bf16.msra.mxu0 %v1197
    %4518 = vmatpush.bf16.msra.mxu0 %v1193
    %4519 = vmatmul.bf16.gmra.mxu0 %v4483
    %v4520 = vpop.f32.mrf.mxu0
    %v4521 = vadd.f32 %v993, %v4520
    %v4522 = vpop.f32.mrf.mxu0
    %4523 = vdwg.mxu0
    %4524 = vmatpush.bf16.msra.mxu0 %v1253
    %4525 = vmatpush.bf16.msra.mxu0 %v1249
    %4526 = vmatpush.bf16.msra.mxu0 %v1245
    %4527 = vmatpush.bf16.msra.mxu0 %v1241
    %4528 = vmatpush.bf16.msra.mxu0 %v1237
    %4529 = vmatpush.bf16.msra.mxu0 %v1233
    %4530 = vmatpush.bf16.msra.mxu0 %v1229
    %4531 = vmatpush.bf16.msra.mxu0 %v1225
    %4532 = vmatmul.bf16.gmra.mxu0 %v4484
    %v4533 = vpop.f32.mrf.mxu0
    %v4534 = vadd.f32 %v4521, %v4533
    %v4535 = vpop.f32.mrf.mxu0
    %4536 = vdwg.mxu0
    %4537 = vmatpush.bf16.msra.mxu0 %v1222
    %4538 = vmatpush.bf16.msra.mxu0 %v1218
    %4539 = vmatpush.bf16.msra.mxu0 %v1214
    %4540 = vmatpush.bf16.msra.mxu0 %v1210
    %4541 = vmatpush.bf16.msra.mxu0 %v1206
    %4542 = vmatpush.bf16.msra.mxu0 %v1202
    %4543 = vmatpush.bf16.msra.mxu0 %v1198
    %4544 = vmatpush.bf16.msra.mxu0 %v1194
    %4545 = vmatmul.bf16.gmra.mxu0 %v4483
    %v4546 = vpop.f32.mrf.mxu0
    %v4547 = vadd.f32 %v994, %v4546
    %v4548 = vpop.f32.mrf.mxu0
    %4549 = vdwg.mxu0
    %4550 = vmatpush.bf16.msra.mxu0 %v1254
    %4551 = vmatpush.bf16.msra.mxu0 %v1250
    %4552 = vmatpush.bf16.msra.mxu0 %v1246
    %4553 = vmatpush.bf16.msra.mxu0 %v1242
    %4554 = vmatpush.bf16.msra.mxu0 %v1238
    %4555 = vmatpush.bf16.msra.mxu0 %v1234
    %4556 = vmatpush.bf16.msra.mxu0 %v1230
    %4557 = vmatpush.bf16.msra.mxu0 %v1226
    %4558 = vmatmul.bf16.gmra.mxu0 %v4484
    %v4559 = vpop.f32.mrf.mxu0
    %v4560 = vadd.f32 %v4547, %v4559
    %v4561 = vpop.f32.mrf.mxu0
    %4562 = vdwg.mxu0
    %4563 = vmatpush.bf16.msra.mxu0 %v1223
    %4564 = vmatpush.bf16.msra.mxu0 %v1219
    %4565 = vmatpush.bf16.msra.mxu0 %v1215
    %4566 = vmatpush.bf16.msra.mxu0 %v1211
    %4567 = vmatpush.bf16.msra.mxu0 %v1207
    %4568 = vmatpush.bf16.msra.mxu0 %v1203
    %4569 = vmatpush.bf16.msra.mxu0 %v1199
    %4570 = vmatpush.bf16.msra.mxu0 %v1195
    %4571 = vmatmul.bf16.gmra.mxu0 %v4483
    %v4572 = vpop.f32.mrf.mxu0
    %v4573 = vadd.f32 %v995, %v4572
    %v4574 = vpop.f32.mrf.mxu0
    %4575 = vdwg.mxu0
    %4576 = vmatpush.bf16.msra.mxu0 %v1255
    %4577 = vmatpush.bf16.msra.mxu0 %v1251
    %4578 = vmatpush.bf16.msra.mxu0 %v1247
    %4579 = vmatpush.bf16.msra.mxu0 %v1243
    %4580 = vmatpush.bf16.msra.mxu0 %v1239
    %4581 = vmatpush.bf16.msra.mxu0 %v1235
    %4582 = vmatpush.bf16.msra.mxu0 %v1231
    %4583 = vmatpush.bf16.msra.mxu0 %v1227
    %4584 = vmatmul.bf16.gmra.mxu0 %v4484
    %v4585 = vpop.f32.mrf.mxu0
    %v4586 = vadd.f32 %v4573, %v4585
    %v4587 = vpop.f32.mrf.mxu0
    %4588 = vdwg.mxu0
    %v4589 = vsub.f32 0.0, %v4508
    %v4590 = vsub.f32 0.0, %v4534
    %v4591 = vsub.f32 0.0, %v4560
    %v4592 = vmul.f32 %v4589, 1.442695
    %v4593 = vpow.pop %v4592
    %v4594 = vmul.f32 %v4590, 1.442695
    %v4595 = vpow.pop %v4594
    %v4596 = vmul.f32 %v4591, 1.442695
    %v4597 = vpow.pop %v4596
    %v4598 = vadd.f32 %v4593, 1.0
    %v4599 = vadd.f32 %v4595, 1.0
    %v4600 = vadd.f32 %v4597, 1.0
    %v4601 = vrcp.pop %v4598
    %v4602 = vrcp.pop %v4599
    %v4603 = vrcp.pop %v4600
    %v4604 = vtanh.pop %v4586
    %v4605 = vmul.f32 %v4602, %v4396
    %v4606 = vmul.f32 %v4601, %v4604
    %v4607 = vadd.f32 %v4605, %v4606
    %v4608 = vtanh.pop %v4607
    %v4609 = vmul.f32 %v4603, %v4608
    %v4610 = vld [vmem:[#allocation12] sm:$0xff]
    %v4611 = vld [vmem:[#allocation12 + $0x8] sm:$0xff]
    %v4612 = vld [vmem:[#allocation12 + $0x10] sm:$0xff]
    %v4613 = vld [vmem:[#allocation12 + $0x18] sm:$0xff]
    %v4614 = vld [vmem:[#allocation12 + $0x20] sm:$0xff]
    %v4615 = vld [vmem:[#allocation12 + $0x28] sm:$0xff]
    %v4616 = vld [vmem:[#allocation12 + $0x30] sm:$0xff]
    %v4617 = vld [vmem:[#allocation12 + $0x38] sm:$0xff]
    %v4618 = vld [vmem:[#allocation12 + $0x40] sm:$0xff]
    %v4619 = vld [vmem:[#allocation12 + $0x48] sm:$0xff]
    %v4620 = vld [vmem:[#allocation12 + $0x50] sm:$0xff]
    %v4621 = vld [vmem:[#allocation12 + $0x58] sm:$0xff]
    %v4622 = vld [vmem:[#allocation12 + $0x60] sm:$0xff]
    %v4623 = vld [vmem:[#allocation12 + $0x68] sm:$0xff]
    %v4624 = vld [vmem:[#allocation12 + $0x70] sm:$0xff]
    %v4625 = vld [vmem:[#allocation12 + $0x78] sm:$0xff]
    %v4626 = vld [vmem:[%s7] sm:$0x1]
    %v4628 = vperm.slane %v4626, 0
    %4630 = vmatpush.msra.mxu0 %v4625
    %4631 = vmatpush.msra.mxu0 %v4624
    %4632 = vmatpush.msra.mxu0 %v4623
    %4633 = vmatpush.msra.mxu0 %v4622
    %4634 = vmatpush.msra.mxu0 %v4621
    %4635 = vmatpush.msra.mxu0 %v4620
    %4636 = vmatpush.msra.mxu0 %v4619
    %4637 = vmatpush.msra.mxu0 %v4618
    %4638 = vmatpush.msra.mxu0 %v4617
    %4639 = vmatpush.msra.mxu0 %v4616
    %4640 = vmatpush.msra.mxu0 %v4615
    %4641 = vmatpush.msra.mxu0 %v4614
    %4642 = vmatpush.msra.mxu0 %v4613
    %4643 = vmatpush.msra.mxu0 %v4612
    %4644 = vmatpush.msra.mxu0 %v4611
    %4645 = vmatpush.msra.mxu0 %v4610
    %4646 = vmatmul.f32.gmra.mxu0 %v4609
    %v4647 = vpop.f32.mrf.mxu0
    %v4648 = vadd.f32 %v4628, %v4647
    %4649 = vdwg.mxu0
    %4650 = vst [vmem:[#allocation14] sm:$0xff] %v4648
    // Predicated region
    $region58: #{tpu_custom_call.1} parent=1 // pred_check
      _
    $region59: #{tpu_custom_call.1} parent=1 // pred_check_branch
      %4652 = sbr.rel (0) target = $region61
    $region60: #{tpu_custom_call.1} parent=1 // pred_region
      %4654 = vsyncadd [#allocation5], 0
      %s4656 = sshll.u32 [#allocation14], 4
      %s4657 = int_to_ptr.vmem [resolvable:$true] %s4656
      %s4658 = sshll.u32 %s8, 4
      %s4659 = int_to_ptr.hbm [resolvable:$true] %s4658
      %4661 = dma.vmem_to_hbm [thread:$0]  %s4657, 128, %s4659, [#allocation5]
    $region61: #{tpu_custom_call.1} parent=1 // pred_fallthru
      _
    // Predicated region
    $region62: #{tpu_custom_call.1} parent=1 // pred_check
      _
    $region63: #{tpu_custom_call.1} parent=1 // pred_check_branch
      %4663 = sbr.rel (0) target = $region65
    $region64: #{tpu_custom_call.1} parent=1 // pred_region
      %4665 = dma.done [#allocation5], 128
    $region65: #{tpu_custom_call.1} parent=1 // pred_fallthru
      _
    %4666 = vsyncpa [#allocation4], 1
    %4667 = vsyncpa [#allocation7], 1
    %4668 = vsyncpa [#allocation10], 1
    %4669 = vsyncpa [#allocation13], 1
    %4670 = vsyncpa [#allocation5], 1

</llo_original>
